<compile_context>
chip_gen: v7x
topology: tpu7x:2x2x1
jax: 0.10.0
libtpu: 0.0.40
codegen_flags: <defaults>
</compile_context>

<pallas_src>
import jax
import jax.numpy as jnp
from jax.experimental import pallas as pl
from jax.experimental.pallas import tpu as pltpu

NUM_MODELS = 3          # EnsembleClassifier(num_models=3)
NUM_FEATURES = 512      # resnet18 fc.in_features
HIDDEN = 512            # nn.Linear(num_features, 512)
NUM_CLASSES = 10        # config['model']['num_classes']
CLASS_PAD = 128         # lane-dense padded class dim
BATCH = 2


def _ensemble_head_kernel(feat_ref, w1_ref, b1_ref, w2_ref, b2_ref, out_ref):
    """Single-step ensemble head.

    feat: (B, F)        bf16
    w1  : (F, M*H)      bf16   (all models' first-layer weights, concatenated)
    b1  : (1, M*H)      f32
    w2  : (M*H, C_pad)  bf16   (all models' second-layer weights, pre-scaled 1/M)
    b2  : (1, C_pad)    f32    (mean of per-model biases)
    out : (B, C_pad)    f32    = mean-over-ensemble logits (padded classes)
    """
    # Linear(num_features, 512) for all M models at once + per-model ReLU.
    h = jnp.dot(feat_ref[...], w1_ref[...], preferred_element_type=jnp.float32)
    h = jnp.maximum(h + b1_ref[...], 0.0)                     # (B, M*H) f32
    # Linear(512, num_classes) stacked over models; the sum over models (and the
    # 1/M folded into w2) performs the ensemble mean inside this contraction.
    logits = jnp.dot(h.astype(w2_ref.dtype), w2_ref[...],
                     preferred_element_type=jnp.float32)      # (B, C_pad) f32
    out_ref[...] = logits + b2_ref[...]


@jax.jit
def ensemble_classifier_forward(features, w1_cat, b1_cat, w2_stack, b2_fold):
    """features: (B, F) f32.  Packed params from pack_ensemble_params.
    Returns mean-over-ensemble logits (B, NUM_CLASSES) in f32."""
    B, F = features.shape
    MH = w1_cat.shape[1]
    C_pad = w2_stack.shape[1]

    flops = 2 * B * F * MH + 2 * B * MH * C_pad
    bytes_accessed = (B * F * 2                 # features (bf16)
                      + F * MH * 2              # w1 (bf16)
                      + MH * C_pad * 2          # w2 (bf16)
                      + MH * 4 + C_pad * 4      # biases (f32)
                      + B * C_pad * 4)          # output (f32)

    out = pl.pallas_call(
        _ensemble_head_kernel,
        out_shape=jax.ShapeDtypeStruct((B, C_pad), jnp.float32),
        in_specs=[pl.BlockSpec(memory_space=pltpu.MemorySpace.VMEM)] * 5,
        out_specs=pl.BlockSpec(memory_space=pltpu.MemorySpace.VMEM),
        cost_estimate=pl.CostEstimate(flops=flops, transcendentals=0,
                                      bytes_accessed=bytes_accessed),
    )(features.astype(jnp.bfloat16), w1_cat, b1_cat, w2_stack, b2_fold)
    return out[:, :NUM_CLASSES]


def init_ensemble_params(key, num_models=NUM_MODELS, num_features=NUM_FEATURES,
                         hidden=HIDDEN, num_classes=NUM_CLASSES):
    """Per-model kaiming_normal_(mode='fan_out', nonlinearity='relu') weights,
    zero biases.  PyTorch Linear weight is (out, in); we keep the (in, out)
    transpose so the head computes `x @ W`."""
    k1, k2 = jax.random.split(key)
    std1 = (2.0 / hidden) ** 0.5                     # fan_out = hidden
    w1 = std1 * jax.random.normal(k1, (num_models, num_features, hidden),
                                  dtype=jnp.float32)
    b1 = jnp.zeros((num_models, hidden), dtype=jnp.float32)
    std2 = (2.0 / num_classes) ** 0.5                # fan_out = num_classes
    w2 = std2 * jax.random.normal(k2, (num_models, hidden, num_classes),
                                  dtype=jnp.float32)
    b2 = jnp.zeros((num_models, num_classes), dtype=jnp.float32)
    return w1, b1, w2, b2


def pack_ensemble_params(w1, b1, w2, b2, class_pad=CLASS_PAD):
    """Host-side repack for the single-step kernel:
      * W1 concatenated over models along output axis      -> (F, M*H) bf16
      * W2 stacked vertically, pre-scaled by 1/M           -> (M*H, C_pad) bf16
      * b1 lane-dense row                                  -> (1, M*H) f32
      * b2 averaged over models, class-padded              -> (1, C_pad) f32
    Model ordering is model-major and consistent across all four arrays."""
    M, F, H = w1.shape
    C = w2.shape[-1]
    w1_cat = jnp.transpose(w1, (1, 0, 2)).reshape(F, M * H)
    b1_cat = b1.reshape(1, M * H)
    w2_stack = (w2 / M).reshape(M * H, C)
    w2_stack = jnp.pad(w2_stack, ((0, 0), (0, class_pad - C)))
    b2_fold = jnp.pad(jnp.mean(b2, axis=0).reshape(1, C),
                      ((0, 0), (0, class_pad - C)))
    return (w1_cat.astype(jnp.bfloat16), b1_cat.astype(jnp.float32),
            w2_stack.astype(jnp.bfloat16), b2_fold.astype(jnp.float32))


def _reference_forward(features, w1_cat, b1_cat, w2_stack, b2_fold,
                       num_models=NUM_MODELS, num_classes=NUM_CLASSES):
    """Pure-JAX per-model reference mirroring the PyTorch eval forward + mean,
    evaluated on exactly the (bf16-quantised, packed) arrays the kernel sees."""
    F, MH = w1_cat.shape
    H = MH // num_models
    C_pad = w2_stack.shape[1]
    x = features.astype(jnp.bfloat16).astype(jnp.float32)
    w1 = w1_cat.astype(jnp.float32).reshape(F, num_models, H)
    b1 = b1_cat.reshape(num_models, H)
    w2 = w2_stack.astype(jnp.float32).reshape(num_models, H, C_pad)
    acc = jnp.zeros((features.shape[0], C_pad), jnp.float32)
    for m in range(num_models):                       # per-model head
        h = jnp.maximum(x @ w1[:, m, :] + b1[m], 0.0)
        h = h.astype(jnp.bfloat16).astype(jnp.float32)
        acc = acc + h @ w2[m]                         # w2 already carries 1/M
    return (acc + b2_fold)[:, :num_classes]


if __name__ == "__main__":
    key = jax.random.PRNGKey(0)
    k_feat, k_params = jax.random.split(key)

    # Backbone features (what resnet18 with fc=Identity would emit): (B, 512).
    features = jax.random.normal(k_feat, (BATCH, NUM_FEATURES), dtype=jnp.float32)
    w1, b1, w2, b2 = init_ensemble_params(k_params)
    packed = pack_ensemble_params(w1, b1, w2, b2)

    out = ensemble_classifier_forward(features, *packed)
    out = jax.block_until_ready(out)

    ref = _reference_forward(features, *packed)
    assert out.shape == (BATCH, NUM_CLASSES)
    assert jnp.allclose(out, ref, atol=2e-3, rtol=2e-3), (
        float(jnp.max(jnp.abs(out - ref))))

    print("KERNEL_OK")
</pallas_src>

<mosaic_0001>
module attributes {stable_mosaic.version = 11 : i64} {
  func.func @_ensemble_head_kernel(%arg0: memref<2x512xbf16, #tpu.memory_space<vmem>>, %arg1: memref<512x1536xbf16, #tpu.memory_space<vmem>>, %arg2: memref<1x1536xf32, #tpu.memory_space<vmem>>, %arg3: memref<1536x128xbf16, #tpu.memory_space<vmem>>, %arg4: memref<1x128xf32, #tpu.memory_space<vmem>>, %arg5: memref<2x128xf32, #tpu.memory_space<vmem>>) attributes {dimension_semantics = [], scalar_prefetch = 0 : i64, scratch_operands = 0 : i64, tpu.core_type = #tpu.core_type<tc>} {
    %c0 = arith.constant 0 : index
    %c0_0 = arith.constant 0 : index
    %0 = vector.load %arg0[%c0, %c0_0] : memref<2x512xbf16, #tpu.memory_space<vmem>>, vector<2x512xbf16>
    %c0_1 = arith.constant 0 : index
    %c0_2 = arith.constant 0 : index
    %1 = vector.load %arg1[%c0_1, %c0_2] : memref<512x1536xbf16, #tpu.memory_space<vmem>>, vector<512x1536xbf16>
    %cst = arith.constant dense<0.000000e+00> : vector<2x1536xf32>
    %2 = tpu.matmul %0, %1, %cst {dimension_numbers = #tpu.dot_dimension_numbers<[1], [0], [0], [1], [0, 0, 1, 1], [], []>} : vector<2x512xbf16>, vector<512x1536xbf16>, vector<2x1536xf32> -> vector<2x1536xf32>
    %c0_3 = arith.constant 0 : index
    %c0_4 = arith.constant 0 : index
    %3 = vector.load %arg2[%c0_3, %c0_4] : memref<1x1536xf32, #tpu.memory_space<vmem>>, vector<1x1536xf32>
    %4 = vector.broadcast %3 : vector<1x1536xf32> to vector<2x1536xf32>
    %5 = arith.addf %2, %4 : vector<2x1536xf32>
    %cst_5 = arith.constant 0.000000e+00 : f32
    %6 = vector.broadcast %cst_5 : f32 to vector<2x1536xf32>
    %7 = arith.maximumf %5, %6 : vector<2x1536xf32>
    %8 = arith.truncf %7 : vector<2x1536xf32> to vector<2x1536xbf16>
    %c0_6 = arith.constant 0 : index
    %c0_7 = arith.constant 0 : index
    %9 = vector.load %arg3[%c0_6, %c0_7] : memref<1536x128xbf16, #tpu.memory_space<vmem>>, vector<1536x128xbf16>
    %cst_8 = arith.constant dense<0.000000e+00> : vector<2x128xf32>
    %10 = tpu.matmul %8, %9, %cst_8 {dimension_numbers = #tpu.dot_dimension_numbers<[1], [0], [0], [1], [0, 0, 1, 1], [], []>} : vector<2x1536xbf16>, vector<1536x128xbf16>, vector<2x128xf32> -> vector<2x128xf32>
    %c0_9 = arith.constant 0 : index
    %c0_10 = arith.constant 0 : index
    %11 = vector.load %arg4[%c0_9, %c0_10] : memref<1x128xf32, #tpu.memory_space<vmem>>, vector<1x128xf32>
    %12 = vector.broadcast %11 : vector<1x128xf32> to vector<2x128xf32>
    %13 = arith.addf %10, %12 : vector<2x128xf32>
    %c0_11 = arith.constant 0 : index
    %c0_12 = arith.constant 0 : index
    %14 = vector.load %arg5[%c0_11, %c0_12] : memref<2x128xf32, #tpu.memory_space<vmem>>, vector<2x128xf32>
    tpu.vector_store %arg5[%c0_11, %c0_12], %13 {strides = array<i32>} : memref<2x128xf32, #tpu.memory_space<vmem>>, vector<2x128xf32>,
    return
  }
}

</mosaic_0001>

<llo_original>
// kernel: ensemble_classifier_forward.1
$region0: #{ensemble_classifier_forward.1}
  #allocation0 [shape = 'u32[]', space=smem, size = 0x4, offset = 0x4, fixed_abs, tag = 'smem constant byte address 0x4 - core index']
  #allocation1 [shape = 'u32[144,128]{1,0:T(1,128)}', space=vmem, size = 0x12000, scoped, tag = 'internal scratch']
  %s0 = inlined_call_operand.vmem [shape: bf16[2,512], index: 0, kind: input, shape index: {}]
  %s1 = inlined_call_operand.hbm [shape: bf16[512,1536], index: 1, kind: input, shape index: {}]
  %s2 = inlined_call_operand.hbm [shape: f32[1,1536], index: 2, kind: input, shape index: {}]
  %s3 = inlined_call_operand.hbm [shape: bf16[1536,128], index: 3, kind: input, shape index: {}]
  %s4 = inlined_call_operand.hbm [shape: f32[1,128], index: 4, kind: input, shape index: {}]
  %s5 = inlined_call_operand.hbm [shape: f32[2,128], index: 5, kind: output, shape index: {}]
  %s6 = sld [smem:[#allocation0]]
  $region46: #{ensemble_classifier_forward.1} parent=0
    _
  %s8 = ssub.s32 1, %s6
  %s9 = scalar_select 0, %s8, %s6
  $region1: #{ensemble_classifier_forward.1} parent=0
    #allocation2 [shape = 'u8[1572864]{0}', space=vmem, size = 0x180000, scoped, tag = 'input window, operand 1, single buffered']
    #allocation3 [shape = 's32[1]{0}', space=sflag, size = 0x4, scoped, tag = 'scoped memory for ensemble_classifier_forward.1']
    #allocation4 [shape = 's32[1]{0}', space=sflag, size = 0x4, scoped, tag = 'scoped memory for ensemble_classifier_forward.1']
    #allocation5 [shape = 'u8[6144]{0}', space=vmem, size = 0x1800, scoped, tag = 'input window, operand 2, single buffered']
    #allocation6 [shape = 's32[1]{0}', space=sflag, size = 0x4, scoped, tag = 'scoped memory for ensemble_classifier_forward.1']
    #allocation7 [shape = 'u8[393216]{0}', space=vmem, size = 0x60000, scoped, tag = 'input window, operand 3, single buffered']
    #allocation8 [shape = 'u8[512]{0}', space=vmem, size = 0x400, scoped, tag = 'input window, operand 4, single buffered']
    #allocation9 [shape = 's32[1]{0}', space=sflag, size = 0x4, scoped, tag = 'scoped memory for ensemble_classifier_forward.1']
    #allocation10 [shape = 'u8[1024]{0}', space=vmem, size = 0x400, scoped, tag = 'output window, operand 0, single buffered']
    %10 = vsyncpa [#allocation3], 0
    %11 = vsyncpa [#allocation6], 0
    %12 = vsyncpa [#allocation9], 0
    %13 = vsyncpa [#allocation4], 0
    // Predicated region
    $region2: #{ensemble_classifier_forward.1} parent=1 // pred_check
      _
    $region3: #{ensemble_classifier_forward.1} parent=1 // pred_check_branch
      %15 = sbr.rel (0) target = $region5
    $region4: #{ensemble_classifier_forward.1} parent=1 // pred_region
      _
    $region5: #{ensemble_classifier_forward.1} parent=1 // pred_fallthru
      _
    // Predicated region
    $region6: #{ensemble_classifier_forward.1} parent=1 // pred_check
      _
    $region7: #{ensemble_classifier_forward.1} parent=1 // pred_check_branch
      %17 = sbr.rel (0) target = $region9
    $region8: #{ensemble_classifier_forward.1} parent=1 // pred_region
      %s19 = ssub.s32 49152, 49152
      %20 = vsyncadd [#allocation3], %s19
      %s21 = sshll.u32 [#allocation2], 4
      %s22 = int_to_ptr.vmem [resolvable:$true] %s21
      %27 = dma.hbm_to_vmem [thread:$0]  %s1, 49152, %s22, [#allocation3], 768, 768, 48
    $region9: #{ensemble_classifier_forward.1} parent=1 // pred_fallthru
      _
    // Predicated region
    $region10: #{ensemble_classifier_forward.1} parent=1 // pred_check
      _
    $region11: #{ensemble_classifier_forward.1} parent=1 // pred_check_branch
      %29 = sbr.rel (0) target = $region13
    $region12: #{ensemble_classifier_forward.1} parent=1 // pred_region
      %s31 = ssub.s32 192, 192
      %32 = vsyncadd [#allocation6], %s31
      %s34 = sshll.u32 [#allocation5], 4
      %s35 = int_to_ptr.vmem [resolvable:$true] %s34
      %37 = dma.hbm_to_vmem [thread:$0]  %s2, 192, %s35, [#allocation6]
    $region13: #{ensemble_classifier_forward.1} parent=1 // pred_fallthru
      _
    // Predicated region
    $region14: #{ensemble_classifier_forward.1} parent=1 // pred_check
      _
    $region15: #{ensemble_classifier_forward.1} parent=1 // pred_check_branch
      %39 = sbr.rel (0) target = $region17
    $region16: #{ensemble_classifier_forward.1} parent=1 // pred_region
      %s41 = ssub.s32 12288, 12288
      %42 = vsyncadd [#allocation6], %s41
      %s43 = sshll.u32 [#allocation7], 4
      %s44 = int_to_ptr.vmem [resolvable:$true] %s43
      %49 = dma.hbm_to_vmem [thread:$0]  %s3, 12288, %s44, [#allocation6], 64, 64, 4
    $region17: #{ensemble_classifier_forward.1} parent=1 // pred_fallthru
      _
    // Predicated region
    $region18: #{ensemble_classifier_forward.1} parent=1 // pred_check
      _
    $region19: #{ensemble_classifier_forward.1} parent=1 // pred_check_branch
      %51 = sbr.rel (0) target = $region21
    $region20: #{ensemble_classifier_forward.1} parent=1 // pred_region
      %s53 = ssub.s32 16, 16
      %54 = vsyncadd [#allocation9], %s53
      %s56 = sshll.u32 [#allocation8], 4
      %s57 = int_to_ptr.vmem [resolvable:$true] %s56
      %59 = dma.hbm_to_vmem [thread:$0]  %s4, 16, %s57, [#allocation9]
    $region21: #{ensemble_classifier_forward.1} parent=1 // pred_fallthru
      _
    // Predicated region
    $region22: #{ensemble_classifier_forward.1} parent=1 // pred_check
      _
    $region23: #{ensemble_classifier_forward.1} parent=1 // pred_check_branch
      %61 = sbr.rel (0) target = $region25
    $region24: #{ensemble_classifier_forward.1} parent=1 // pred_region
      %62 = dma.done [#allocation3], 49152
    $region25: #{ensemble_classifier_forward.1} parent=1 // pred_fallthru
      _
    // Predicated region
    $region26: #{ensemble_classifier_forward.1} parent=1 // pred_check
      _
    $region27: #{ensemble_classifier_forward.1} parent=1 // pred_check_branch
      %64 = sbr.rel (0) target = $region29
    $region28: #{ensemble_classifier_forward.1} parent=1 // pred_region
      %65 = dma.done [#allocation6], 192
    $region29: #{ensemble_classifier_forward.1} parent=1 // pred_fallthru
      _
    // Predicated region
    $region30: #{ensemble_classifier_forward.1} parent=1 // pred_check
      _
    $region31: #{ensemble_classifier_forward.1} parent=1 // pred_check_branch
      %67 = sbr.rel (0) target = $region33
    $region32: #{ensemble_classifier_forward.1} parent=1 // pred_region
      %68 = dma.done [#allocation6], 12288
    $region33: #{ensemble_classifier_forward.1} parent=1 // pred_fallthru
      _
    // Predicated region
    $region34: #{ensemble_classifier_forward.1} parent=1 // pred_check
      _
    $region35: #{ensemble_classifier_forward.1} parent=1 // pred_check_branch
      %70 = sbr.rel (0) target = $region37
    $region36: #{ensemble_classifier_forward.1} parent=1 // pred_region
      %71 = dma.done [#allocation9], 16
    $region37: #{ensemble_classifier_forward.1} parent=1 // pred_fallthru
      _
    %v73 = vld [vmem:[%s0] sm:$0xf]
    %v74 = vld [vmem:[#allocation2] sm:$0xff]
    %v75 = vld [vmem:[#allocation2 + $0x8] sm:$0xff]
    %v76 = vld [vmem:[#allocation2 + $0x10] sm:$0xff]
    %v77 = vld [vmem:[#allocation2 + $0x18] sm:$0xff]
    %v78 = vld [vmem:[#allocation2 + $0x20] sm:$0xff]
    %v79 = vld [vmem:[#allocation2 + $0x28] sm:$0xff]
    %v80 = vld [vmem:[#allocation2 + $0x30] sm:$0xff]
    %v81 = vld [vmem:[#allocation2 + $0x38] sm:$0xff]
    %v82 = vld [vmem:[#allocation2 + $0x40] sm:$0xff]
    %v83 = vld [vmem:[#allocation2 + $0x48] sm:$0xff]
    %v84 = vld [vmem:[#allocation2 + $0x50] sm:$0xff]
    %v85 = vld [vmem:[#allocation2 + $0x58] sm:$0xff]
    %v86 = vld [vmem:[#allocation2 + $0x60] sm:$0xff]
    %v87 = vld [vmem:[#allocation2 + $0x68] sm:$0xff]
    %v88 = vld [vmem:[#allocation2 + $0x70] sm:$0xff]
    %v89 = vld [vmem:[#allocation2 + $0x78] sm:$0xff]
    %v90 = vld [vmem:[#allocation2 + $0x80] sm:$0xff]
    %v91 = vld [vmem:[#allocation2 + $0x88] sm:$0xff]
    %v92 = vld [vmem:[#allocation2 + $0x90] sm:$0xff]
    %v93 = vld [vmem:[#allocation2 + $0x98] sm:$0xff]
    %v94 = vld [vmem:[#allocation2 + $0xa0] sm:$0xff]
    %v95 = vld [vmem:[#allocation2 + $0xa8] sm:$0xff]
    %v96 = vld [vmem:[#allocation2 + $0xb0] sm:$0xff]
    %v97 = vld [vmem:[#allocation2 + $0xb8] sm:$0xff]
    %v98 = vld [vmem:[#allocation2 + $0xc0] sm:$0xff]
    %v99 = vld [vmem:[#allocation2 + $0xc8] sm:$0xff]
    %v100 = vld [vmem:[#allocation2 + $0xd0] sm:$0xff]
    %v101 = vld [vmem:[#allocation2 + $0xd8] sm:$0xff]
    %v102 = vld [vmem:[#allocation2 + $0xe0] sm:$0xff]
    %v103 = vld [vmem:[#allocation2 + $0xe8] sm:$0xff]
    %v104 = vld [vmem:[#allocation2 + $0xf0] sm:$0xff]
    %v105 = vld [vmem:[#allocation2 + $0xf8] sm:$0xff]
    %v106 = vld [vmem:[#allocation2 + $0x100] sm:$0xff]
    %v107 = vld [vmem:[#allocation2 + $0x108] sm:$0xff]
    %v108 = vld [vmem:[#allocation2 + $0x110] sm:$0xff]
    %v109 = vld [vmem:[#allocation2 + $0x118] sm:$0xff]
    %v110 = vld [vmem:[#allocation2 + $0x120] sm:$0xff]
    %v111 = vld [vmem:[#allocation2 + $0x128] sm:$0xff]
    %v112 = vld [vmem:[#allocation2 + $0x130] sm:$0xff]
    %v113 = vld [vmem:[#allocation2 + $0x138] sm:$0xff]
    %v114 = vld [vmem:[#allocation2 + $0x140] sm:$0xff]
    %v115 = vld [vmem:[#allocation2 + $0x148] sm:$0xff]
    %v116 = vld [vmem:[#allocation2 + $0x150] sm:$0xff]
    %v117 = vld [vmem:[#allocation2 + $0x158] sm:$0xff]
    %v118 = vld [vmem:[#allocation2 + $0x160] sm:$0xff]
    %v119 = vld [vmem:[#allocation2 + $0x168] sm:$0xff]
    %v120 = vld [vmem:[#allocation2 + $0x170] sm:$0xff]
    %v121 = vld [vmem:[#allocation2 + $0x178] sm:$0xff]
    %v122 = vld [vmem:[#allocation2 + $0x180] sm:$0xff]
    %v123 = vld [vmem:[#allocation2 + $0x188] sm:$0xff]
    %v124 = vld [vmem:[#allocation2 + $0x190] sm:$0xff]
    %v125 = vld [vmem:[#allocation2 + $0x198] sm:$0xff]
    %v126 = vld [vmem:[#allocation2 + $0x1a0] sm:$0xff]
    %v127 = vld [vmem:[#allocation2 + $0x1a8] sm:$0xff]
    %v128 = vld [vmem:[#allocation2 + $0x1b0] sm:$0xff]
    %v129 = vld [vmem:[#allocation2 + $0x1b8] sm:$0xff]
    %v130 = vld [vmem:[#allocation2 + $0x1c0] sm:$0xff]
    %v131 = vld [vmem:[#allocation2 + $0x1c8] sm:$0xff]
    %v132 = vld [vmem:[#allocation2 + $0x1d0] sm:$0xff]
    %v133 = vld [vmem:[#allocation2 + $0x1d8] sm:$0xff]
    %v134 = vld [vmem:[#allocation2 + $0x1e0] sm:$0xff]
    %v135 = vld [vmem:[#allocation2 + $0x1e8] sm:$0xff]
    %v136 = vld [vmem:[#allocation2 + $0x1f0] sm:$0xff]
    %v137 = vld [vmem:[#allocation2 + $0x1f8] sm:$0xff]
    %v138 = vld [vmem:[#allocation2 + $0x200] sm:$0xff]
    %v139 = vld [vmem:[#allocation2 + $0x208] sm:$0xff]
    %v140 = vld [vmem:[#allocation2 + $0x210] sm:$0xff]
    %v141 = vld [vmem:[#allocation2 + $0x218] sm:$0xff]
    %v142 = vld [vmem:[#allocation2 + $0x220] sm:$0xff]
    %v143 = vld [vmem:[#allocation2 + $0x228] sm:$0xff]
    %v144 = vld [vmem:[#allocation2 + $0x230] sm:$0xff]
    %v145 = vld [vmem:[#allocation2 + $0x238] sm:$0xff]
    %v146 = vld [vmem:[#allocation2 + $0x240] sm:$0xff]
    %v147 = vld [vmem:[#allocation2 + $0x248] sm:$0xff]
    %v148 = vld [vmem:[#allocation2 + $0x250] sm:$0xff]
    %v149 = vld [vmem:[#allocation2 + $0x258] sm:$0xff]
    %v150 = vld [vmem:[#allocation2 + $0x260] sm:$0xff]
    %v151 = vld [vmem:[#allocation2 + $0x268] sm:$0xff]
    %v152 = vld [vmem:[#allocation2 + $0x270] sm:$0xff]
    %v153 = vld [vmem:[#allocation2 + $0x278] sm:$0xff]
    %v154 = vld [vmem:[#allocation2 + $0x280] sm:$0xff]
    %v155 = vld [vmem:[#allocation2 + $0x288] sm:$0xff]
    %v156 = vld [vmem:[#allocation2 + $0x290] sm:$0xff]
    %v157 = vld [vmem:[#allocation2 + $0x298] sm:$0xff]
    %v158 = vld [vmem:[#allocation2 + $0x2a0] sm:$0xff]
    %v159 = vld [vmem:[#allocation2 + $0x2a8] sm:$0xff]
    %v160 = vld [vmem:[#allocation2 + $0x2b0] sm:$0xff]
    %v161 = vld [vmem:[#allocation2 + $0x2b8] sm:$0xff]
    %v162 = vld [vmem:[#allocation2 + $0x2c0] sm:$0xff]
    %v163 = vld [vmem:[#allocation2 + $0x2c8] sm:$0xff]
    %v164 = vld [vmem:[#allocation2 + $0x2d0] sm:$0xff]
    %v165 = vld [vmem:[#allocation2 + $0x2d8] sm:$0xff]
    %v166 = vld [vmem:[#allocation2 + $0x2e0] sm:$0xff]
    %v167 = vld [vmem:[#allocation2 + $0x2e8] sm:$0xff]
    %v168 = vld [vmem:[#allocation2 + $0x2f0] sm:$0xff]
    %v169 = vld [vmem:[#allocation2 + $0x2f8] sm:$0xff]
    %v170 = vld [vmem:[#allocation2 + $0x300] sm:$0xff]
    %v171 = vld [vmem:[#allocation2 + $0x308] sm:$0xff]
    %v172 = vld [vmem:[#allocation2 + $0x310] sm:$0xff]
    %v173 = vld [vmem:[#allocation2 + $0x318] sm:$0xff]
    %v174 = vld [vmem:[#allocation2 + $0x320] sm:$0xff]
    %v175 = vld [vmem:[#allocation2 + $0x328] sm:$0xff]
    %v176 = vld [vmem:[#allocation2 + $0x330] sm:$0xff]
    %v177 = vld [vmem:[#allocation2 + $0x338] sm:$0xff]
    %v178 = vld [vmem:[#allocation2 + $0x340] sm:$0xff]
    %v179 = vld [vmem:[#allocation2 + $0x348] sm:$0xff]
    %v180 = vld [vmem:[#allocation2 + $0x350] sm:$0xff]
    %v181 = vld [vmem:[#allocation2 + $0x358] sm:$0xff]
    %v182 = vld [vmem:[#allocation2 + $0x360] sm:$0xff]
    %v183 = vld [vmem:[#allocation2 + $0x368] sm:$0xff]
    %v184 = vld [vmem:[#allocation2 + $0x370] sm:$0xff]
    %v185 = vld [vmem:[#allocation2 + $0x378] sm:$0xff]
    %v186 = vld [vmem:[#allocation2 + $0x380] sm:$0xff]
    %v187 = vld [vmem:[#allocation2 + $0x388] sm:$0xff]
    %v188 = vld [vmem:[#allocation2 + $0x390] sm:$0xff]
    %v189 = vld [vmem:[#allocation2 + $0x398] sm:$0xff]
    %v190 = vld [vmem:[#allocation2 + $0x3a0] sm:$0xff]
    %v191 = vld [vmem:[#allocation2 + $0x3a8] sm:$0xff]
    %v192 = vld [vmem:[#allocation2 + $0x3b0] sm:$0xff]
    %v193 = vld [vmem:[#allocation2 + $0x3b8] sm:$0xff]
    %v194 = vld [vmem:[#allocation2 + $0x3c0] sm:$0xff]
    %v195 = vld [vmem:[#allocation2 + $0x3c8] sm:$0xff]
    %v196 = vld [vmem:[#allocation2 + $0x3d0] sm:$0xff]
    %v197 = vld [vmem:[#allocation2 + $0x3d8] sm:$0xff]
    %v198 = vld [vmem:[#allocation2 + $0x3e0] sm:$0xff]
    %v199 = vld [vmem:[#allocation2 + $0x3e8] sm:$0xff]
    %v200 = vld [vmem:[#allocation2 + $0x3f0] sm:$0xff]
    %v201 = vld [vmem:[#allocation2 + $0x3f8] sm:$0xff]
    %v202 = vld [vmem:[#allocation2 + $0x400] sm:$0xff]
    %v203 = vld [vmem:[#allocation2 + $0x408] sm:$0xff]
    %v204 = vld [vmem:[#allocation2 + $0x410] sm:$0xff]
    %v205 = vld [vmem:[#allocation2 + $0x418] sm:$0xff]
    %v206 = vld [vmem:[#allocation2 + $0x420] sm:$0xff]
    %v207 = vld [vmem:[#allocation2 + $0x428] sm:$0xff]
    %v208 = vld [vmem:[#allocation2 + $0x430] sm:$0xff]
    %v209 = vld [vmem:[#allocation2 + $0x438] sm:$0xff]
    %v210 = vld [vmem:[#allocation2 + $0x440] sm:$0xff]
    %v211 = vld [vmem:[#allocation2 + $0x448] sm:$0xff]
    %v212 = vld [vmem:[#allocation2 + $0x450] sm:$0xff]
    %v213 = vld [vmem:[#allocation2 + $0x458] sm:$0xff]
    %v214 = vld [vmem:[#allocation2 + $0x460] sm:$0xff]
    %v215 = vld [vmem:[#allocation2 + $0x468] sm:$0xff]
    %v216 = vld [vmem:[#allocation2 + $0x470] sm:$0xff]
    %v217 = vld [vmem:[#allocation2 + $0x478] sm:$0xff]
    %v218 = vld [vmem:[#allocation2 + $0x480] sm:$0xff]
    %v219 = vld [vmem:[#allocation2 + $0x488] sm:$0xff]
    %v220 = vld [vmem:[#allocation2 + $0x490] sm:$0xff]
    %v221 = vld [vmem:[#allocation2 + $0x498] sm:$0xff]
    %v222 = vld [vmem:[#allocation2 + $0x4a0] sm:$0xff]
    %v223 = vld [vmem:[#allocation2 + $0x4a8] sm:$0xff]
    %v224 = vld [vmem:[#allocation2 + $0x4b0] sm:$0xff]
    %v225 = vld [vmem:[#allocation2 + $0x4b8] sm:$0xff]
    %v226 = vld [vmem:[#allocation2 + $0x4c0] sm:$0xff]
    %v227 = vld [vmem:[#allocation2 + $0x4c8] sm:$0xff]
    %v228 = vld [vmem:[#allocation2 + $0x4d0] sm:$0xff]
    %v229 = vld [vmem:[#allocation2 + $0x4d8] sm:$0xff]
    %v230 = vld [vmem:[#allocation2 + $0x4e0] sm:$0xff]
    %v231 = vld [vmem:[#allocation2 + $0x4e8] sm:$0xff]
    %v232 = vld [vmem:[#allocation2 + $0x4f0] sm:$0xff]
    %v233 = vld [vmem:[#allocation2 + $0x4f8] sm:$0xff]
    %v234 = vld [vmem:[#allocation2 + $0x500] sm:$0xff]
    %v235 = vld [vmem:[#allocation2 + $0x508] sm:$0xff]
    %v236 = vld [vmem:[#allocation2 + $0x510] sm:$0xff]
    %v237 = vld [vmem:[#allocation2 + $0x518] sm:$0xff]
    %v238 = vld [vmem:[#allocation2 + $0x520] sm:$0xff]
    %v239 = vld [vmem:[#allocation2 + $0x528] sm:$0xff]
    %v240 = vld [vmem:[#allocation2 + $0x530] sm:$0xff]
    %v241 = vld [vmem:[#allocation2 + $0x538] sm:$0xff]
    %v242 = vld [vmem:[#allocation2 + $0x540] sm:$0xff]
    %v243 = vld [vmem:[#allocation2 + $0x548] sm:$0xff]
    %v244 = vld [vmem:[#allocation2 + $0x550] sm:$0xff]
    %v245 = vld [vmem:[#allocation2 + $0x558] sm:$0xff]
    %v246 = vld [vmem:[#allocation2 + $0x560] sm:$0xff]
    %v247 = vld [vmem:[#allocation2 + $0x568] sm:$0xff]
    %v248 = vld [vmem:[#allocation2 + $0x570] sm:$0xff]
    %v249 = vld [vmem:[#allocation2 + $0x578] sm:$0xff]
    %v250 = vld [vmem:[#allocation2 + $0x580] sm:$0xff]
    %v251 = vld [vmem:[#allocation2 + $0x588] sm:$0xff]
    %v252 = vld [vmem:[#allocation2 + $0x590] sm:$0xff]
    %v253 = vld [vmem:[#allocation2 + $0x598] sm:$0xff]
    %v254 = vld [vmem:[#allocation2 + $0x5a0] sm:$0xff]
    %v255 = vld [vmem:[#allocation2 + $0x5a8] sm:$0xff]
    %v256 = vld [vmem:[#allocation2 + $0x5b0] sm:$0xff]
    %v257 = vld [vmem:[#allocation2 + $0x5b8] sm:$0xff]
    %v258 = vld [vmem:[#allocation2 + $0x5c0] sm:$0xff]
    %v259 = vld [vmem:[#allocation2 + $0x5c8] sm:$0xff]
    %v260 = vld [vmem:[#allocation2 + $0x5d0] sm:$0xff]
    %v261 = vld [vmem:[#allocation2 + $0x5d8] sm:$0xff]
    %v262 = vld [vmem:[#allocation2 + $0x5e0] sm:$0xff]
    %v263 = vld [vmem:[#allocation2 + $0x5e8] sm:$0xff]
    %v264 = vld [vmem:[#allocation2 + $0x5f0] sm:$0xff]
    %v265 = vld [vmem:[#allocation2 + $0x5f8] sm:$0xff]
    %v266 = vld [vmem:[#allocation2 + $0x600] sm:$0xff]
    %v267 = vld [vmem:[#allocation2 + $0x608] sm:$0xff]
    %v268 = vld [vmem:[#allocation2 + $0x610] sm:$0xff]
    %v269 = vld [vmem:[#allocation2 + $0x618] sm:$0xff]
    %v270 = vld [vmem:[#allocation2 + $0x620] sm:$0xff]
    %v271 = vld [vmem:[#allocation2 + $0x628] sm:$0xff]
    %v272 = vld [vmem:[#allocation2 + $0x630] sm:$0xff]
    %v273 = vld [vmem:[#allocation2 + $0x638] sm:$0xff]
    %v274 = vld [vmem:[#allocation2 + $0x640] sm:$0xff]
    %v275 = vld [vmem:[#allocation2 + $0x648] sm:$0xff]
    %v276 = vld [vmem:[#allocation2 + $0x650] sm:$0xff]
    %v277 = vld [vmem:[#allocation2 + $0x658] sm:$0xff]
    %v278 = vld [vmem:[#allocation2 + $0x660] sm:$0xff]
    %v279 = vld [vmem:[#allocation2 + $0x668] sm:$0xff]
    %v280 = vld [vmem:[#allocation2 + $0x670] sm:$0xff]
    %v281 = vld [vmem:[#allocation2 + $0x678] sm:$0xff]
    %v282 = vld [vmem:[#allocation2 + $0x680] sm:$0xff]
    %v283 = vld [vmem:[#allocation2 + $0x688] sm:$0xff]
    %v284 = vld [vmem:[#allocation2 + $0x690] sm:$0xff]
    %v285 = vld [vmem:[#allocation2 + $0x698] sm:$0xff]
    %v286 = vld [vmem:[#allocation2 + $0x6a0] sm:$0xff]
    %v287 = vld [vmem:[#allocation2 + $0x6a8] sm:$0xff]
    %v288 = vld [vmem:[#allocation2 + $0x6b0] sm:$0xff]
    %v289 = vld [vmem:[#allocation2 + $0x6b8] sm:$0xff]
    %v290 = vld [vmem:[#allocation2 + $0x6c0] sm:$0xff]
    %v291 = vld [vmem:[#allocation2 + $0x6c8] sm:$0xff]
    %v292 = vld [vmem:[#allocation2 + $0x6d0] sm:$0xff]
    %v293 = vld [vmem:[#allocation2 + $0x6d8] sm:$0xff]
    %v294 = vld [vmem:[#allocation2 + $0x6e0] sm:$0xff]
    %v295 = vld [vmem:[#allocation2 + $0x6e8] sm:$0xff]
    %v296 = vld [vmem:[#allocation2 + $0x6f0] sm:$0xff]
    %v297 = vld [vmem:[#allocation2 + $0x6f8] sm:$0xff]
    %v298 = vld [vmem:[#allocation2 + $0x700] sm:$0xff]
    %v299 = vld [vmem:[#allocation2 + $0x708] sm:$0xff]
    %v300 = vld [vmem:[#allocation2 + $0x710] sm:$0xff]
    %v301 = vld [vmem:[#allocation2 + $0x718] sm:$0xff]
    %v302 = vld [vmem:[#allocation2 + $0x720] sm:$0xff]
    %v303 = vld [vmem:[#allocation2 + $0x728] sm:$0xff]
    %v304 = vld [vmem:[#allocation2 + $0x730] sm:$0xff]
    %v305 = vld [vmem:[#allocation2 + $0x738] sm:$0xff]
    %v306 = vld [vmem:[#allocation2 + $0x740] sm:$0xff]
    %v307 = vld [vmem:[#allocation2 + $0x748] sm:$0xff]
    %v308 = vld [vmem:[#allocation2 + $0x750] sm:$0xff]
    %v309 = vld [vmem:[#allocation2 + $0x758] sm:$0xff]
    %v310 = vld [vmem:[#allocation2 + $0x760] sm:$0xff]
    %v311 = vld [vmem:[#allocation2 + $0x768] sm:$0xff]
    %v312 = vld [vmem:[#allocation2 + $0x770] sm:$0xff]
    %v313 = vld [vmem:[#allocation2 + $0x778] sm:$0xff]
    %v314 = vld [vmem:[#allocation2 + $0x780] sm:$0xff]
    %v315 = vld [vmem:[#allocation2 + $0x788] sm:$0xff]
    %v316 = vld [vmem:[#allocation2 + $0x790] sm:$0xff]
    %v317 = vld [vmem:[#allocation2 + $0x798] sm:$0xff]
    %v318 = vld [vmem:[#allocation2 + $0x7a0] sm:$0xff]
    %v319 = vld [vmem:[#allocation2 + $0x7a8] sm:$0xff]
    %v320 = vld [vmem:[#allocation2 + $0x7b0] sm:$0xff]
    %v321 = vld [vmem:[#allocation2 + $0x7b8] sm:$0xff]
    %v322 = vld [vmem:[#allocation2 + $0x7c0] sm:$0xff]
    %v323 = vld [vmem:[#allocation2 + $0x7c8] sm:$0xff]
    %v324 = vld [vmem:[#allocation2 + $0x7d0] sm:$0xff]
    %v325 = vld [vmem:[#allocation2 + $0x7d8] sm:$0xff]
    %v326 = vld [vmem:[#allocation2 + $0x7e0] sm:$0xff]
    %v327 = vld [vmem:[#allocation2 + $0x7e8] sm:$0xff]
    %v328 = vld [vmem:[#allocation2 + $0x7f0] sm:$0xff]
    %v329 = vld [vmem:[#allocation2 + $0x7f8] sm:$0xff]
    %v330 = vld [vmem:[#allocation2 + $0x800] sm:$0xff]
    %v331 = vld [vmem:[#allocation2 + $0x808] sm:$0xff]
    %v332 = vld [vmem:[#allocation2 + $0x810] sm:$0xff]
    %v333 = vld [vmem:[#allocation2 + $0x818] sm:$0xff]
    %v334 = vld [vmem:[#allocation2 + $0x820] sm:$0xff]
    %v335 = vld [vmem:[#allocation2 + $0x828] sm:$0xff]
    %v336 = vld [vmem:[#allocation2 + $0x830] sm:$0xff]
    %v337 = vld [vmem:[#allocation2 + $0x838] sm:$0xff]
    %v338 = vld [vmem:[#allocation2 + $0x840] sm:$0xff]
    %v339 = vld [vmem:[#allocation2 + $0x848] sm:$0xff]
    %v340 = vld [vmem:[#allocation2 + $0x850] sm:$0xff]
    %v341 = vld [vmem:[#allocation2 + $0x858] sm:$0xff]
    %v342 = vld [vmem:[#allocation2 + $0x860] sm:$0xff]
    %v343 = vld [vmem:[#allocation2 + $0x868] sm:$0xff]
    %v344 = vld [vmem:[#allocation2 + $0x870] sm:$0xff]
    %v345 = vld [vmem:[#allocation2 + $0x878] sm:$0xff]
    %v346 = vld [vmem:[#allocation2 + $0x880] sm:$0xff]
    %v347 = vld [vmem:[#allocation2 + $0x888] sm:$0xff]
    %v348 = vld [vmem:[#allocation2 + $0x890] sm:$0xff]
    %v349 = vld [vmem:[#allocation2 + $0x898] sm:$0xff]
    %v350 = vld [vmem:[#allocation2 + $0x8a0] sm:$0xff]
    %v351 = vld [vmem:[#allocation2 + $0x8a8] sm:$0xff]
    %v352 = vld [vmem:[#allocation2 + $0x8b0] sm:$0xff]
    %v353 = vld [vmem:[#allocation2 + $0x8b8] sm:$0xff]
    %v354 = vld [vmem:[#allocation2 + $0x8c0] sm:$0xff]
    %v355 = vld [vmem:[#allocation2 + $0x8c8] sm:$0xff]
    %v356 = vld [vmem:[#allocation2 + $0x8d0] sm:$0xff]
    %v357 = vld [vmem:[#allocation2 + $0x8d8] sm:$0xff]
    %v358 = vld [vmem:[#allocation2 + $0x8e0] sm:$0xff]
    %v359 = vld [vmem:[#allocation2 + $0x8e8] sm:$0xff]
    %v360 = vld [vmem:[#allocation2 + $0x8f0] sm:$0xff]
    %v361 = vld [vmem:[#allocation2 + $0x8f8] sm:$0xff]
    %v362 = vld [vmem:[#allocation2 + $0x900] sm:$0xff]
    %v363 = vld [vmem:[#allocation2 + $0x908] sm:$0xff]
    %v364 = vld [vmem:[#allocation2 + $0x910] sm:$0xff]
    %v365 = vld [vmem:[#allocation2 + $0x918] sm:$0xff]
    %v366 = vld [vmem:[#allocation2 + $0x920] sm:$0xff]
    %v367 = vld [vmem:[#allocation2 + $0x928] sm:$0xff]
    %v368 = vld [vmem:[#allocation2 + $0x930] sm:$0xff]
    %v369 = vld [vmem:[#allocation2 + $0x938] sm:$0xff]
    %v370 = vld [vmem:[#allocation2 + $0x940] sm:$0xff]
    %v371 = vld [vmem:[#allocation2 + $0x948] sm:$0xff]
    %v372 = vld [vmem:[#allocation2 + $0x950] sm:$0xff]
    %v373 = vld [vmem:[#allocation2 + $0x958] sm:$0xff]
    %v374 = vld [vmem:[#allocation2 + $0x960] sm:$0xff]
    %v375 = vld [vmem:[#allocation2 + $0x968] sm:$0xff]
    %v376 = vld [vmem:[#allocation2 + $0x970] sm:$0xff]
    %v377 = vld [vmem:[#allocation2 + $0x978] sm:$0xff]
    %v378 = vld [vmem:[#allocation2 + $0x980] sm:$0xff]
    %v379 = vld [vmem:[#allocation2 + $0x988] sm:$0xff]
    %v380 = vld [vmem:[#allocation2 + $0x990] sm:$0xff]
    %v381 = vld [vmem:[#allocation2 + $0x998] sm:$0xff]
    %v382 = vld [vmem:[#allocation2 + $0x9a0] sm:$0xff]
    %v383 = vld [vmem:[#allocation2 + $0x9a8] sm:$0xff]
    %v384 = vld [vmem:[#allocation2 + $0x9b0] sm:$0xff]
    %v385 = vld [vmem:[#allocation2 + $0x9b8] sm:$0xff]
    %v386 = vld [vmem:[#allocation2 + $0x9c0] sm:$0xff]
    %v387 = vld [vmem:[#allocation2 + $0x9c8] sm:$0xff]
    %v388 = vld [vmem:[#allocation2 + $0x9d0] sm:$0xff]
    %v389 = vld [vmem:[#allocation2 + $0x9d8] sm:$0xff]
    %v390 = vld [vmem:[#allocation2 + $0x9e0] sm:$0xff]
    %v391 = vld [vmem:[#allocation2 + $0x9e8] sm:$0xff]
    %v392 = vld [vmem:[#allocation2 + $0x9f0] sm:$0xff]
    %v393 = vld [vmem:[#allocation2 + $0x9f8] sm:$0xff]
    %v394 = vld [vmem:[#allocation2 + $0xa00] sm:$0xff]
    %v395 = vld [vmem:[#allocation2 + $0xa08] sm:$0xff]
    %v396 = vld [vmem:[#allocation2 + $0xa10] sm:$0xff]
    %v397 = vld [vmem:[#allocation2 + $0xa18] sm:$0xff]
    %v398 = vld [vmem:[#allocation2 + $0xa20] sm:$0xff]
    %v399 = vld [vmem:[#allocation2 + $0xa28] sm:$0xff]
    %v400 = vld [vmem:[#allocation2 + $0xa30] sm:$0xff]
    %v401 = vld [vmem:[#allocation2 + $0xa38] sm:$0xff]
    %v402 = vld [vmem:[#allocation2 + $0xa40] sm:$0xff]
    %v403 = vld [vmem:[#allocation2 + $0xa48] sm:$0xff]
    %v404 = vld [vmem:[#allocation2 + $0xa50] sm:$0xff]
    %v405 = vld [vmem:[#allocation2 + $0xa58] sm:$0xff]
    %v406 = vld [vmem:[#allocation2 + $0xa60] sm:$0xff]
    %v407 = vld [vmem:[#allocation2 + $0xa68] sm:$0xff]
    %v408 = vld [vmem:[#allocation2 + $0xa70] sm:$0xff]
    %v409 = vld [vmem:[#allocation2 + $0xa78] sm:$0xff]
    %v410 = vld [vmem:[#allocation2 + $0xa80] sm:$0xff]
    %v411 = vld [vmem:[#allocation2 + $0xa88] sm:$0xff]
    %v412 = vld [vmem:[#allocation2 + $0xa90] sm:$0xff]
    %v413 = vld [vmem:[#allocation2 + $0xa98] sm:$0xff]
    %v414 = vld [vmem:[#allocation2 + $0xaa0] sm:$0xff]
    %v415 = vld [vmem:[#allocation2 + $0xaa8] sm:$0xff]
    %v416 = vld [vmem:[#allocation2 + $0xab0] sm:$0xff]
    %v417 = vld [vmem:[#allocation2 + $0xab8] sm:$0xff]
    %v418 = vld [vmem:[#allocation2 + $0xac0] sm:$0xff]
    %v419 = vld [vmem:[#allocation2 + $0xac8] sm:$0xff]
    %v420 = vld [vmem:[#allocation2 + $0xad0] sm:$0xff]
    %v421 = vld [vmem:[#allocation2 + $0xad8] sm:$0xff]
    %v422 = vld [vmem:[#allocation2 + $0xae0] sm:$0xff]
    %v423 = vld [vmem:[#allocation2 + $0xae8] sm:$0xff]
    %v424 = vld [vmem:[#allocation2 + $0xaf0] sm:$0xff]
    %v425 = vld [vmem:[#allocation2 + $0xaf8] sm:$0xff]
    %v426 = vld [vmem:[#allocation2 + $0xb00] sm:$0xff]
    %v427 = vld [vmem:[#allocation2 + $0xb08] sm:$0xff]
    %v428 = vld [vmem:[#allocation2 + $0xb10] sm:$0xff]
    %v429 = vld [vmem:[#allocation2 + $0xb18] sm:$0xff]
    %v430 = vld [vmem:[#allocation2 + $0xb20] sm:$0xff]
    %v431 = vld [vmem:[#allocation2 + $0xb28] sm:$0xff]
    %v432 = vld [vmem:[#allocation2 + $0xb30] sm:$0xff]
    %v433 = vld [vmem:[#allocation2 + $0xb38] sm:$0xff]
    %v434 = vld [vmem:[#allocation2 + $0xb40] sm:$0xff]
    %v435 = vld [vmem:[#allocation2 + $0xb48] sm:$0xff]
    %v436 = vld [vmem:[#allocation2 + $0xb50] sm:$0xff]
    %v437 = vld [vmem:[#allocation2 + $0xb58] sm:$0xff]
    %v438 = vld [vmem:[#allocation2 + $0xb60] sm:$0xff]
    %v439 = vld [vmem:[#allocation2 + $0xb68] sm:$0xff]
    %v440 = vld [vmem:[#allocation2 + $0xb70] sm:$0xff]
    %v441 = vld [vmem:[#allocation2 + $0xb78] sm:$0xff]
    %v442 = vld [vmem:[#allocation2 + $0xb80] sm:$0xff]
    %v443 = vld [vmem:[#allocation2 + $0xb88] sm:$0xff]
    %v444 = vld [vmem:[#allocation2 + $0xb90] sm:$0xff]
    %v445 = vld [vmem:[#allocation2 + $0xb98] sm:$0xff]
    %v446 = vld [vmem:[#allocation2 + $0xba0] sm:$0xff]
    %v447 = vld [vmem:[#allocation2 + $0xba8] sm:$0xff]
    %v448 = vld [vmem:[#allocation2 + $0xbb0] sm:$0xff]
    %v449 = vld [vmem:[#allocation2 + $0xbb8] sm:$0xff]
    %v450 = vld [vmem:[#allocation2 + $0xbc0] sm:$0xff]
    %v451 = vld [vmem:[#allocation2 + $0xbc8] sm:$0xff]
    %v452 = vld [vmem:[#allocation2 + $0xbd0] sm:$0xff]
    %v453 = vld [vmem:[#allocation2 + $0xbd8] sm:$0xff]
    %v454 = vld [vmem:[#allocation2 + $0xbe0] sm:$0xff]
    %v455 = vld [vmem:[#allocation2 + $0xbe8] sm:$0xff]
    %v456 = vld [vmem:[#allocation2 + $0xbf0] sm:$0xff]
    %v457 = vld [vmem:[#allocation2 + $0xbf8] sm:$0xff]
    %v458 = vld [vmem:[#allocation5] sm:$0xff]
    %v459 = vld [vmem:[#allocation5 + $0x8] sm:$0xf]
    %v462 = vlaneseq
    %v463 = vshrl.u32 %v462, 7
    %v464 = vsub.s32 0, %v463
    %v465 = vrot.slane %v458, %v464
    %v466 = vlaneseq
    %v467 = vshrl.u32 %v466, 7
    %v468 = vsub.s32 1, %v467
    %v469 = vrot.slane %v458, %v468
    %v470 = vlaneseq
    %v471 = vshrl.u32 %v470, 7
    %v472 = vsub.s32 2, %v471
    %v473 = vrot.slane %v458, %v472
    %v474 = vlaneseq
    %v475 = vshrl.u32 %v474, 7
    %v476 = vsub.s32 3, %v475
    %v477 = vrot.slane %v458, %v476
    %v478 = vlaneseq
    %v479 = vshrl.u32 %v478, 7
    %v480 = vsub.s32 4, %v479
    %v481 = vrot.slane %v458, %v480
    %v482 = vlaneseq
    %v483 = vshrl.u32 %v482, 7
    %v484 = vsub.s32 5, %v483
    %v485 = vrot.slane %v458, %v484
    %v486 = vlaneseq
    %v487 = vshrl.u32 %v486, 7
    %v488 = vsub.s32 6, %v487
    %v489 = vrot.slane %v458, %v488
    %v490 = vlaneseq
    %v491 = vshrl.u32 %v490, 7
    %v492 = vsub.s32 7, %v491
    %v493 = vrot.slane %v458, %v492
    %v494 = vlaneseq
    %v495 = vshrl.u32 %v494, 7
    %v496 = vsub.s32 0, %v495
    %v497 = vrot.slane %v459, %v496
    %v498 = vlaneseq
    %v499 = vshrl.u32 %v498, 7
    %v500 = vsub.s32 1, %v499
    %v501 = vrot.slane %v459, %v500
    %v502 = vlaneseq
    %v503 = vshrl.u32 %v502, 7
    %v504 = vsub.s32 2, %v503
    %v505 = vrot.slane %v459, %v504
    %v506 = vlaneseq
    %v507 = vshrl.u32 %v506, 7
    %v508 = vsub.s32 3, %v507
    %v509 = vrot.slane %v459, %v508
    %v524 = vunpack.c.l.s4 1966171168
    %v525 = vunpack.c.0.s8 %v524
    %v526 = vlaneseq
    %v527 = vshrl.u32 %v526, 7
    %v528 = vsub.s32 %v525, %v527
    %v529 = vrot.slane %v73, %v528
    %v530 = vcombine.high %v529, %v529
    %v532 = vunpack.c.l.s4 1966171168
    %v533 = vunpack.c.0.s8 %v532
    %v534 = vlaneseq
    %v535 = vshrl.u32 %v534, 7
    %v536 = vsub.s32 %v533, %v535
    %v537 = vrot.slane %v529, %v536
    %v539 = vunpack.c.l.s4 1966171168
    %v540 = vunpack.c.0.s8 %v539
    %v541 = vlaneseq
    %v542 = vshrl.u32 %v541, 7
    %v543 = vsub.s32 %v540, %v542
    %v544 = vrot.slane %v530, %v543
    %v545 = vcombine.high %v537, %v537
    %v546 = vcombine.high %v544, %v544
    %v935 = vunpack.c.l.b16 %v74
    %v936 = vunpack.c.h.b16 %v74
    %v937 = vunpack.c.l.b16 %v75
    %v938 = vunpack.c.h.b16 %v75
    %v939 = vunpack.c.l.b16 %v76
    %v940 = vunpack.c.h.b16 %v76
    %v941 = vunpack.c.l.b16 %v77
    %v942 = vunpack.c.h.b16 %v77
    %v943 = vunpack.c.l.b16 %v78
    %v944 = vunpack.c.h.b16 %v78
    %v945 = vunpack.c.l.b16 %v79
    %v946 = vunpack.c.h.b16 %v79
    %v947 = vunpack.c.l.b16 %v80
    %v948 = vunpack.c.h.b16 %v80
    %v949 = vunpack.c.l.b16 %v81
    %v950 = vunpack.c.h.b16 %v81
    %v951 = vunpack.c.l.b16 %v82
    %v952 = vunpack.c.h.b16 %v82
    %v953 = vunpack.c.l.b16 %v83
    %v954 = vunpack.c.h.b16 %v83
    %v955 = vunpack.c.l.b16 %v84
    %v956 = vunpack.c.h.b16 %v84
    %v957 = vunpack.c.l.b16 %v85
    %v958 = vunpack.c.h.b16 %v85
    %v959 = vunpack.c.l.b16 %v86
    %v960 = vunpack.c.h.b16 %v86
    %v961 = vunpack.c.l.b16 %v87
    %v962 = vunpack.c.h.b16 %v87
    %v963 = vunpack.c.l.b16 %v88
    %v964 = vunpack.c.h.b16 %v88
    %v965 = vunpack.c.l.b16 %v89
    %v966 = vunpack.c.h.b16 %v89
    %v967 = vunpack.c.l.b16 %v90
    %v968 = vunpack.c.h.b16 %v90
    %v969 = vunpack.c.l.b16 %v91
    %v970 = vunpack.c.h.b16 %v91
    %v971 = vunpack.c.l.b16 %v92
    %v972 = vunpack.c.h.b16 %v92
    %v973 = vunpack.c.l.b16 %v93
    %v974 = vunpack.c.h.b16 %v93
    %v975 = vunpack.c.l.b16 %v94
    %v976 = vunpack.c.h.b16 %v94
    %v977 = vunpack.c.l.b16 %v95
    %v978 = vunpack.c.h.b16 %v95
    %v979 = vunpack.c.l.b16 %v96
    %v980 = vunpack.c.h.b16 %v96
    %v981 = vunpack.c.l.b16 %v97
    %v982 = vunpack.c.h.b16 %v97
    %v983 = vunpack.c.l.b16 %v98
    %v984 = vunpack.c.h.b16 %v98
    %v985 = vunpack.c.l.b16 %v99
    %v986 = vunpack.c.h.b16 %v99
    %v987 = vunpack.c.l.b16 %v100
    %v988 = vunpack.c.h.b16 %v100
    %v989 = vunpack.c.l.b16 %v101
    %v990 = vunpack.c.h.b16 %v101
    %v991 = vunpack.c.l.b16 %v102
    %v992 = vunpack.c.h.b16 %v102
    %v993 = vunpack.c.l.b16 %v103
    %v994 = vunpack.c.h.b16 %v103
    %v995 = vunpack.c.l.b16 %v104
    %v996 = vunpack.c.h.b16 %v104
    %v997 = vunpack.c.l.b16 %v105
    %v998 = vunpack.c.h.b16 %v105
    %v999 = vunpack.c.l.b16 %v106
    %v1000 = vunpack.c.h.b16 %v106
    %v1001 = vunpack.c.l.b16 %v107
    %v1002 = vunpack.c.h.b16 %v107
    %v1003 = vunpack.c.l.b16 %v108
    %v1004 = vunpack.c.h.b16 %v108
    %v1005 = vunpack.c.l.b16 %v109
    %v1006 = vunpack.c.h.b16 %v109
    %v1007 = vunpack.c.l.b16 %v110
    %v1008 = vunpack.c.h.b16 %v110
    %v1009 = vunpack.c.l.b16 %v111
    %v1010 = vunpack.c.h.b16 %v111
    %v1011 = vunpack.c.l.b16 %v112
    %v1012 = vunpack.c.h.b16 %v112
    %v1013 = vunpack.c.l.b16 %v113
    %v1014 = vunpack.c.h.b16 %v113
    %v1015 = vunpack.c.l.b16 %v114
    %v1016 = vunpack.c.h.b16 %v114
    %v1017 = vunpack.c.l.b16 %v115
    %v1018 = vunpack.c.h.b16 %v115
    %v1019 = vunpack.c.l.b16 %v116
    %v1020 = vunpack.c.h.b16 %v116
    %v1021 = vunpack.c.l.b16 %v117
    %v1022 = vunpack.c.h.b16 %v117
    %v1023 = vunpack.c.l.b16 %v118
    %v1024 = vunpack.c.h.b16 %v118
    %v1025 = vunpack.c.l.b16 %v119
    %v1026 = vunpack.c.h.b16 %v119
    %v1027 = vunpack.c.l.b16 %v120
    %v1028 = vunpack.c.h.b16 %v120
    %v1029 = vunpack.c.l.b16 %v121
    %v1030 = vunpack.c.h.b16 %v121
    %v1031 = vunpack.c.l.b16 %v122
    %v1032 = vunpack.c.h.b16 %v122
    %v1033 = vunpack.c.l.b16 %v123
    %v1034 = vunpack.c.h.b16 %v123
    %v1035 = vunpack.c.l.b16 %v124
    %v1036 = vunpack.c.h.b16 %v124
    %v1037 = vunpack.c.l.b16 %v125
    %v1038 = vunpack.c.h.b16 %v125
    %v1039 = vunpack.c.l.b16 %v126
    %v1040 = vunpack.c.h.b16 %v126
    %v1041 = vunpack.c.l.b16 %v127
    %v1042 = vunpack.c.h.b16 %v127
    %v1043 = vunpack.c.l.b16 %v128
    %v1044 = vunpack.c.h.b16 %v128
    %v1045 = vunpack.c.l.b16 %v129
    %v1046 = vunpack.c.h.b16 %v129
    %v1047 = vunpack.c.l.b16 %v130
    %v1048 = vunpack.c.h.b16 %v130
    %v1049 = vunpack.c.l.b16 %v131
    %v1050 = vunpack.c.h.b16 %v131
    %v1051 = vunpack.c.l.b16 %v132
    %v1052 = vunpack.c.h.b16 %v132
    %v1053 = vunpack.c.l.b16 %v133
    %v1054 = vunpack.c.h.b16 %v133
    %v1055 = vunpack.c.l.b16 %v134
    %v1056 = vunpack.c.h.b16 %v134
    %v1057 = vunpack.c.l.b16 %v135
    %v1058 = vunpack.c.h.b16 %v135
    %v1059 = vunpack.c.l.b16 %v136
    %v1060 = vunpack.c.h.b16 %v136
    %v1061 = vunpack.c.l.b16 %v137
    %v1062 = vunpack.c.h.b16 %v137
    %v1063 = vunpack.c.l.b16 %v138
    %v1064 = vunpack.c.h.b16 %v138
    %v1065 = vunpack.c.l.b16 %v139
    %v1066 = vunpack.c.h.b16 %v139
    %v1067 = vunpack.c.l.b16 %v140
    %v1068 = vunpack.c.h.b16 %v140
    %v1069 = vunpack.c.l.b16 %v141
    %v1070 = vunpack.c.h.b16 %v141
    %v1071 = vunpack.c.l.b16 %v142
    %v1072 = vunpack.c.h.b16 %v142
    %v1073 = vunpack.c.l.b16 %v143
    %v1074 = vunpack.c.h.b16 %v143
    %v1075 = vunpack.c.l.b16 %v144
    %v1076 = vunpack.c.h.b16 %v144
    %v1077 = vunpack.c.l.b16 %v145
    %v1078 = vunpack.c.h.b16 %v145
    %v1079 = vunpack.c.l.b16 %v146
    %v1080 = vunpack.c.h.b16 %v146
    %v1081 = vunpack.c.l.b16 %v147
    %v1082 = vunpack.c.h.b16 %v147
    %v1083 = vunpack.c.l.b16 %v148
    %v1084 = vunpack.c.h.b16 %v148
    %v1085 = vunpack.c.l.b16 %v149
    %v1086 = vunpack.c.h.b16 %v149
    %v1087 = vunpack.c.l.b16 %v150
    %v1088 = vunpack.c.h.b16 %v150
    %v1089 = vunpack.c.l.b16 %v151
    %v1090 = vunpack.c.h.b16 %v151
    %v1091 = vunpack.c.l.b16 %v152
    %v1092 = vunpack.c.h.b16 %v152
    %v1093 = vunpack.c.l.b16 %v153
    %v1094 = vunpack.c.h.b16 %v153
    %v1095 = vunpack.c.l.b16 %v154
    %v1096 = vunpack.c.h.b16 %v154
    %v1097 = vunpack.c.l.b16 %v155
    %v1098 = vunpack.c.h.b16 %v155
    %v1099 = vunpack.c.l.b16 %v156
    %v1100 = vunpack.c.h.b16 %v156
    %v1101 = vunpack.c.l.b16 %v157
    %v1102 = vunpack.c.h.b16 %v157
    %v1103 = vunpack.c.l.b16 %v158
    %v1104 = vunpack.c.h.b16 %v158
    %v1105 = vunpack.c.l.b16 %v159
    %v1106 = vunpack.c.h.b16 %v159
    %v1107 = vunpack.c.l.b16 %v160
    %v1108 = vunpack.c.h.b16 %v160
    %v1109 = vunpack.c.l.b16 %v161
    %v1110 = vunpack.c.h.b16 %v161
    %v1111 = vunpack.c.l.b16 %v162
    %v1112 = vunpack.c.h.b16 %v162
    %v1113 = vunpack.c.l.b16 %v163
    %v1114 = vunpack.c.h.b16 %v163
    %v1115 = vunpack.c.l.b16 %v164
    %v1116 = vunpack.c.h.b16 %v164
    %v1117 = vunpack.c.l.b16 %v165
    %v1118 = vunpack.c.h.b16 %v165
    %v1119 = vunpack.c.l.b16 %v166
    %v1120 = vunpack.c.h.b16 %v166
    %v1121 = vunpack.c.l.b16 %v167
    %v1122 = vunpack.c.h.b16 %v167
    %v1123 = vunpack.c.l.b16 %v168
    %v1124 = vunpack.c.h.b16 %v168
    %v1125 = vunpack.c.l.b16 %v169
    %v1126 = vunpack.c.h.b16 %v169
    %v1127 = vunpack.c.l.b16 %v170
    %v1128 = vunpack.c.h.b16 %v170
    %v1129 = vunpack.c.l.b16 %v171
    %v1130 = vunpack.c.h.b16 %v171
    %v1131 = vunpack.c.l.b16 %v172
    %v1132 = vunpack.c.h.b16 %v172
    %v1133 = vunpack.c.l.b16 %v173
    %v1134 = vunpack.c.h.b16 %v173
    %v1135 = vunpack.c.l.b16 %v174
    %v1136 = vunpack.c.h.b16 %v174
    %v1137 = vunpack.c.l.b16 %v175
    %v1138 = vunpack.c.h.b16 %v175
    %v1139 = vunpack.c.l.b16 %v176
    %v1140 = vunpack.c.h.b16 %v176
    %v1141 = vunpack.c.l.b16 %v177
    %v1142 = vunpack.c.h.b16 %v177
    %v1143 = vunpack.c.l.b16 %v178
    %v1144 = vunpack.c.h.b16 %v178
    %v1145 = vunpack.c.l.b16 %v179
    %v1146 = vunpack.c.h.b16 %v179
    %v1147 = vunpack.c.l.b16 %v180
    %v1148 = vunpack.c.h.b16 %v180
    %v1149 = vunpack.c.l.b16 %v181
    %v1150 = vunpack.c.h.b16 %v181
    %v1151 = vunpack.c.l.b16 %v182
    %v1152 = vunpack.c.h.b16 %v182
    %v1153 = vunpack.c.l.b16 %v183
    %v1154 = vunpack.c.h.b16 %v183
    %v1155 = vunpack.c.l.b16 %v184
    %v1156 = vunpack.c.h.b16 %v184
    %v1157 = vunpack.c.l.b16 %v185
    %v1158 = vunpack.c.h.b16 %v185
    %v1159 = vunpack.c.l.b16 %v186
    %v1160 = vunpack.c.h.b16 %v186
    %v1161 = vunpack.c.l.b16 %v187
    %v1162 = vunpack.c.h.b16 %v187
    %v1163 = vunpack.c.l.b16 %v188
    %v1164 = vunpack.c.h.b16 %v188
    %v1165 = vunpack.c.l.b16 %v189
    %v1166 = vunpack.c.h.b16 %v189
    %v1167 = vunpack.c.l.b16 %v190
    %v1168 = vunpack.c.h.b16 %v190
    %v1169 = vunpack.c.l.b16 %v191
    %v1170 = vunpack.c.h.b16 %v191
    %v1171 = vunpack.c.l.b16 %v192
    %v1172 = vunpack.c.h.b16 %v192
    %v1173 = vunpack.c.l.b16 %v193
    %v1174 = vunpack.c.h.b16 %v193
    %v1175 = vunpack.c.l.b16 %v194
    %v1176 = vunpack.c.h.b16 %v194
    %v1177 = vunpack.c.l.b16 %v195
    %v1178 = vunpack.c.h.b16 %v195
    %v1179 = vunpack.c.l.b16 %v196
    %v1180 = vunpack.c.h.b16 %v196
    %v1181 = vunpack.c.l.b16 %v197
    %v1182 = vunpack.c.h.b16 %v197
    %v1183 = vunpack.c.l.b16 %v198
    %v1184 = vunpack.c.h.b16 %v198
    %v1185 = vunpack.c.l.b16 %v199
    %v1186 = vunpack.c.h.b16 %v199
    %v1187 = vunpack.c.l.b16 %v200
    %v1188 = vunpack.c.h.b16 %v200
    %v1189 = vunpack.c.l.b16 %v201
    %v1190 = vunpack.c.h.b16 %v201
    %v1191 = vunpack.c.l.b16 %v202
    %v1192 = vunpack.c.h.b16 %v202
    %v1193 = vunpack.c.l.b16 %v203
    %v1194 = vunpack.c.h.b16 %v203
    %v1195 = vunpack.c.l.b16 %v204
    %v1196 = vunpack.c.h.b16 %v204
    %v1197 = vunpack.c.l.b16 %v205
    %v1198 = vunpack.c.h.b16 %v205
    %v1199 = vunpack.c.l.b16 %v206
    %v1200 = vunpack.c.h.b16 %v206
    %v1201 = vunpack.c.l.b16 %v207
    %v1202 = vunpack.c.h.b16 %v207
    %v1203 = vunpack.c.l.b16 %v208
    %v1204 = vunpack.c.h.b16 %v208
    %v1205 = vunpack.c.l.b16 %v209
    %v1206 = vunpack.c.h.b16 %v209
    %v1207 = vunpack.c.l.b16 %v210
    %v1208 = vunpack.c.h.b16 %v210
    %v1209 = vunpack.c.l.b16 %v211
    %v1210 = vunpack.c.h.b16 %v211
    %v1211 = vunpack.c.l.b16 %v212
    %v1212 = vunpack.c.h.b16 %v212
    %v1213 = vunpack.c.l.b16 %v213
    %v1214 = vunpack.c.h.b16 %v213
    %v1215 = vunpack.c.l.b16 %v214
    %v1216 = vunpack.c.h.b16 %v214
    %v1217 = vunpack.c.l.b16 %v215
    %v1218 = vunpack.c.h.b16 %v215
    %v1219 = vunpack.c.l.b16 %v216
    %v1220 = vunpack.c.h.b16 %v216
    %v1221 = vunpack.c.l.b16 %v217
    %v1222 = vunpack.c.h.b16 %v217
    %v1223 = vunpack.c.l.b16 %v218
    %v1224 = vunpack.c.h.b16 %v218
    %v1225 = vunpack.c.l.b16 %v219
    %v1226 = vunpack.c.h.b16 %v219
    %v1227 = vunpack.c.l.b16 %v220
    %v1228 = vunpack.c.h.b16 %v220
    %v1229 = vunpack.c.l.b16 %v221
    %v1230 = vunpack.c.h.b16 %v221
    %v1231 = vunpack.c.l.b16 %v222
    %v1232 = vunpack.c.h.b16 %v222
    %v1233 = vunpack.c.l.b16 %v223
    %v1234 = vunpack.c.h.b16 %v223
    %v1235 = vunpack.c.l.b16 %v224
    %v1236 = vunpack.c.h.b16 %v224
    %v1237 = vunpack.c.l.b16 %v225
    %v1238 = vunpack.c.h.b16 %v225
    %v1239 = vunpack.c.l.b16 %v226
    %v1240 = vunpack.c.h.b16 %v226
    %v1241 = vunpack.c.l.b16 %v227
    %v1242 = vunpack.c.h.b16 %v227
    %v1243 = vunpack.c.l.b16 %v228
    %v1244 = vunpack.c.h.b16 %v228
    %v1245 = vunpack.c.l.b16 %v229
    %v1246 = vunpack.c.h.b16 %v229
    %v1247 = vunpack.c.l.b16 %v230
    %v1248 = vunpack.c.h.b16 %v230
    %v1249 = vunpack.c.l.b16 %v231
    %v1250 = vunpack.c.h.b16 %v231
    %v1251 = vunpack.c.l.b16 %v232
    %v1252 = vunpack.c.h.b16 %v232
    %v1253 = vunpack.c.l.b16 %v233
    %v1254 = vunpack.c.h.b16 %v233
    %v1255 = vunpack.c.l.b16 %v234
    %v1256 = vunpack.c.h.b16 %v234
    %v1257 = vunpack.c.l.b16 %v235
    %v1258 = vunpack.c.h.b16 %v235
    %v1259 = vunpack.c.l.b16 %v236
    %v1260 = vunpack.c.h.b16 %v236
    %v1261 = vunpack.c.l.b16 %v237
    %v1262 = vunpack.c.h.b16 %v237
    %v1263 = vunpack.c.l.b16 %v238
    %v1264 = vunpack.c.h.b16 %v238
    %v1265 = vunpack.c.l.b16 %v239
    %v1266 = vunpack.c.h.b16 %v239
    %v1267 = vunpack.c.l.b16 %v240
    %v1268 = vunpack.c.h.b16 %v240
    %v1269 = vunpack.c.l.b16 %v241
    %v1270 = vunpack.c.h.b16 %v241
    %v1271 = vunpack.c.l.b16 %v242
    %v1272 = vunpack.c.h.b16 %v242
    %v1273 = vunpack.c.l.b16 %v243
    %v1274 = vunpack.c.h.b16 %v243
    %v1275 = vunpack.c.l.b16 %v244
    %v1276 = vunpack.c.h.b16 %v244
    %v1277 = vunpack.c.l.b16 %v245
    %v1278 = vunpack.c.h.b16 %v245
    %v1279 = vunpack.c.l.b16 %v246
    %v1280 = vunpack.c.h.b16 %v246
    %v1281 = vunpack.c.l.b16 %v247
    %v1282 = vunpack.c.h.b16 %v247
    %v1283 = vunpack.c.l.b16 %v248
    %v1284 = vunpack.c.h.b16 %v248
    %v1285 = vunpack.c.l.b16 %v249
    %v1286 = vunpack.c.h.b16 %v249
    %v1287 = vunpack.c.l.b16 %v250
    %v1288 = vunpack.c.h.b16 %v250
    %v1289 = vunpack.c.l.b16 %v251
    %v1290 = vunpack.c.h.b16 %v251
    %v1291 = vunpack.c.l.b16 %v252
    %v1292 = vunpack.c.h.b16 %v252
    %v1293 = vunpack.c.l.b16 %v253
    %v1294 = vunpack.c.h.b16 %v253
    %v1295 = vunpack.c.l.b16 %v254
    %v1296 = vunpack.c.h.b16 %v254
    %v1297 = vunpack.c.l.b16 %v255
    %v1298 = vunpack.c.h.b16 %v255
    %v1299 = vunpack.c.l.b16 %v256
    %v1300 = vunpack.c.h.b16 %v256
    %v1301 = vunpack.c.l.b16 %v257
    %v1302 = vunpack.c.h.b16 %v257
    %v1303 = vunpack.c.l.b16 %v258
    %v1304 = vunpack.c.h.b16 %v258
    %v1305 = vunpack.c.l.b16 %v259
    %v1306 = vunpack.c.h.b16 %v259
    %v1307 = vunpack.c.l.b16 %v260
    %v1308 = vunpack.c.h.b16 %v260
    %v1309 = vunpack.c.l.b16 %v261
    %v1310 = vunpack.c.h.b16 %v261
    %v1311 = vunpack.c.l.b16 %v262
    %v1312 = vunpack.c.h.b16 %v262
    %v1313 = vunpack.c.l.b16 %v263
    %v1314 = vunpack.c.h.b16 %v263
    %v1315 = vunpack.c.l.b16 %v264
    %v1316 = vunpack.c.h.b16 %v264
    %v1317 = vunpack.c.l.b16 %v265
    %v1318 = vunpack.c.h.b16 %v265
    %v1319 = vunpack.c.l.b16 %v266
    %v1320 = vunpack.c.h.b16 %v266
    %v1321 = vunpack.c.l.b16 %v267
    %v1322 = vunpack.c.h.b16 %v267
    %v1323 = vunpack.c.l.b16 %v268
    %v1324 = vunpack.c.h.b16 %v268
    %v1325 = vunpack.c.l.b16 %v269
    %v1326 = vunpack.c.h.b16 %v269
    %v1327 = vunpack.c.l.b16 %v270
    %v1328 = vunpack.c.h.b16 %v270
    %v1329 = vunpack.c.l.b16 %v271
    %v1330 = vunpack.c.h.b16 %v271
    %v1331 = vunpack.c.l.b16 %v272
    %v1332 = vunpack.c.h.b16 %v272
    %v1333 = vunpack.c.l.b16 %v273
    %v1334 = vunpack.c.h.b16 %v273
    %v1335 = vunpack.c.l.b16 %v274
    %v1336 = vunpack.c.h.b16 %v274
    %v1337 = vunpack.c.l.b16 %v275
    %v1338 = vunpack.c.h.b16 %v275
    %v1339 = vunpack.c.l.b16 %v276
    %v1340 = vunpack.c.h.b16 %v276
    %v1341 = vunpack.c.l.b16 %v277
    %v1342 = vunpack.c.h.b16 %v277
    %v1343 = vunpack.c.l.b16 %v278
    %v1344 = vunpack.c.h.b16 %v278
    %v1345 = vunpack.c.l.b16 %v279
    %v1346 = vunpack.c.h.b16 %v279
    %v1347 = vunpack.c.l.b16 %v280
    %v1348 = vunpack.c.h.b16 %v280
    %v1349 = vunpack.c.l.b16 %v281
    %v1350 = vunpack.c.h.b16 %v281
    %v1351 = vunpack.c.l.b16 %v282
    %v1352 = vunpack.c.h.b16 %v282
    %v1353 = vunpack.c.l.b16 %v283
    %v1354 = vunpack.c.h.b16 %v283
    %v1355 = vunpack.c.l.b16 %v284
    %v1356 = vunpack.c.h.b16 %v284
    %v1357 = vunpack.c.l.b16 %v285
    %v1358 = vunpack.c.h.b16 %v285
    %v1359 = vunpack.c.l.b16 %v286
    %v1360 = vunpack.c.h.b16 %v286
    %v1361 = vunpack.c.l.b16 %v287
    %v1362 = vunpack.c.h.b16 %v287
    %v1363 = vunpack.c.l.b16 %v288
    %v1364 = vunpack.c.h.b16 %v288
    %v1365 = vunpack.c.l.b16 %v289
    %v1366 = vunpack.c.h.b16 %v289
    %v1367 = vunpack.c.l.b16 %v290
    %v1368 = vunpack.c.h.b16 %v290
    %v1369 = vunpack.c.l.b16 %v291
    %v1370 = vunpack.c.h.b16 %v291
    %v1371 = vunpack.c.l.b16 %v292
    %v1372 = vunpack.c.h.b16 %v292
    %v1373 = vunpack.c.l.b16 %v293
    %v1374 = vunpack.c.h.b16 %v293
    %v1375 = vunpack.c.l.b16 %v294
    %v1376 = vunpack.c.h.b16 %v294
    %v1377 = vunpack.c.l.b16 %v295
    %v1378 = vunpack.c.h.b16 %v295
    %v1379 = vunpack.c.l.b16 %v296
    %v1380 = vunpack.c.h.b16 %v296
    %v1381 = vunpack.c.l.b16 %v297
    %v1382 = vunpack.c.h.b16 %v297
    %v1383 = vunpack.c.l.b16 %v298
    %v1384 = vunpack.c.h.b16 %v298
    %v1385 = vunpack.c.l.b16 %v299
    %v1386 = vunpack.c.h.b16 %v299
    %v1387 = vunpack.c.l.b16 %v300
    %v1388 = vunpack.c.h.b16 %v300
    %v1389 = vunpack.c.l.b16 %v301
    %v1390 = vunpack.c.h.b16 %v301
    %v1391 = vunpack.c.l.b16 %v302
    %v1392 = vunpack.c.h.b16 %v302
    %v1393 = vunpack.c.l.b16 %v303
    %v1394 = vunpack.c.h.b16 %v303
    %v1395 = vunpack.c.l.b16 %v304
    %v1396 = vunpack.c.h.b16 %v304
    %v1397 = vunpack.c.l.b16 %v305
    %v1398 = vunpack.c.h.b16 %v305
    %v1399 = vunpack.c.l.b16 %v306
    %v1400 = vunpack.c.h.b16 %v306
    %v1401 = vunpack.c.l.b16 %v307
    %v1402 = vunpack.c.h.b16 %v307
    %v1403 = vunpack.c.l.b16 %v308
    %v1404 = vunpack.c.h.b16 %v308
    %v1405 = vunpack.c.l.b16 %v309
    %v1406 = vunpack.c.h.b16 %v309
    %v1407 = vunpack.c.l.b16 %v310
    %v1408 = vunpack.c.h.b16 %v310
    %v1409 = vunpack.c.l.b16 %v311
    %v1410 = vunpack.c.h.b16 %v311
    %v1411 = vunpack.c.l.b16 %v312
    %v1412 = vunpack.c.h.b16 %v312
    %v1413 = vunpack.c.l.b16 %v313
    %v1414 = vunpack.c.h.b16 %v313
    %v1415 = vunpack.c.l.b16 %v314
    %v1416 = vunpack.c.h.b16 %v314
    %v1417 = vunpack.c.l.b16 %v315
    %v1418 = vunpack.c.h.b16 %v315
    %v1419 = vunpack.c.l.b16 %v316
    %v1420 = vunpack.c.h.b16 %v316
    %v1421 = vunpack.c.l.b16 %v317
    %v1422 = vunpack.c.h.b16 %v317
    %v1423 = vunpack.c.l.b16 %v318
    %v1424 = vunpack.c.h.b16 %v318
    %v1425 = vunpack.c.l.b16 %v319
    %v1426 = vunpack.c.h.b16 %v319
    %v1427 = vunpack.c.l.b16 %v320
    %v1428 = vunpack.c.h.b16 %v320
    %v1429 = vunpack.c.l.b16 %v321
    %v1430 = vunpack.c.h.b16 %v321
    %v1431 = vunpack.c.l.b16 %v322
    %v1432 = vunpack.c.h.b16 %v322
    %v1433 = vunpack.c.l.b16 %v323
    %v1434 = vunpack.c.h.b16 %v323
    %v1435 = vunpack.c.l.b16 %v324
    %v1436 = vunpack.c.h.b16 %v324
    %v1437 = vunpack.c.l.b16 %v325
    %v1438 = vunpack.c.h.b16 %v325
    %v1439 = vunpack.c.l.b16 %v326
    %v1440 = vunpack.c.h.b16 %v326
    %v1441 = vunpack.c.l.b16 %v327
    %v1442 = vunpack.c.h.b16 %v327
    %v1443 = vunpack.c.l.b16 %v328
    %v1444 = vunpack.c.h.b16 %v328
    %v1445 = vunpack.c.l.b16 %v329
    %v1446 = vunpack.c.h.b16 %v329
    %v1447 = vunpack.c.l.b16 %v330
    %v1448 = vunpack.c.h.b16 %v330
    %v1449 = vunpack.c.l.b16 %v331
    %v1450 = vunpack.c.h.b16 %v331
    %v1451 = vunpack.c.l.b16 %v332
    %v1452 = vunpack.c.h.b16 %v332
    %v1453 = vunpack.c.l.b16 %v333
    %v1454 = vunpack.c.h.b16 %v333
    %v1455 = vunpack.c.l.b16 %v334
    %v1456 = vunpack.c.h.b16 %v334
    %v1457 = vunpack.c.l.b16 %v335
    %v1458 = vunpack.c.h.b16 %v335
    %v1459 = vunpack.c.l.b16 %v336
    %v1460 = vunpack.c.h.b16 %v336
    %v1461 = vunpack.c.l.b16 %v337
    %v1462 = vunpack.c.h.b16 %v337
    %v1463 = vunpack.c.l.b16 %v338
    %v1464 = vunpack.c.h.b16 %v338
    %v1465 = vunpack.c.l.b16 %v339
    %v1466 = vunpack.c.h.b16 %v339
    %v1467 = vunpack.c.l.b16 %v340
    %v1468 = vunpack.c.h.b16 %v340
    %v1469 = vunpack.c.l.b16 %v341
    %v1470 = vunpack.c.h.b16 %v341
    %v1471 = vunpack.c.l.b16 %v342
    %v1472 = vunpack.c.h.b16 %v342
    %v1473 = vunpack.c.l.b16 %v343
    %v1474 = vunpack.c.h.b16 %v343
    %v1475 = vunpack.c.l.b16 %v344
    %v1476 = vunpack.c.h.b16 %v344
    %v1477 = vunpack.c.l.b16 %v345
    %v1478 = vunpack.c.h.b16 %v345
    %v1479 = vunpack.c.l.b16 %v346
    %v1480 = vunpack.c.h.b16 %v346
    %v1481 = vunpack.c.l.b16 %v347
    %v1482 = vunpack.c.h.b16 %v347
    %v1483 = vunpack.c.l.b16 %v348
    %v1484 = vunpack.c.h.b16 %v348
    %v1485 = vunpack.c.l.b16 %v349
    %v1486 = vunpack.c.h.b16 %v349
    %v1487 = vunpack.c.l.b16 %v350
    %v1488 = vunpack.c.h.b16 %v350
    %v1489 = vunpack.c.l.b16 %v351
    %v1490 = vunpack.c.h.b16 %v351
    %v1491 = vunpack.c.l.b16 %v352
    %v1492 = vunpack.c.h.b16 %v352
    %v1493 = vunpack.c.l.b16 %v353
    %v1494 = vunpack.c.h.b16 %v353
    %v1495 = vunpack.c.l.b16 %v354
    %v1496 = vunpack.c.h.b16 %v354
    %v1497 = vunpack.c.l.b16 %v355
    %v1498 = vunpack.c.h.b16 %v355
    %v1499 = vunpack.c.l.b16 %v356
    %v1500 = vunpack.c.h.b16 %v356
    %v1501 = vunpack.c.l.b16 %v357
    %v1502 = vunpack.c.h.b16 %v357
    %v1503 = vunpack.c.l.b16 %v358
    %v1504 = vunpack.c.h.b16 %v358
    %v1505 = vunpack.c.l.b16 %v359
    %v1506 = vunpack.c.h.b16 %v359
    %v1507 = vunpack.c.l.b16 %v360
    %v1508 = vunpack.c.h.b16 %v360
    %v1509 = vunpack.c.l.b16 %v361
    %v1510 = vunpack.c.h.b16 %v361
    %v1511 = vunpack.c.l.b16 %v362
    %v1512 = vunpack.c.h.b16 %v362
    %v1513 = vunpack.c.l.b16 %v363
    %v1514 = vunpack.c.h.b16 %v363
    %v1515 = vunpack.c.l.b16 %v364
    %v1516 = vunpack.c.h.b16 %v364
    %v1517 = vunpack.c.l.b16 %v365
    %v1518 = vunpack.c.h.b16 %v365
    %v1519 = vunpack.c.l.b16 %v366
    %v1520 = vunpack.c.h.b16 %v366
    %v1521 = vunpack.c.l.b16 %v367
    %v1522 = vunpack.c.h.b16 %v367
    %v1523 = vunpack.c.l.b16 %v368
    %v1524 = vunpack.c.h.b16 %v368
    %v1525 = vunpack.c.l.b16 %v369
    %v1526 = vunpack.c.h.b16 %v369
    %v1527 = vunpack.c.l.b16 %v370
    %v1528 = vunpack.c.h.b16 %v370
    %v1529 = vunpack.c.l.b16 %v371
    %v1530 = vunpack.c.h.b16 %v371
    %v1531 = vunpack.c.l.b16 %v372
    %v1532 = vunpack.c.h.b16 %v372
    %v1533 = vunpack.c.l.b16 %v373
    %v1534 = vunpack.c.h.b16 %v373
    %v1535 = vunpack.c.l.b16 %v374
    %v1536 = vunpack.c.h.b16 %v374
    %v1537 = vunpack.c.l.b16 %v375
    %v1538 = vunpack.c.h.b16 %v375
    %v1539 = vunpack.c.l.b16 %v376
    %v1540 = vunpack.c.h.b16 %v376
    %v1541 = vunpack.c.l.b16 %v377
    %v1542 = vunpack.c.h.b16 %v377
    %v1543 = vunpack.c.l.b16 %v378
    %v1544 = vunpack.c.h.b16 %v378
    %v1545 = vunpack.c.l.b16 %v379
    %v1546 = vunpack.c.h.b16 %v379
    %v1547 = vunpack.c.l.b16 %v380
    %v1548 = vunpack.c.h.b16 %v380
    %v1549 = vunpack.c.l.b16 %v381
    %v1550 = vunpack.c.h.b16 %v381
    %v1551 = vunpack.c.l.b16 %v382
    %v1552 = vunpack.c.h.b16 %v382
    %v1553 = vunpack.c.l.b16 %v383
    %v1554 = vunpack.c.h.b16 %v383
    %v1555 = vunpack.c.l.b16 %v384
    %v1556 = vunpack.c.h.b16 %v384
    %v1557 = vunpack.c.l.b16 %v385
    %v1558 = vunpack.c.h.b16 %v385
    %v1559 = vunpack.c.l.b16 %v386
    %v1560 = vunpack.c.h.b16 %v386
    %v1561 = vunpack.c.l.b16 %v387
    %v1562 = vunpack.c.h.b16 %v387
    %v1563 = vunpack.c.l.b16 %v388
    %v1564 = vunpack.c.h.b16 %v388
    %v1565 = vunpack.c.l.b16 %v389
    %v1566 = vunpack.c.h.b16 %v389
    %v1567 = vunpack.c.l.b16 %v390
    %v1568 = vunpack.c.h.b16 %v390
    %v1569 = vunpack.c.l.b16 %v391
    %v1570 = vunpack.c.h.b16 %v391
    %v1571 = vunpack.c.l.b16 %v392
    %v1572 = vunpack.c.h.b16 %v392
    %v1573 = vunpack.c.l.b16 %v393
    %v1574 = vunpack.c.h.b16 %v393
    %v1575 = vunpack.c.l.b16 %v394
    %v1576 = vunpack.c.h.b16 %v394
    %v1577 = vunpack.c.l.b16 %v395
    %v1578 = vunpack.c.h.b16 %v395
    %v1579 = vunpack.c.l.b16 %v396
    %v1580 = vunpack.c.h.b16 %v396
    %v1581 = vunpack.c.l.b16 %v397
    %v1582 = vunpack.c.h.b16 %v397
    %v1583 = vunpack.c.l.b16 %v398
    %v1584 = vunpack.c.h.b16 %v398
    %v1585 = vunpack.c.l.b16 %v399
    %v1586 = vunpack.c.h.b16 %v399
    %v1587 = vunpack.c.l.b16 %v400
    %v1588 = vunpack.c.h.b16 %v400
    %v1589 = vunpack.c.l.b16 %v401
    %v1590 = vunpack.c.h.b16 %v401
    %v1591 = vunpack.c.l.b16 %v402
    %v1592 = vunpack.c.h.b16 %v402
    %v1593 = vunpack.c.l.b16 %v403
    %v1594 = vunpack.c.h.b16 %v403
    %v1595 = vunpack.c.l.b16 %v404
    %v1596 = vunpack.c.h.b16 %v404
    %v1597 = vunpack.c.l.b16 %v405
    %v1598 = vunpack.c.h.b16 %v405
    %v1599 = vunpack.c.l.b16 %v406
    %v1600 = vunpack.c.h.b16 %v406
    %v1601 = vunpack.c.l.b16 %v407
    %v1602 = vunpack.c.h.b16 %v407
    %v1603 = vunpack.c.l.b16 %v408
    %v1604 = vunpack.c.h.b16 %v408
    %v1605 = vunpack.c.l.b16 %v409
    %v1606 = vunpack.c.h.b16 %v409
    %v1607 = vunpack.c.l.b16 %v410
    %v1608 = vunpack.c.h.b16 %v410
    %v1609 = vunpack.c.l.b16 %v411
    %v1610 = vunpack.c.h.b16 %v411
    %v1611 = vunpack.c.l.b16 %v412
    %v1612 = vunpack.c.h.b16 %v412
    %v1613 = vunpack.c.l.b16 %v413
    %v1614 = vunpack.c.h.b16 %v413
    %v1615 = vunpack.c.l.b16 %v414
    %v1616 = vunpack.c.h.b16 %v414
    %v1617 = vunpack.c.l.b16 %v415
    %v1618 = vunpack.c.h.b16 %v415
    %v1619 = vunpack.c.l.b16 %v416
    %v1620 = vunpack.c.h.b16 %v416
    %v1621 = vunpack.c.l.b16 %v417
    %v1622 = vunpack.c.h.b16 %v417
    %v1623 = vunpack.c.l.b16 %v418
    %v1624 = vunpack.c.h.b16 %v418
    %v1625 = vunpack.c.l.b16 %v419
    %v1626 = vunpack.c.h.b16 %v419
    %v1627 = vunpack.c.l.b16 %v420
    %v1628 = vunpack.c.h.b16 %v420
    %v1629 = vunpack.c.l.b16 %v421
    %v1630 = vunpack.c.h.b16 %v421
    %v1631 = vunpack.c.l.b16 %v422
    %v1632 = vunpack.c.h.b16 %v422
    %v1633 = vunpack.c.l.b16 %v423
    %v1634 = vunpack.c.h.b16 %v423
    %v1635 = vunpack.c.l.b16 %v424
    %v1636 = vunpack.c.h.b16 %v424
    %v1637 = vunpack.c.l.b16 %v425
    %v1638 = vunpack.c.h.b16 %v425
    %v1639 = vunpack.c.l.b16 %v426
    %v1640 = vunpack.c.h.b16 %v426
    %v1641 = vunpack.c.l.b16 %v427
    %v1642 = vunpack.c.h.b16 %v427
    %v1643 = vunpack.c.l.b16 %v428
    %v1644 = vunpack.c.h.b16 %v428
    %v1645 = vunpack.c.l.b16 %v429
    %v1646 = vunpack.c.h.b16 %v429
    %v1647 = vunpack.c.l.b16 %v430
    %v1648 = vunpack.c.h.b16 %v430
    %v1649 = vunpack.c.l.b16 %v431
    %v1650 = vunpack.c.h.b16 %v431
    %v1651 = vunpack.c.l.b16 %v432
    %v1652 = vunpack.c.h.b16 %v432
    %v1653 = vunpack.c.l.b16 %v433
    %v1654 = vunpack.c.h.b16 %v433
    %v1655 = vunpack.c.l.b16 %v434
    %v1656 = vunpack.c.h.b16 %v434
    %v1657 = vunpack.c.l.b16 %v435
    %v1658 = vunpack.c.h.b16 %v435
    %v1659 = vunpack.c.l.b16 %v436
    %v1660 = vunpack.c.h.b16 %v436
    %v1661 = vunpack.c.l.b16 %v437
    %v1662 = vunpack.c.h.b16 %v437
    %v1663 = vunpack.c.l.b16 %v438
    %v1664 = vunpack.c.h.b16 %v438
    %v1665 = vunpack.c.l.b16 %v439
    %v1666 = vunpack.c.h.b16 %v439
    %v1667 = vunpack.c.l.b16 %v440
    %v1668 = vunpack.c.h.b16 %v440
    %v1669 = vunpack.c.l.b16 %v441
    %v1670 = vunpack.c.h.b16 %v441
    %v1671 = vunpack.c.l.b16 %v442
    %v1672 = vunpack.c.h.b16 %v442
    %v1673 = vunpack.c.l.b16 %v443
    %v1674 = vunpack.c.h.b16 %v443
    %v1675 = vunpack.c.l.b16 %v444
    %v1676 = vunpack.c.h.b16 %v444
    %v1677 = vunpack.c.l.b16 %v445
    %v1678 = vunpack.c.h.b16 %v445
    %v1679 = vunpack.c.l.b16 %v446
    %v1680 = vunpack.c.h.b16 %v446
    %v1681 = vunpack.c.l.b16 %v447
    %v1682 = vunpack.c.h.b16 %v447
    %v1683 = vunpack.c.l.b16 %v448
    %v1684 = vunpack.c.h.b16 %v448
    %v1685 = vunpack.c.l.b16 %v449
    %v1686 = vunpack.c.h.b16 %v449
    %v1687 = vunpack.c.l.b16 %v450
    %v1688 = vunpack.c.h.b16 %v450
    %v1689 = vunpack.c.l.b16 %v451
    %v1690 = vunpack.c.h.b16 %v451
    %v1691 = vunpack.c.l.b16 %v452
    %v1692 = vunpack.c.h.b16 %v452
    %v1693 = vunpack.c.l.b16 %v453
    %v1694 = vunpack.c.h.b16 %v453
    %v1695 = vunpack.c.l.b16 %v454
    %v1696 = vunpack.c.h.b16 %v454
    %v1697 = vunpack.c.l.b16 %v455
    %v1698 = vunpack.c.h.b16 %v455
    %v1699 = vunpack.c.l.b16 %v456
    %v1700 = vunpack.c.h.b16 %v456
    %v1701 = vunpack.c.l.b16 %v457
    %v1702 = vunpack.c.h.b16 %v457
    %v1703 = vpack.c.b16 %v947, %v935
    %v1704 = vpack.c.b16 %v948, %v936
    %v1705 = vpack.c.b16 %v949, %v937
    %v1706 = vpack.c.b16 %v950, %v938
    %v1707 = vpack.c.b16 %v951, %v939
    %v1708 = vpack.c.b16 %v952, %v940
    %v1709 = vpack.c.b16 %v953, %v941
    %v1710 = vpack.c.b16 %v954, %v942
    %v1711 = vpack.c.b16 %v955, %v943
    %v1712 = vpack.c.b16 %v956, %v944
    %v1713 = vpack.c.b16 %v957, %v945
    %v1714 = vpack.c.b16 %v958, %v946
    %v1715 = vpack.c.b16 %v971, %v959
    %v1716 = vpack.c.b16 %v972, %v960
    %v1717 = vpack.c.b16 %v973, %v961
    %v1718 = vpack.c.b16 %v974, %v962
    %v1719 = vpack.c.b16 %v975, %v963
    %v1720 = vpack.c.b16 %v976, %v964
    %v1721 = vpack.c.b16 %v977, %v965
    %v1722 = vpack.c.b16 %v978, %v966
    %v1723 = vpack.c.b16 %v979, %v967
    %v1724 = vpack.c.b16 %v980, %v968
    %v1725 = vpack.c.b16 %v981, %v969
    %v1726 = vpack.c.b16 %v982, %v970
    %v1727 = vpack.c.b16 %v995, %v983
    %v1728 = vpack.c.b16 %v996, %v984
    %v1729 = vpack.c.b16 %v997, %v985
    %v1730 = vpack.c.b16 %v998, %v986
    %v1731 = vpack.c.b16 %v999, %v987
    %v1732 = vpack.c.b16 %v1000, %v988
    %v1733 = vpack.c.b16 %v1001, %v989
    %v1734 = vpack.c.b16 %v1002, %v990
    %v1735 = vpack.c.b16 %v1003, %v991
    %v1736 = vpack.c.b16 %v1004, %v992
    %v1737 = vpack.c.b16 %v1005, %v993
    %v1738 = vpack.c.b16 %v1006, %v994
    %v1739 = vpack.c.b16 %v1019, %v1007
    %v1740 = vpack.c.b16 %v1020, %v1008
    %v1741 = vpack.c.b16 %v1021, %v1009
    %v1742 = vpack.c.b16 %v1022, %v1010
    %v1743 = vpack.c.b16 %v1023, %v1011
    %v1744 = vpack.c.b16 %v1024, %v1012
    %v1745 = vpack.c.b16 %v1025, %v1013
    %v1746 = vpack.c.b16 %v1026, %v1014
    %v1747 = vpack.c.b16 %v1027, %v1015
    %v1748 = vpack.c.b16 %v1028, %v1016
    %v1749 = vpack.c.b16 %v1029, %v1017
    %v1750 = vpack.c.b16 %v1030, %v1018
    %v1751 = vpack.c.b16 %v1043, %v1031
    %v1752 = vpack.c.b16 %v1044, %v1032
    %v1753 = vpack.c.b16 %v1045, %v1033
    %v1754 = vpack.c.b16 %v1046, %v1034
    %v1755 = vpack.c.b16 %v1047, %v1035
    %v1756 = vpack.c.b16 %v1048, %v1036
    %v1757 = vpack.c.b16 %v1049, %v1037
    %v1758 = vpack.c.b16 %v1050, %v1038
    %v1759 = vpack.c.b16 %v1051, %v1039
    %v1760 = vpack.c.b16 %v1052, %v1040
    %v1761 = vpack.c.b16 %v1053, %v1041
    %v1762 = vpack.c.b16 %v1054, %v1042
    %v1763 = vpack.c.b16 %v1067, %v1055
    %v1764 = vpack.c.b16 %v1068, %v1056
    %v1765 = vpack.c.b16 %v1069, %v1057
    %v1766 = vpack.c.b16 %v1070, %v1058
    %v1767 = vpack.c.b16 %v1071, %v1059
    %v1768 = vpack.c.b16 %v1072, %v1060
    %v1769 = vpack.c.b16 %v1073, %v1061
    %v1770 = vpack.c.b16 %v1074, %v1062
    %v1771 = vpack.c.b16 %v1075, %v1063
    %v1772 = vpack.c.b16 %v1076, %v1064
    %v1773 = vpack.c.b16 %v1077, %v1065
    %v1774 = vpack.c.b16 %v1078, %v1066
    %v1775 = vpack.c.b16 %v1091, %v1079
    %v1776 = vpack.c.b16 %v1092, %v1080
    %v1777 = vpack.c.b16 %v1093, %v1081
    %v1778 = vpack.c.b16 %v1094, %v1082
    %v1779 = vpack.c.b16 %v1095, %v1083
    %v1780 = vpack.c.b16 %v1096, %v1084
    %v1781 = vpack.c.b16 %v1097, %v1085
    %v1782 = vpack.c.b16 %v1098, %v1086
    %v1783 = vpack.c.b16 %v1099, %v1087
    %v1784 = vpack.c.b16 %v1100, %v1088
    %v1785 = vpack.c.b16 %v1101, %v1089
    %v1786 = vpack.c.b16 %v1102, %v1090
    %v1787 = vpack.c.b16 %v1115, %v1103
    %v1788 = vpack.c.b16 %v1116, %v1104
    %v1789 = vpack.c.b16 %v1117, %v1105
    %v1790 = vpack.c.b16 %v1118, %v1106
    %v1791 = vpack.c.b16 %v1119, %v1107
    %v1792 = vpack.c.b16 %v1120, %v1108
    %v1793 = vpack.c.b16 %v1121, %v1109
    %v1794 = vpack.c.b16 %v1122, %v1110
    %v1795 = vpack.c.b16 %v1123, %v1111
    %v1796 = vpack.c.b16 %v1124, %v1112
    %v1797 = vpack.c.b16 %v1125, %v1113
    %v1798 = vpack.c.b16 %v1126, %v1114
    %v1799 = vpack.c.b16 %v1139, %v1127
    %v1800 = vpack.c.b16 %v1140, %v1128
    %v1801 = vpack.c.b16 %v1141, %v1129
    %v1802 = vpack.c.b16 %v1142, %v1130
    %v1803 = vpack.c.b16 %v1143, %v1131
    %v1804 = vpack.c.b16 %v1144, %v1132
    %v1805 = vpack.c.b16 %v1145, %v1133
    %v1806 = vpack.c.b16 %v1146, %v1134
    %v1807 = vpack.c.b16 %v1147, %v1135
    %v1808 = vpack.c.b16 %v1148, %v1136
    %v1809 = vpack.c.b16 %v1149, %v1137
    %v1810 = vpack.c.b16 %v1150, %v1138
    %v1811 = vpack.c.b16 %v1163, %v1151
    %v1812 = vpack.c.b16 %v1164, %v1152
    %v1813 = vpack.c.b16 %v1165, %v1153
    %v1814 = vpack.c.b16 %v1166, %v1154
    %v1815 = vpack.c.b16 %v1167, %v1155
    %v1816 = vpack.c.b16 %v1168, %v1156
    %v1817 = vpack.c.b16 %v1169, %v1157
    %v1818 = vpack.c.b16 %v1170, %v1158
    %v1819 = vpack.c.b16 %v1171, %v1159
    %v1820 = vpack.c.b16 %v1172, %v1160
    %v1821 = vpack.c.b16 %v1173, %v1161
    %v1822 = vpack.c.b16 %v1174, %v1162
    %v1823 = vpack.c.b16 %v1187, %v1175
    %v1824 = vpack.c.b16 %v1188, %v1176
    %v1825 = vpack.c.b16 %v1189, %v1177
    %v1826 = vpack.c.b16 %v1190, %v1178
    %v1827 = vpack.c.b16 %v1191, %v1179
    %v1828 = vpack.c.b16 %v1192, %v1180
    %v1829 = vpack.c.b16 %v1193, %v1181
    %v1830 = vpack.c.b16 %v1194, %v1182
    %v1831 = vpack.c.b16 %v1195, %v1183
    %v1832 = vpack.c.b16 %v1196, %v1184
    %v1833 = vpack.c.b16 %v1197, %v1185
    %v1834 = vpack.c.b16 %v1198, %v1186
    %v1835 = vpack.c.b16 %v1211, %v1199
    %v1836 = vpack.c.b16 %v1212, %v1200
    %v1837 = vpack.c.b16 %v1213, %v1201
    %v1838 = vpack.c.b16 %v1214, %v1202
    %v1839 = vpack.c.b16 %v1215, %v1203
    %v1840 = vpack.c.b16 %v1216, %v1204
    %v1841 = vpack.c.b16 %v1217, %v1205
    %v1842 = vpack.c.b16 %v1218, %v1206
    %v1843 = vpack.c.b16 %v1219, %v1207
    %v1844 = vpack.c.b16 %v1220, %v1208
    %v1845 = vpack.c.b16 %v1221, %v1209
    %v1846 = vpack.c.b16 %v1222, %v1210
    %v1847 = vpack.c.b16 %v1235, %v1223
    %v1848 = vpack.c.b16 %v1236, %v1224
    %v1849 = vpack.c.b16 %v1237, %v1225
    %v1850 = vpack.c.b16 %v1238, %v1226
    %v1851 = vpack.c.b16 %v1239, %v1227
    %v1852 = vpack.c.b16 %v1240, %v1228
    %v1853 = vpack.c.b16 %v1241, %v1229
    %v1854 = vpack.c.b16 %v1242, %v1230
    %v1855 = vpack.c.b16 %v1243, %v1231
    %v1856 = vpack.c.b16 %v1244, %v1232
    %v1857 = vpack.c.b16 %v1245, %v1233
    %v1858 = vpack.c.b16 %v1246, %v1234
    %v1859 = vpack.c.b16 %v1259, %v1247
    %v1860 = vpack.c.b16 %v1260, %v1248
    %v1861 = vpack.c.b16 %v1261, %v1249
    %v1862 = vpack.c.b16 %v1262, %v1250
    %v1863 = vpack.c.b16 %v1263, %v1251
    %v1864 = vpack.c.b16 %v1264, %v1252
    %v1865 = vpack.c.b16 %v1265, %v1253
    %v1866 = vpack.c.b16 %v1266, %v1254
    %v1867 = vpack.c.b16 %v1267, %v1255
    %v1868 = vpack.c.b16 %v1268, %v1256
    %v1869 = vpack.c.b16 %v1269, %v1257
    %v1870 = vpack.c.b16 %v1270, %v1258
    %v1871 = vpack.c.b16 %v1283, %v1271
    %v1872 = vpack.c.b16 %v1284, %v1272
    %v1873 = vpack.c.b16 %v1285, %v1273
    %v1874 = vpack.c.b16 %v1286, %v1274
    %v1875 = vpack.c.b16 %v1287, %v1275
    %v1876 = vpack.c.b16 %v1288, %v1276
    %v1877 = vpack.c.b16 %v1289, %v1277
    %v1878 = vpack.c.b16 %v1290, %v1278
    %v1879 = vpack.c.b16 %v1291, %v1279
    %v1880 = vpack.c.b16 %v1292, %v1280
    %v1881 = vpack.c.b16 %v1293, %v1281
    %v1882 = vpack.c.b16 %v1294, %v1282
    %v1883 = vpack.c.b16 %v1307, %v1295
    %v1884 = vpack.c.b16 %v1308, %v1296
    %v1885 = vpack.c.b16 %v1309, %v1297
    %v1886 = vpack.c.b16 %v1310, %v1298
    %v1887 = vpack.c.b16 %v1311, %v1299
    %v1888 = vpack.c.b16 %v1312, %v1300
    %v1889 = vpack.c.b16 %v1313, %v1301
    %v1890 = vpack.c.b16 %v1314, %v1302
    %v1891 = vpack.c.b16 %v1315, %v1303
    %v1892 = vpack.c.b16 %v1316, %v1304
    %v1893 = vpack.c.b16 %v1317, %v1305
    %v1894 = vpack.c.b16 %v1318, %v1306
    %v1895 = vpack.c.b16 %v1331, %v1319
    %v1896 = vpack.c.b16 %v1332, %v1320
    %v1897 = vpack.c.b16 %v1333, %v1321
    %v1898 = vpack.c.b16 %v1334, %v1322
    %v1899 = vpack.c.b16 %v1335, %v1323
    %v1900 = vpack.c.b16 %v1336, %v1324
    %v1901 = vpack.c.b16 %v1337, %v1325
    %v1902 = vpack.c.b16 %v1338, %v1326
    %v1903 = vpack.c.b16 %v1339, %v1327
    %v1904 = vpack.c.b16 %v1340, %v1328
    %v1905 = vpack.c.b16 %v1341, %v1329
    %v1906 = vpack.c.b16 %v1342, %v1330
    %v1907 = vpack.c.b16 %v1355, %v1343
    %v1908 = vpack.c.b16 %v1356, %v1344
    %v1909 = vpack.c.b16 %v1357, %v1345
    %v1910 = vpack.c.b16 %v1358, %v1346
    %v1911 = vpack.c.b16 %v1359, %v1347
    %v1912 = vpack.c.b16 %v1360, %v1348
    %v1913 = vpack.c.b16 %v1361, %v1349
    %v1914 = vpack.c.b16 %v1362, %v1350
    %v1915 = vpack.c.b16 %v1363, %v1351
    %v1916 = vpack.c.b16 %v1364, %v1352
    %v1917 = vpack.c.b16 %v1365, %v1353
    %v1918 = vpack.c.b16 %v1366, %v1354
    %v1919 = vpack.c.b16 %v1379, %v1367
    %v1920 = vpack.c.b16 %v1380, %v1368
    %v1921 = vpack.c.b16 %v1381, %v1369
    %v1922 = vpack.c.b16 %v1382, %v1370
    %v1923 = vpack.c.b16 %v1383, %v1371
    %v1924 = vpack.c.b16 %v1384, %v1372
    %v1925 = vpack.c.b16 %v1385, %v1373
    %v1926 = vpack.c.b16 %v1386, %v1374
    %v1927 = vpack.c.b16 %v1387, %v1375
    %v1928 = vpack.c.b16 %v1388, %v1376
    %v1929 = vpack.c.b16 %v1389, %v1377
    %v1930 = vpack.c.b16 %v1390, %v1378
    %v1931 = vpack.c.b16 %v1403, %v1391
    %v1932 = vpack.c.b16 %v1404, %v1392
    %v1933 = vpack.c.b16 %v1405, %v1393
    %v1934 = vpack.c.b16 %v1406, %v1394
    %v1935 = vpack.c.b16 %v1407, %v1395
    %v1936 = vpack.c.b16 %v1408, %v1396
    %v1937 = vpack.c.b16 %v1409, %v1397
    %v1938 = vpack.c.b16 %v1410, %v1398
    %v1939 = vpack.c.b16 %v1411, %v1399
    %v1940 = vpack.c.b16 %v1412, %v1400
    %v1941 = vpack.c.b16 %v1413, %v1401
    %v1942 = vpack.c.b16 %v1414, %v1402
    %v1943 = vpack.c.b16 %v1427, %v1415
    %v1944 = vpack.c.b16 %v1428, %v1416
    %v1945 = vpack.c.b16 %v1429, %v1417
    %v1946 = vpack.c.b16 %v1430, %v1418
    %v1947 = vpack.c.b16 %v1431, %v1419
    %v1948 = vpack.c.b16 %v1432, %v1420
    %v1949 = vpack.c.b16 %v1433, %v1421
    %v1950 = vpack.c.b16 %v1434, %v1422
    %v1951 = vpack.c.b16 %v1435, %v1423
    %v1952 = vpack.c.b16 %v1436, %v1424
    %v1953 = vpack.c.b16 %v1437, %v1425
    %v1954 = vpack.c.b16 %v1438, %v1426
    %v1955 = vpack.c.b16 %v1451, %v1439
    %v1956 = vpack.c.b16 %v1452, %v1440
    %v1957 = vpack.c.b16 %v1453, %v1441
    %v1958 = vpack.c.b16 %v1454, %v1442
    %v1959 = vpack.c.b16 %v1455, %v1443
    %v1960 = vpack.c.b16 %v1456, %v1444
    %v1961 = vpack.c.b16 %v1457, %v1445
    %v1962 = vpack.c.b16 %v1458, %v1446
    %v1963 = vpack.c.b16 %v1459, %v1447
    %v1964 = vpack.c.b16 %v1460, %v1448
    %v1965 = vpack.c.b16 %v1461, %v1449
    %v1966 = vpack.c.b16 %v1462, %v1450
    %v1967 = vpack.c.b16 %v1475, %v1463
    %v1968 = vpack.c.b16 %v1476, %v1464
    %v1969 = vpack.c.b16 %v1477, %v1465
    %v1970 = vpack.c.b16 %v1478, %v1466
    %v1971 = vpack.c.b16 %v1479, %v1467
    %v1972 = vpack.c.b16 %v1480, %v1468
    %v1973 = vpack.c.b16 %v1481, %v1469
    %v1974 = vpack.c.b16 %v1482, %v1470
    %v1975 = vpack.c.b16 %v1483, %v1471
    %v1976 = vpack.c.b16 %v1484, %v1472
    %v1977 = vpack.c.b16 %v1485, %v1473
    %v1978 = vpack.c.b16 %v1486, %v1474
    %v1979 = vpack.c.b16 %v1499, %v1487
    %v1980 = vpack.c.b16 %v1500, %v1488
    %v1981 = vpack.c.b16 %v1501, %v1489
    %v1982 = vpack.c.b16 %v1502, %v1490
    %v1983 = vpack.c.b16 %v1503, %v1491
    %v1984 = vpack.c.b16 %v1504, %v1492
    %v1985 = vpack.c.b16 %v1505, %v1493
    %v1986 = vpack.c.b16 %v1506, %v1494
    %v1987 = vpack.c.b16 %v1507, %v1495
    %v1988 = vpack.c.b16 %v1508, %v1496
    %v1989 = vpack.c.b16 %v1509, %v1497
    %v1990 = vpack.c.b16 %v1510, %v1498
    %v1991 = vpack.c.b16 %v1523, %v1511
    %v1992 = vpack.c.b16 %v1524, %v1512
    %v1993 = vpack.c.b16 %v1525, %v1513
    %v1994 = vpack.c.b16 %v1526, %v1514
    %v1995 = vpack.c.b16 %v1527, %v1515
    %v1996 = vpack.c.b16 %v1528, %v1516
    %v1997 = vpack.c.b16 %v1529, %v1517
    %v1998 = vpack.c.b16 %v1530, %v1518
    %v1999 = vpack.c.b16 %v1531, %v1519
    %v2000 = vpack.c.b16 %v1532, %v1520
    %v2001 = vpack.c.b16 %v1533, %v1521
    %v2002 = vpack.c.b16 %v1534, %v1522
    %v2003 = vpack.c.b16 %v1547, %v1535
    %v2004 = vpack.c.b16 %v1548, %v1536
    %v2005 = vpack.c.b16 %v1549, %v1537
    %v2006 = vpack.c.b16 %v1550, %v1538
    %v2007 = vpack.c.b16 %v1551, %v1539
    %v2008 = vpack.c.b16 %v1552, %v1540
    %v2009 = vpack.c.b16 %v1553, %v1541
    %v2010 = vpack.c.b16 %v1554, %v1542
    %v2011 = vpack.c.b16 %v1555, %v1543
    %v2012 = vpack.c.b16 %v1556, %v1544
    %v2013 = vpack.c.b16 %v1557, %v1545
    %v2014 = vpack.c.b16 %v1558, %v1546
    %v2015 = vpack.c.b16 %v1571, %v1559
    %v2016 = vpack.c.b16 %v1572, %v1560
    %v2017 = vpack.c.b16 %v1573, %v1561
    %v2018 = vpack.c.b16 %v1574, %v1562
    %v2019 = vpack.c.b16 %v1575, %v1563
    %v2020 = vpack.c.b16 %v1576, %v1564
    %v2021 = vpack.c.b16 %v1577, %v1565
    %v2022 = vpack.c.b16 %v1578, %v1566
    %v2023 = vpack.c.b16 %v1579, %v1567
    %v2024 = vpack.c.b16 %v1580, %v1568
    %v2025 = vpack.c.b16 %v1581, %v1569
    %v2026 = vpack.c.b16 %v1582, %v1570
    %v2027 = vpack.c.b16 %v1595, %v1583
    %v2028 = vpack.c.b16 %v1596, %v1584
    %v2029 = vpack.c.b16 %v1597, %v1585
    %v2030 = vpack.c.b16 %v1598, %v1586
    %v2031 = vpack.c.b16 %v1599, %v1587
    %v2032 = vpack.c.b16 %v1600, %v1588
    %v2033 = vpack.c.b16 %v1601, %v1589
    %v2034 = vpack.c.b16 %v1602, %v1590
    %v2035 = vpack.c.b16 %v1603, %v1591
    %v2036 = vpack.c.b16 %v1604, %v1592
    %v2037 = vpack.c.b16 %v1605, %v1593
    %v2038 = vpack.c.b16 %v1606, %v1594
    %v2039 = vpack.c.b16 %v1619, %v1607
    %v2040 = vpack.c.b16 %v1620, %v1608
    %v2041 = vpack.c.b16 %v1621, %v1609
    %v2042 = vpack.c.b16 %v1622, %v1610
    %v2043 = vpack.c.b16 %v1623, %v1611
    %v2044 = vpack.c.b16 %v1624, %v1612
    %v2045 = vpack.c.b16 %v1625, %v1613
    %v2046 = vpack.c.b16 %v1626, %v1614
    %v2047 = vpack.c.b16 %v1627, %v1615
    %v2048 = vpack.c.b16 %v1628, %v1616
    %v2049 = vpack.c.b16 %v1629, %v1617
    %v2050 = vpack.c.b16 %v1630, %v1618
    %v2051 = vpack.c.b16 %v1643, %v1631
    %v2052 = vpack.c.b16 %v1644, %v1632
    %v2053 = vpack.c.b16 %v1645, %v1633
    %v2054 = vpack.c.b16 %v1646, %v1634
    %v2055 = vpack.c.b16 %v1647, %v1635
    %v2056 = vpack.c.b16 %v1648, %v1636
    %v2057 = vpack.c.b16 %v1649, %v1637
    %v2058 = vpack.c.b16 %v1650, %v1638
    %v2059 = vpack.c.b16 %v1651, %v1639
    %v2060 = vpack.c.b16 %v1652, %v1640
    %v2061 = vpack.c.b16 %v1653, %v1641
    %v2062 = vpack.c.b16 %v1654, %v1642
    %v2063 = vpack.c.b16 %v1667, %v1655
    %v2064 = vpack.c.b16 %v1668, %v1656
    %v2065 = vpack.c.b16 %v1669, %v1657
    %v2066 = vpack.c.b16 %v1670, %v1658
    %v2067 = vpack.c.b16 %v1671, %v1659
    %v2068 = vpack.c.b16 %v1672, %v1660
    %v2069 = vpack.c.b16 %v1673, %v1661
    %v2070 = vpack.c.b16 %v1674, %v1662
    %v2071 = vpack.c.b16 %v1675, %v1663
    %v2072 = vpack.c.b16 %v1676, %v1664
    %v2073 = vpack.c.b16 %v1677, %v1665
    %v2074 = vpack.c.b16 %v1678, %v1666
    %v2075 = vpack.c.b16 %v1691, %v1679
    %v2076 = vpack.c.b16 %v1692, %v1680
    %v2077 = vpack.c.b16 %v1693, %v1681
    %v2078 = vpack.c.b16 %v1694, %v1682
    %v2079 = vpack.c.b16 %v1695, %v1683
    %v2080 = vpack.c.b16 %v1696, %v1684
    %v2081 = vpack.c.b16 %v1697, %v1685
    %v2082 = vpack.c.b16 %v1698, %v1686
    %v2083 = vpack.c.b16 %v1699, %v1687
    %v2084 = vpack.c.b16 %v1700, %v1688
    %v2085 = vpack.c.b16 %v1701, %v1689
    %v2086 = vpack.c.b16 %v1702, %v1690
    %2471 = vmatprep.subr.bf16.mxu0 %v1704
    %2472 = vmatpush1.bf16.msra.mxu0 %v1703
    %2473 = vmatprep.subr.bf16.mxu0 %v1716
    %2474 = vmatpush1.bf16.msra.mxu0 %v1715
    %2475 = vmatprep.subr.bf16.mxu0 %v1728
    %2476 = vmatpush1.bf16.msra.mxu0 %v1727
    %2477 = vmatprep.subr.bf16.mxu0 %v1740
    %2478 = vmatpush1.bf16.msra.mxu0 %v1739
    %2479 = vmatprep.subr.bf16.mxu0 %v1752
    %2480 = vmatpush1.bf16.msra.mxu0 %v1751
    %2481 = vmatprep.subr.bf16.mxu0 %v1764
    %2482 = vmatpush1.bf16.msra.mxu0 %v1763
    %2483 = vmatprep.subr.bf16.mxu0 %v1776
    %2484 = vmatpush1.bf16.msra.mxu0 %v1775
    %2485 = vmatprep.subr.bf16.mxu0 %v1788
    %2486 = vmatpush1.bf16.msra.mxu0 %v1787
    %2487 = vmatprep.subr.bf16.mxu0 %v1800
    %2488 = vmatpush1.bf16.msra.mxu0 %v1799
    %2489 = vmatprep.subr.bf16.mxu0 %v1812
    %2490 = vmatpush1.bf16.msra.mxu0 %v1811
    %2491 = vmatprep.subr.bf16.mxu0 %v1824
    %2492 = vmatpush1.bf16.msra.mxu0 %v1823
    %2493 = vmatprep.subr.bf16.mxu0 %v1836
    %2494 = vmatpush1.bf16.msra.mxu0 %v1835
    %2495 = vmatprep.subr.bf16.mxu0 %v1848
    %2496 = vmatpush1.bf16.msra.mxu0 %v1847
    %2497 = vmatprep.subr.bf16.mxu0 %v1860
    %2498 = vmatpush1.bf16.msra.mxu0 %v1859
    %2499 = vmatprep.subr.bf16.mxu0 %v1872
    %2500 = vmatpush1.bf16.msra.mxu0 %v1871
    %2501 = vmatprep.subr.bf16.mxu0 %v1884
    %2502 = vmatpush1.bf16.msra.mxu0 %v1883
    %2503 = vmatprep.mubr.bf16.mxu0 %v544
    %2504 = vmatmul.mubr.bf16.gmra.mrb[0].mxu0 %v537
    %v2505 = vpop.f32.mrb[0].mxu0
    %v2506 = vadd.f32 %v465, %v2505
    %v2507 = vpop.f32.mrb[0].mxu0
    %v2508 = vadd.f32 %v469, %v2507
    %v2509 = vpop.f32.mrb[0].mxu0
    %v2510 = vpop.f32.mrb[0].mxu0
    %2511 = vdwg.mxu0
    %2512 = vmatprep.subr.bf16.mxu0 %v1896
    %2513 = vmatpush1.bf16.msra.mxu0 %v1895
    %2514 = vmatprep.subr.bf16.mxu0 %v1908
    %2515 = vmatpush1.bf16.msra.mxu0 %v1907
    %2516 = vmatprep.subr.bf16.mxu0 %v1920
    %2517 = vmatpush1.bf16.msra.mxu0 %v1919
    %2518 = vmatprep.subr.bf16.mxu0 %v1932
    %2519 = vmatpush1.bf16.msra.mxu0 %v1931
    %2520 = vmatprep.subr.bf16.mxu0 %v1944
    %2521 = vmatpush1.bf16.msra.mxu0 %v1943
    %2522 = vmatprep.subr.bf16.mxu0 %v1956
    %2523 = vmatpush1.bf16.msra.mxu0 %v1955
    %2524 = vmatprep.subr.bf16.mxu0 %v1968
    %2525 = vmatpush1.bf16.msra.mxu0 %v1967
    %2526 = vmatprep.subr.bf16.mxu0 %v1980
    %2527 = vmatpush1.bf16.msra.mxu0 %v1979
    %2528 = vmatprep.subr.bf16.mxu0 %v1992
    %2529 = vmatpush1.bf16.msra.mxu0 %v1991
    %2530 = vmatprep.subr.bf16.mxu0 %v2004
    %2531 = vmatpush1.bf16.msra.mxu0 %v2003
    %2532 = vmatprep.subr.bf16.mxu0 %v2016
    %2533 = vmatpush1.bf16.msra.mxu0 %v2015
    %2534 = vmatprep.subr.bf16.mxu0 %v2028
    %2535 = vmatpush1.bf16.msra.mxu0 %v2027
    %2536 = vmatprep.subr.bf16.mxu0 %v2040
    %2537 = vmatpush1.bf16.msra.mxu0 %v2039
    %2538 = vmatprep.subr.bf16.mxu0 %v2052
    %2539 = vmatpush1.bf16.msra.mxu0 %v2051
    %2540 = vmatprep.subr.bf16.mxu0 %v2064
    %2541 = vmatpush1.bf16.msra.mxu0 %v2063
    %2542 = vmatprep.subr.bf16.mxu0 %v2076
    %2543 = vmatpush1.bf16.msra.mxu0 %v2075
    %2544 = vmatprep.mubr.bf16.mxu0 %v546
    %2545 = vmatmul.mubr.bf16.gmra.mrb[0].mxu0 %v545
    %v2546 = vpop.f32.mrb[0].mxu0
    %v2547 = vadd.f32 %v2506, %v2546
    %v2548 = vpop.f32.mrb[0].mxu0
    %v2549 = vadd.f32 %v2508, %v2548
    %v2550 = vpop.f32.mrb[0].mxu0
    %v2551 = vpop.f32.mrb[0].mxu0
    %2552 = vdwg.mxu0
    %2553 = vmatprep.subr.bf16.mxu0 %v1706
    %2554 = vmatpush1.bf16.msra.mxu0 %v1705
    %2555 = vmatprep.subr.bf16.mxu0 %v1718
    %2556 = vmatpush1.bf16.msra.mxu0 %v1717
    %2557 = vmatprep.subr.bf16.mxu0 %v1730
    %2558 = vmatpush1.bf16.msra.mxu0 %v1729
    %2559 = vmatprep.subr.bf16.mxu0 %v1742
    %2560 = vmatpush1.bf16.msra.mxu0 %v1741
    %2561 = vmatprep.subr.bf16.mxu0 %v1754
    %2562 = vmatpush1.bf16.msra.mxu0 %v1753
    %2563 = vmatprep.subr.bf16.mxu0 %v1766
    %2564 = vmatpush1.bf16.msra.mxu0 %v1765
    %2565 = vmatprep.subr.bf16.mxu0 %v1778
    %2566 = vmatpush1.bf16.msra.mxu0 %v1777
    %2567 = vmatprep.subr.bf16.mxu0 %v1790
    %2568 = vmatpush1.bf16.msra.mxu0 %v1789
    %2569 = vmatprep.subr.bf16.mxu0 %v1802
    %2570 = vmatpush1.bf16.msra.mxu0 %v1801
    %2571 = vmatprep.subr.bf16.mxu0 %v1814
    %2572 = vmatpush1.bf16.msra.mxu0 %v1813
    %2573 = vmatprep.subr.bf16.mxu0 %v1826
    %2574 = vmatpush1.bf16.msra.mxu0 %v1825
    %2575 = vmatprep.subr.bf16.mxu0 %v1838
    %2576 = vmatpush1.bf16.msra.mxu0 %v1837
    %2577 = vmatprep.subr.bf16.mxu0 %v1850
    %2578 = vmatpush1.bf16.msra.mxu0 %v1849
    %2579 = vmatprep.subr.bf16.mxu0 %v1862
    %2580 = vmatpush1.bf16.msra.mxu0 %v1861
    %2581 = vmatprep.subr.bf16.mxu0 %v1874
    %2582 = vmatpush1.bf16.msra.mxu0 %v1873
    %2583 = vmatprep.subr.bf16.mxu0 %v1886
    %2584 = vmatpush1.bf16.msra.mxu0 %v1885
    %2585 = vmatprep.mubr.bf16.mxu0 %v544
    %2586 = vmatmul.mubr.bf16.gmra.mrb[0].mxu0 %v537
    %v2587 = vpop.f32.mrb[0].mxu0
    %v2588 = vadd.f32 %v473, %v2587
    %v2589 = vpop.f32.mrb[0].mxu0
    %v2590 = vadd.f32 %v477, %v2589
    %v2591 = vpop.f32.mrb[0].mxu0
    %v2592 = vpop.f32.mrb[0].mxu0
    %2593 = vdwg.mxu0
    %2594 = vmatprep.subr.bf16.mxu0 %v1898
    %2595 = vmatpush1.bf16.msra.mxu0 %v1897
    %2596 = vmatprep.subr.bf16.mxu0 %v1910
    %2597 = vmatpush1.bf16.msra.mxu0 %v1909
    %2598 = vmatprep.subr.bf16.mxu0 %v1922
    %2599 = vmatpush1.bf16.msra.mxu0 %v1921
    %2600 = vmatprep.subr.bf16.mxu0 %v1934
    %2601 = vmatpush1.bf16.msra.mxu0 %v1933
    %2602 = vmatprep.subr.bf16.mxu0 %v1946
    %2603 = vmatpush1.bf16.msra.mxu0 %v1945
    %2604 = vmatprep.subr.bf16.mxu0 %v1958
    %2605 = vmatpush1.bf16.msra.mxu0 %v1957
    %2606 = vmatprep.subr.bf16.mxu0 %v1970
    %2607 = vmatpush1.bf16.msra.mxu0 %v1969
    %2608 = vmatprep.subr.bf16.mxu0 %v1982
    %2609 = vmatpush1.bf16.msra.mxu0 %v1981
    %2610 = vmatprep.subr.bf16.mxu0 %v1994
    %2611 = vmatpush1.bf16.msra.mxu0 %v1993
    %2612 = vmatprep.subr.bf16.mxu0 %v2006
    %2613 = vmatpush1.bf16.msra.mxu0 %v2005
    %2614 = vmatprep.subr.bf16.mxu0 %v2018
    %2615 = vmatpush1.bf16.msra.mxu0 %v2017
    %2616 = vmatprep.subr.bf16.mxu0 %v2030
    %2617 = vmatpush1.bf16.msra.mxu0 %v2029
    %2618 = vmatprep.subr.bf16.mxu0 %v2042
    %2619 = vmatpush1.bf16.msra.mxu0 %v2041
    %2620 = vmatprep.subr.bf16.mxu0 %v2054
    %2621 = vmatpush1.bf16.msra.mxu0 %v2053
    %2622 = vmatprep.subr.bf16.mxu0 %v2066
    %2623 = vmatpush1.bf16.msra.mxu0 %v2065
    %2624 = vmatprep.subr.bf16.mxu0 %v2078
    %2625 = vmatpush1.bf16.msra.mxu0 %v2077
    %2626 = vmatprep.mubr.bf16.mxu0 %v546
    %2627 = vmatmul.mubr.bf16.gmra.mrb[0].mxu0 %v545
    %v2628 = vpop.f32.mrb[0].mxu0
    %v2629 = vadd.f32 %v2588, %v2628
    %v2630 = vpop.f32.mrb[0].mxu0
    %v2631 = vadd.f32 %v2590, %v2630
    %v2632 = vpop.f32.mrb[0].mxu0
    %v2633 = vpop.f32.mrb[0].mxu0
    %2634 = vdwg.mxu0
    %2635 = vmatprep.subr.bf16.mxu0 %v1708
    %2636 = vmatpush1.bf16.msra.mxu0 %v1707
    %2637 = vmatprep.subr.bf16.mxu0 %v1720
    %2638 = vmatpush1.bf16.msra.mxu0 %v1719
    %2639 = vmatprep.subr.bf16.mxu0 %v1732
    %2640 = vmatpush1.bf16.msra.mxu0 %v1731
    %2641 = vmatprep.subr.bf16.mxu0 %v1744
    %2642 = vmatpush1.bf16.msra.mxu0 %v1743
    %2643 = vmatprep.subr.bf16.mxu0 %v1756
    %2644 = vmatpush1.bf16.msra.mxu0 %v1755
    %2645 = vmatprep.subr.bf16.mxu0 %v1768
    %2646 = vmatpush1.bf16.msra.mxu0 %v1767
    %2647 = vmatprep.subr.bf16.mxu0 %v1780
    %2648 = vmatpush1.bf16.msra.mxu0 %v1779
    %2649 = vmatprep.subr.bf16.mxu0 %v1792
    %2650 = vmatpush1.bf16.msra.mxu0 %v1791
    %2651 = vmatprep.subr.bf16.mxu0 %v1804
    %2652 = vmatpush1.bf16.msra.mxu0 %v1803
    %2653 = vmatprep.subr.bf16.mxu0 %v1816
    %2654 = vmatpush1.bf16.msra.mxu0 %v1815
    %2655 = vmatprep.subr.bf16.mxu0 %v1828
    %2656 = vmatpush1.bf16.msra.mxu0 %v1827
    %2657 = vmatprep.subr.bf16.mxu0 %v1840
    %2658 = vmatpush1.bf16.msra.mxu0 %v1839
    %2659 = vmatprep.subr.bf16.mxu0 %v1852
    %2660 = vmatpush1.bf16.msra.mxu0 %v1851
    %2661 = vmatprep.subr.bf16.mxu0 %v1864
    %2662 = vmatpush1.bf16.msra.mxu0 %v1863
    %2663 = vmatprep.subr.bf16.mxu0 %v1876
    %2664 = vmatpush1.bf16.msra.mxu0 %v1875
    %2665 = vmatprep.subr.bf16.mxu0 %v1888
    %2666 = vmatpush1.bf16.msra.mxu0 %v1887
    %2667 = vmatprep.mubr.bf16.mxu0 %v544
    %2668 = vmatmul.mubr.bf16.gmra.mrb[0].mxu0 %v537
    %v2669 = vpop.f32.mrb[0].mxu0
    %v2670 = vadd.f32 %v481, %v2669
    %v2671 = vpop.f32.mrb[0].mxu0
    %v2672 = vadd.f32 %v485, %v2671
    %v2673 = vpop.f32.mrb[0].mxu0
    %v2674 = vpop.f32.mrb[0].mxu0
    %2675 = vdwg.mxu0
    %2676 = vmatprep.subr.bf16.mxu0 %v1900
    %2677 = vmatpush1.bf16.msra.mxu0 %v1899
    %2678 = vmatprep.subr.bf16.mxu0 %v1912
    %2679 = vmatpush1.bf16.msra.mxu0 %v1911
    %2680 = vmatprep.subr.bf16.mxu0 %v1924
    %2681 = vmatpush1.bf16.msra.mxu0 %v1923
    %2682 = vmatprep.subr.bf16.mxu0 %v1936
    %2683 = vmatpush1.bf16.msra.mxu0 %v1935
    %2684 = vmatprep.subr.bf16.mxu0 %v1948
    %2685 = vmatpush1.bf16.msra.mxu0 %v1947
    %2686 = vmatprep.subr.bf16.mxu0 %v1960
    %2687 = vmatpush1.bf16.msra.mxu0 %v1959
    %2688 = vmatprep.subr.bf16.mxu0 %v1972
    %2689 = vmatpush1.bf16.msra.mxu0 %v1971
    %2690 = vmatprep.subr.bf16.mxu0 %v1984
    %2691 = vmatpush1.bf16.msra.mxu0 %v1983
    %2692 = vmatprep.subr.bf16.mxu0 %v1996
    %2693 = vmatpush1.bf16.msra.mxu0 %v1995
    %2694 = vmatprep.subr.bf16.mxu0 %v2008
    %2695 = vmatpush1.bf16.msra.mxu0 %v2007
    %2696 = vmatprep.subr.bf16.mxu0 %v2020
    %2697 = vmatpush1.bf16.msra.mxu0 %v2019
    %2698 = vmatprep.subr.bf16.mxu0 %v2032
    %2699 = vmatpush1.bf16.msra.mxu0 %v2031
    %2700 = vmatprep.subr.bf16.mxu0 %v2044
    %2701 = vmatpush1.bf16.msra.mxu0 %v2043
    %2702 = vmatprep.subr.bf16.mxu0 %v2056
    %2703 = vmatpush1.bf16.msra.mxu0 %v2055
    %2704 = vmatprep.subr.bf16.mxu0 %v2068
    %2705 = vmatpush1.bf16.msra.mxu0 %v2067
    %2706 = vmatprep.subr.bf16.mxu0 %v2080
    %2707 = vmatpush1.bf16.msra.mxu0 %v2079
    %2708 = vmatprep.mubr.bf16.mxu0 %v546
    %2709 = vmatmul.mubr.bf16.gmra.mrb[0].mxu0 %v545
    %v2710 = vpop.f32.mrb[0].mxu0
    %v2711 = vadd.f32 %v2670, %v2710
    %v2712 = vpop.f32.mrb[0].mxu0
    %v2713 = vadd.f32 %v2672, %v2712
    %v2714 = vpop.f32.mrb[0].mxu0
    %v2715 = vpop.f32.mrb[0].mxu0
    %2716 = vdwg.mxu0
    %2717 = vmatprep.subr.bf16.mxu0 %v1710
    %2718 = vmatpush1.bf16.msra.mxu0 %v1709
    %2719 = vmatprep.subr.bf16.mxu0 %v1722
    %2720 = vmatpush1.bf16.msra.mxu0 %v1721
    %2721 = vmatprep.subr.bf16.mxu0 %v1734
    %2722 = vmatpush1.bf16.msra.mxu0 %v1733
    %2723 = vmatprep.subr.bf16.mxu0 %v1746
    %2724 = vmatpush1.bf16.msra.mxu0 %v1745
    %2725 = vmatprep.subr.bf16.mxu0 %v1758
    %2726 = vmatpush1.bf16.msra.mxu0 %v1757
    %2727 = vmatprep.subr.bf16.mxu0 %v1770
    %2728 = vmatpush1.bf16.msra.mxu0 %v1769
    %2729 = vmatprep.subr.bf16.mxu0 %v1782
    %2730 = vmatpush1.bf16.msra.mxu0 %v1781
    %2731 = vmatprep.subr.bf16.mxu0 %v1794
    %2732 = vmatpush1.bf16.msra.mxu0 %v1793
    %2733 = vmatprep.subr.bf16.mxu0 %v1806
    %2734 = vmatpush1.bf16.msra.mxu0 %v1805
    %2735 = vmatprep.subr.bf16.mxu0 %v1818
    %2736 = vmatpush1.bf16.msra.mxu0 %v1817
    %2737 = vmatprep.subr.bf16.mxu0 %v1830
    %2738 = vmatpush1.bf16.msra.mxu0 %v1829
    %2739 = vmatprep.subr.bf16.mxu0 %v1842
    %2740 = vmatpush1.bf16.msra.mxu0 %v1841
    %2741 = vmatprep.subr.bf16.mxu0 %v1854
    %2742 = vmatpush1.bf16.msra.mxu0 %v1853
    %2743 = vmatprep.subr.bf16.mxu0 %v1866
    %2744 = vmatpush1.bf16.msra.mxu0 %v1865
    %2745 = vmatprep.subr.bf16.mxu0 %v1878
    %2746 = vmatpush1.bf16.msra.mxu0 %v1877
    %2747 = vmatprep.subr.bf16.mxu0 %v1890
    %2748 = vmatpush1.bf16.msra.mxu0 %v1889
    %2749 = vmatprep.mubr.bf16.mxu0 %v544
    %2750 = vmatmul.mubr.bf16.gmra.mrb[0].mxu0 %v537
    %v2751 = vpop.f32.mrb[0].mxu0
    %v2752 = vadd.f32 %v489, %v2751
    %v2753 = vpop.f32.mrb[0].mxu0
    %v2754 = vadd.f32 %v493, %v2753
    %v2755 = vpop.f32.mrb[0].mxu0
    %v2756 = vpop.f32.mrb[0].mxu0
    %2757 = vdwg.mxu0
    %2758 = vmatprep.subr.bf16.mxu0 %v1902
    %2759 = vmatpush1.bf16.msra.mxu0 %v1901
    %2760 = vmatprep.subr.bf16.mxu0 %v1914
    %2761 = vmatpush1.bf16.msra.mxu0 %v1913
    %2762 = vmatprep.subr.bf16.mxu0 %v1926
    %2763 = vmatpush1.bf16.msra.mxu0 %v1925
    %2764 = vmatprep.subr.bf16.mxu0 %v1938
    %2765 = vmatpush1.bf16.msra.mxu0 %v1937
    %2766 = vmatprep.subr.bf16.mxu0 %v1950
    %2767 = vmatpush1.bf16.msra.mxu0 %v1949
    %2768 = vmatprep.subr.bf16.mxu0 %v1962
    %2769 = vmatpush1.bf16.msra.mxu0 %v1961
    %2770 = vmatprep.subr.bf16.mxu0 %v1974
    %2771 = vmatpush1.bf16.msra.mxu0 %v1973
    %2772 = vmatprep.subr.bf16.mxu0 %v1986
    %2773 = vmatpush1.bf16.msra.mxu0 %v1985
    %2774 = vmatprep.subr.bf16.mxu0 %v1998
    %2775 = vmatpush1.bf16.msra.mxu0 %v1997
    %2776 = vmatprep.subr.bf16.mxu0 %v2010
    %2777 = vmatpush1.bf16.msra.mxu0 %v2009
    %2778 = vmatprep.subr.bf16.mxu0 %v2022
    %2779 = vmatpush1.bf16.msra.mxu0 %v2021
    %2780 = vmatprep.subr.bf16.mxu0 %v2034
    %2781 = vmatpush1.bf16.msra.mxu0 %v2033
    %2782 = vmatprep.subr.bf16.mxu0 %v2046
    %2783 = vmatpush1.bf16.msra.mxu0 %v2045
    %2784 = vmatprep.subr.bf16.mxu0 %v2058
    %2785 = vmatpush1.bf16.msra.mxu0 %v2057
    %2786 = vmatprep.subr.bf16.mxu0 %v2070
    %2787 = vmatpush1.bf16.msra.mxu0 %v2069
    %2788 = vmatprep.subr.bf16.mxu0 %v2082
    %2789 = vmatpush1.bf16.msra.mxu0 %v2081
    %2790 = vmatprep.mubr.bf16.mxu0 %v546
    %2791 = vmatmul.mubr.bf16.gmra.mrb[0].mxu0 %v545
    %v2792 = vpop.f32.mrb[0].mxu0
    %v2793 = vadd.f32 %v2752, %v2792
    %v2794 = vpop.f32.mrb[0].mxu0
    %v2795 = vadd.f32 %v2754, %v2794
    %v2796 = vpop.f32.mrb[0].mxu0
    %v2797 = vpop.f32.mrb[0].mxu0
    %2798 = vdwg.mxu0
    %2799 = vmatprep.subr.bf16.mxu0 %v1712
    %2800 = vmatpush1.bf16.msra.mxu0 %v1711
    %2801 = vmatprep.subr.bf16.mxu0 %v1724
    %2802 = vmatpush1.bf16.msra.mxu0 %v1723
    %2803 = vmatprep.subr.bf16.mxu0 %v1736
    %2804 = vmatpush1.bf16.msra.mxu0 %v1735
    %2805 = vmatprep.subr.bf16.mxu0 %v1748
    %2806 = vmatpush1.bf16.msra.mxu0 %v1747
    %2807 = vmatprep.subr.bf16.mxu0 %v1760
    %2808 = vmatpush1.bf16.msra.mxu0 %v1759
    %2809 = vmatprep.subr.bf16.mxu0 %v1772
    %2810 = vmatpush1.bf16.msra.mxu0 %v1771
    %2811 = vmatprep.subr.bf16.mxu0 %v1784
    %2812 = vmatpush1.bf16.msra.mxu0 %v1783
    %2813 = vmatprep.subr.bf16.mxu0 %v1796
    %2814 = vmatpush1.bf16.msra.mxu0 %v1795
    %2815 = vmatprep.subr.bf16.mxu0 %v1808
    %2816 = vmatpush1.bf16.msra.mxu0 %v1807
    %2817 = vmatprep.subr.bf16.mxu0 %v1820
    %2818 = vmatpush1.bf16.msra.mxu0 %v1819
    %2819 = vmatprep.subr.bf16.mxu0 %v1832
    %2820 = vmatpush1.bf16.msra.mxu0 %v1831
    %2821 = vmatprep.subr.bf16.mxu0 %v1844
    %2822 = vmatpush1.bf16.msra.mxu0 %v1843
    %2823 = vmatprep.subr.bf16.mxu0 %v1856
    %2824 = vmatpush1.bf16.msra.mxu0 %v1855
    %2825 = vmatprep.subr.bf16.mxu0 %v1868
    %2826 = vmatpush1.bf16.msra.mxu0 %v1867
    %2827 = vmatprep.subr.bf16.mxu0 %v1880
    %2828 = vmatpush1.bf16.msra.mxu0 %v1879
    %2829 = vmatprep.subr.bf16.mxu0 %v1892
    %2830 = vmatpush1.bf16.msra.mxu0 %v1891
    %2831 = vmatprep.mubr.bf16.mxu0 %v544
    %2832 = vmatmul.mubr.bf16.gmra.mrb[0].mxu0 %v537
    %v2833 = vpop.f32.mrb[0].mxu0
    %v2834 = vadd.f32 %v497, %v2833
    %v2835 = vpop.f32.mrb[0].mxu0
    %v2836 = vadd.f32 %v501, %v2835
    %v2837 = vpop.f32.mrb[0].mxu0
    %v2838 = vpop.f32.mrb[0].mxu0
    %2839 = vdwg.mxu0
    %2840 = vmatprep.subr.bf16.mxu0 %v1904
    %2841 = vmatpush1.bf16.msra.mxu0 %v1903
    %2842 = vmatprep.subr.bf16.mxu0 %v1916
    %2843 = vmatpush1.bf16.msra.mxu0 %v1915
    %2844 = vmatprep.subr.bf16.mxu0 %v1928
    %2845 = vmatpush1.bf16.msra.mxu0 %v1927
    %2846 = vmatprep.subr.bf16.mxu0 %v1940
    %2847 = vmatpush1.bf16.msra.mxu0 %v1939
    %2848 = vmatprep.subr.bf16.mxu0 %v1952
    %2849 = vmatpush1.bf16.msra.mxu0 %v1951
    %2850 = vmatprep.subr.bf16.mxu0 %v1964
    %2851 = vmatpush1.bf16.msra.mxu0 %v1963
    %2852 = vmatprep.subr.bf16.mxu0 %v1976
    %2853 = vmatpush1.bf16.msra.mxu0 %v1975
    %2854 = vmatprep.subr.bf16.mxu0 %v1988
    %2855 = vmatpush1.bf16.msra.mxu0 %v1987
    %2856 = vmatprep.subr.bf16.mxu0 %v2000
    %2857 = vmatpush1.bf16.msra.mxu0 %v1999
    %2858 = vmatprep.subr.bf16.mxu0 %v2012
    %2859 = vmatpush1.bf16.msra.mxu0 %v2011
    %2860 = vmatprep.subr.bf16.mxu0 %v2024
    %2861 = vmatpush1.bf16.msra.mxu0 %v2023
    %2862 = vmatprep.subr.bf16.mxu0 %v2036
    %2863 = vmatpush1.bf16.msra.mxu0 %v2035
    %2864 = vmatprep.subr.bf16.mxu0 %v2048
    %2865 = vmatpush1.bf16.msra.mxu0 %v2047
    %2866 = vmatprep.subr.bf16.mxu0 %v2060
    %2867 = vmatpush1.bf16.msra.mxu0 %v2059
    %2868 = vmatprep.subr.bf16.mxu0 %v2072
    %2869 = vmatpush1.bf16.msra.mxu0 %v2071
    %2870 = vmatprep.subr.bf16.mxu0 %v2084
    %2871 = vmatpush1.bf16.msra.mxu0 %v2083
    %2872 = vmatprep.mubr.bf16.mxu0 %v546
    %2873 = vmatmul.mubr.bf16.gmra.mrb[0].mxu0 %v545
    %v2874 = vpop.f32.mrb[0].mxu0
    %v2875 = vadd.f32 %v2834, %v2874
    %v2876 = vpop.f32.mrb[0].mxu0
    %v2877 = vadd.f32 %v2836, %v2876
    %v2878 = vpop.f32.mrb[0].mxu0
    %v2879 = vpop.f32.mrb[0].mxu0
    %2880 = vdwg.mxu0
    %2881 = vmatprep.subr.bf16.mxu0 %v1714
    %2882 = vmatpush1.bf16.msra.mxu0 %v1713
    %2883 = vmatprep.subr.bf16.mxu0 %v1726
    %2884 = vmatpush1.bf16.msra.mxu0 %v1725
    %2885 = vmatprep.subr.bf16.mxu0 %v1738
    %2886 = vmatpush1.bf16.msra.mxu0 %v1737
    %2887 = vmatprep.subr.bf16.mxu0 %v1750
    %2888 = vmatpush1.bf16.msra.mxu0 %v1749
    %2889 = vmatprep.subr.bf16.mxu0 %v1762
    %2890 = vmatpush1.bf16.msra.mxu0 %v1761
    %2891 = vmatprep.subr.bf16.mxu0 %v1774
    %2892 = vmatpush1.bf16.msra.mxu0 %v1773
    %2893 = vmatprep.subr.bf16.mxu0 %v1786
    %2894 = vmatpush1.bf16.msra.mxu0 %v1785
    %2895 = vmatprep.subr.bf16.mxu0 %v1798
    %2896 = vmatpush1.bf16.msra.mxu0 %v1797
    %2897 = vmatprep.subr.bf16.mxu0 %v1810
    %2898 = vmatpush1.bf16.msra.mxu0 %v1809
    %2899 = vmatprep.subr.bf16.mxu0 %v1822
    %2900 = vmatpush1.bf16.msra.mxu0 %v1821
    %2901 = vmatprep.subr.bf16.mxu0 %v1834
    %2902 = vmatpush1.bf16.msra.mxu0 %v1833
    %2903 = vmatprep.subr.bf16.mxu0 %v1846
    %2904 = vmatpush1.bf16.msra.mxu0 %v1845
    %2905 = vmatprep.subr.bf16.mxu0 %v1858
    %2906 = vmatpush1.bf16.msra.mxu0 %v1857
    %2907 = vmatprep.subr.bf16.mxu0 %v1870
    %2908 = vmatpush1.bf16.msra.mxu0 %v1869
    %2909 = vmatprep.subr.bf16.mxu0 %v1882
    %2910 = vmatpush1.bf16.msra.mxu0 %v1881
    %2911 = vmatprep.subr.bf16.mxu0 %v1894
    %2912 = vmatpush1.bf16.msra.mxu0 %v1893
    %2913 = vmatprep.mubr.bf16.mxu0 %v544
    %2914 = vmatmul.mubr.bf16.gmra.mrb[0].mxu0 %v537
    %v2915 = vpop.f32.mrb[0].mxu0
    %v2916 = vadd.f32 %v505, %v2915
    %v2917 = vpop.f32.mrb[0].mxu0
    %v2918 = vadd.f32 %v509, %v2917
    %v2919 = vpop.f32.mrb[0].mxu0
    %v2920 = vpop.f32.mrb[0].mxu0
    %2921 = vdwg.mxu0
    %2922 = vmatprep.subr.bf16.mxu0 %v1906
    %2923 = vmatpush1.bf16.msra.mxu0 %v1905
    %2924 = vmatprep.subr.bf16.mxu0 %v1918
    %2925 = vmatpush1.bf16.msra.mxu0 %v1917
    %2926 = vmatprep.subr.bf16.mxu0 %v1930
    %2927 = vmatpush1.bf16.msra.mxu0 %v1929
    %2928 = vmatprep.subr.bf16.mxu0 %v1942
    %2929 = vmatpush1.bf16.msra.mxu0 %v1941
    %2930 = vmatprep.subr.bf16.mxu0 %v1954
    %2931 = vmatpush1.bf16.msra.mxu0 %v1953
    %2932 = vmatprep.subr.bf16.mxu0 %v1966
    %2933 = vmatpush1.bf16.msra.mxu0 %v1965
    %2934 = vmatprep.subr.bf16.mxu0 %v1978
    %2935 = vmatpush1.bf16.msra.mxu0 %v1977
    %2936 = vmatprep.subr.bf16.mxu0 %v1990
    %2937 = vmatpush1.bf16.msra.mxu0 %v1989
    %2938 = vmatprep.subr.bf16.mxu0 %v2002
    %2939 = vmatpush1.bf16.msra.mxu0 %v2001
    %2940 = vmatprep.subr.bf16.mxu0 %v2014
    %2941 = vmatpush1.bf16.msra.mxu0 %v2013
    %2942 = vmatprep.subr.bf16.mxu0 %v2026
    %2943 = vmatpush1.bf16.msra.mxu0 %v2025
    %2944 = vmatprep.subr.bf16.mxu0 %v2038
    %2945 = vmatpush1.bf16.msra.mxu0 %v2037
    %2946 = vmatprep.subr.bf16.mxu0 %v2050
    %2947 = vmatpush1.bf16.msra.mxu0 %v2049
    %2948 = vmatprep.subr.bf16.mxu0 %v2062
    %2949 = vmatpush1.bf16.msra.mxu0 %v2061
    %2950 = vmatprep.subr.bf16.mxu0 %v2074
    %2951 = vmatpush1.bf16.msra.mxu0 %v2073
    %2952 = vmatprep.subr.bf16.mxu0 %v2086
    %2953 = vmatpush1.bf16.msra.mxu0 %v2085
    %2954 = vmatprep.mubr.bf16.mxu0 %v546
    %2955 = vmatmul.mubr.bf16.gmra.mrb[0].mxu0 %v545
    %v2956 = vpop.f32.mrb[0].mxu0
    %v2957 = vadd.f32 %v2916, %v2956
    %v2958 = vpop.f32.mrb[0].mxu0
    %v2959 = vadd.f32 %v2918, %v2958
    %v2960 = vpop.f32.mrb[0].mxu0
    %v2961 = vpop.f32.mrb[0].mxu0
    %2962 = vdwg.mxu0
    %v2963 = vmax.f32 %v2547, 0.0
    %v2964 = vmax.f32 %v2549, 0.0
    %v2965 = vmax.f32 %v2629, 0.0
    %v2966 = vmax.f32 %v2631, 0.0
    %v2967 = vmax.f32 %v2711, 0.0
    %v2968 = vmax.f32 %v2713, 0.0
    %v2969 = vmax.f32 %v2793, 0.0
    %v2970 = vmax.f32 %v2795, 0.0
    %v2971 = vmax.f32 %v2875, 0.0
    %v2972 = vmax.f32 %v2877, 0.0
    %v2973 = vmax.f32 %v2957, 0.0
    %v2974 = vmax.f32 %v2959, 0.0
    %v2975 = vpack.c.bf16 %v2963, %v2963
    %v2976 = vpack.c.bf16 %v2964, %v2964
    %v2977 = vpack.c.bf16 %v2965, %v2965
    %v2978 = vpack.c.bf16 %v2966, %v2966
    %v2979 = vpack.c.bf16 %v2967, %v2967
    %v2980 = vpack.c.bf16 %v2968, %v2968
    %v2981 = vpack.c.bf16 %v2969, %v2969
    %v2982 = vpack.c.bf16 %v2970, %v2970
    %v2983 = vpack.c.bf16 %v2971, %v2971
    %v2984 = vpack.c.bf16 %v2972, %v2972
    %v2985 = vpack.c.bf16 %v2973, %v2973
    %v2986 = vpack.c.bf16 %v2974, %v2974
    %v2987 = vld [vmem:[#allocation7] sm:$0xf]
    %v2988 = vld [vmem:[#allocation7 + $0x4] sm:$0xf]
    %v2989 = vld [vmem:[#allocation7 + $0x8] sm:$0xf]
    %v2990 = vld [vmem:[#allocation7 + $0xc] sm:$0xf]
    %v2991 = vld [vmem:[#allocation7 + $0x10] sm:$0xf]
    %v2992 = vld [vmem:[#allocation7 + $0x14] sm:$0xf]
    %v2993 = vld [vmem:[#allocation7 + $0x18] sm:$0xf]
    %v2994 = vld [vmem:[#allocation7 + $0x1c] sm:$0xf]
    %v2995 = vld [vmem:[#allocation7 + $0x20] sm:$0xf]
    %v2996 = vld [vmem:[#allocation7 + $0x24] sm:$0xf]
    %v2997 = vld [vmem:[#allocation7 + $0x28] sm:$0xf]
    %v2998 = vld [vmem:[#allocation7 + $0x2c] sm:$0xf]
    %v2999 = vld [vmem:[#allocation7 + $0x30] sm:$0xf]
    %v3000 = vld [vmem:[#allocation7 + $0x34] sm:$0xf]
    %v3001 = vld [vmem:[#allocation7 + $0x38] sm:$0xf]
    %v3002 = vld [vmem:[#allocation7 + $0x3c] sm:$0xf]
    %v3003 = vld [vmem:[#allocation7 + $0x40] sm:$0xf]
    %v3004 = vld [vmem:[#allocation7 + $0x44] sm:$0xf]
    %v3005 = vld [vmem:[#allocation7 + $0x48] sm:$0xf]
    %v3006 = vld [vmem:[#allocation7 + $0x4c] sm:$0xf]
    %v3007 = vld [vmem:[#allocation7 + $0x50] sm:$0xf]
    %v3008 = vld [vmem:[#allocation7 + $0x54] sm:$0xf]
    %v3009 = vld [vmem:[#allocation7 + $0x58] sm:$0xf]
    %v3010 = vld [vmem:[#allocation7 + $0x5c] sm:$0xf]
    %v3011 = vld [vmem:[#allocation7 + $0x60] sm:$0xf]
    %v3012 = vld [vmem:[#allocation7 + $0x64] sm:$0xf]
    %v3013 = vld [vmem:[#allocation7 + $0x68] sm:$0xf]
    %v3014 = vld [vmem:[#allocation7 + $0x6c] sm:$0xf]
    %v3015 = vld [vmem:[#allocation7 + $0x70] sm:$0xf]
    %v3016 = vld [vmem:[#allocation7 + $0x74] sm:$0xf]
    %v3017 = vld [vmem:[#allocation7 + $0x78] sm:$0xf]
    %v3018 = vld [vmem:[#allocation7 + $0x7c] sm:$0xf]
    %v3019 = vld [vmem:[#allocation7 + $0x80] sm:$0xf]
    %v3020 = vld [vmem:[#allocation7 + $0x84] sm:$0xf]
    %v3021 = vld [vmem:[#allocation7 + $0x88] sm:$0xf]
    %v3022 = vld [vmem:[#allocation7 + $0x8c] sm:$0xf]
    %v3023 = vld [vmem:[#allocation7 + $0x90] sm:$0xf]
    %v3024 = vld [vmem:[#allocation7 + $0x94] sm:$0xf]
    %v3025 = vld [vmem:[#allocation7 + $0x98] sm:$0xf]
    %v3026 = vld [vmem:[#allocation7 + $0x9c] sm:$0xf]
    %v3027 = vld [vmem:[#allocation7 + $0xa0] sm:$0xf]
    %v3028 = vld [vmem:[#allocation7 + $0xa4] sm:$0xf]
    %v3029 = vld [vmem:[#allocation7 + $0xa8] sm:$0xf]
    %v3030 = vld [vmem:[#allocation7 + $0xac] sm:$0xf]
    %v3031 = vld [vmem:[#allocation7 + $0xb0] sm:$0xf]
    %v3032 = vld [vmem:[#allocation7 + $0xb4] sm:$0xf]
    %v3033 = vld [vmem:[#allocation7 + $0xb8] sm:$0xf]
    %v3034 = vld [vmem:[#allocation7 + $0xbc] sm:$0xf]
    %v3035 = vld [vmem:[#allocation7 + $0xc0] sm:$0xf]
    %v3036 = vld [vmem:[#allocation7 + $0xc4] sm:$0xf]
    %v3037 = vld [vmem:[#allocation7 + $0xc8] sm:$0xf]
    %v3038 = vld [vmem:[#allocation7 + $0xcc] sm:$0xf]
    %v3039 = vld [vmem:[#allocation7 + $0xd0] sm:$0xf]
    %v3040 = vld [vmem:[#allocation7 + $0xd4] sm:$0xf]
    %v3041 = vld [vmem:[#allocation7 + $0xd8] sm:$0xf]
    %v3042 = vld [vmem:[#allocation7 + $0xdc] sm:$0xf]
    %v3043 = vld [vmem:[#allocation7 + $0xe0] sm:$0xf]
    %v3044 = vld [vmem:[#allocation7 + $0xe4] sm:$0xf]
    %v3045 = vld [vmem:[#allocation7 + $0xe8] sm:$0xf]
    %v3046 = vld [vmem:[#allocation7 + $0xec] sm:$0xf]
    %v3047 = vld [vmem:[#allocation7 + $0xf0] sm:$0xf]
    %v3048 = vld [vmem:[#allocation7 + $0xf4] sm:$0xf]
    %v3049 = vld [vmem:[#allocation7 + $0xf8] sm:$0xf]
    %v3050 = vld [vmem:[#allocation7 + $0xfc] sm:$0xf]
    %v3051 = vld [vmem:[#allocation7 + $0x100] sm:$0xf]
    %v3052 = vld [vmem:[#allocation7 + $0x104] sm:$0xf]
    %v3053 = vld [vmem:[#allocation7 + $0x108] sm:$0xf]
    %v3054 = vld [vmem:[#allocation7 + $0x10c] sm:$0xf]
    %v3055 = vld [vmem:[#allocation7 + $0x110] sm:$0xf]
    %v3056 = vld [vmem:[#allocation7 + $0x114] sm:$0xf]
    %v3057 = vld [vmem:[#allocation7 + $0x118] sm:$0xf]
    %v3058 = vld [vmem:[#allocation7 + $0x11c] sm:$0xf]
    %v3059 = vld [vmem:[#allocation7 + $0x120] sm:$0xf]
    %v3060 = vld [vmem:[#allocation7 + $0x124] sm:$0xf]
    %v3061 = vld [vmem:[#allocation7 + $0x128] sm:$0xf]
    %v3062 = vld [vmem:[#allocation7 + $0x12c] sm:$0xf]
    %v3063 = vld [vmem:[#allocation7 + $0x130] sm:$0xf]
    %v3064 = vld [vmem:[#allocation7 + $0x134] sm:$0xf]
    %v3065 = vld [vmem:[#allocation7 + $0x138] sm:$0xf]
    %v3066 = vld [vmem:[#allocation7 + $0x13c] sm:$0xf]
    %v3067 = vld [vmem:[#allocation7 + $0x140] sm:$0xf]
    %v3068 = vld [vmem:[#allocation7 + $0x144] sm:$0xf]
    %v3069 = vld [vmem:[#allocation7 + $0x148] sm:$0xf]
    %v3070 = vld [vmem:[#allocation7 + $0x14c] sm:$0xf]
    %v3071 = vld [vmem:[#allocation7 + $0x150] sm:$0xf]
    %v3072 = vld [vmem:[#allocation7 + $0x154] sm:$0xf]
    %v3073 = vld [vmem:[#allocation7 + $0x158] sm:$0xf]
    %v3074 = vld [vmem:[#allocation7 + $0x15c] sm:$0xf]
    %v3075 = vld [vmem:[#allocation7 + $0x160] sm:$0xf]
    %v3076 = vld [vmem:[#allocation7 + $0x164] sm:$0xf]
    %v3077 = vld [vmem:[#allocation7 + $0x168] sm:$0xf]
    %v3078 = vld [vmem:[#allocation7 + $0x16c] sm:$0xf]
    %v3079 = vld [vmem:[#allocation7 + $0x170] sm:$0xf]
    %v3080 = vld [vmem:[#allocation7 + $0x174] sm:$0xf]
    %v3081 = vld [vmem:[#allocation7 + $0x178] sm:$0xf]
    %v3082 = vld [vmem:[#allocation7 + $0x17c] sm:$0xf]
    %v3083 = vld [vmem:[#allocation7 + $0x180] sm:$0xf]
    %v3084 = vld [vmem:[#allocation7 + $0x184] sm:$0xf]
    %v3085 = vld [vmem:[#allocation7 + $0x188] sm:$0xf]
    %v3086 = vld [vmem:[#allocation7 + $0x18c] sm:$0xf]
    %v3087 = vld [vmem:[#allocation7 + $0x190] sm:$0xf]
    %v3088 = vld [vmem:[#allocation7 + $0x194] sm:$0xf]
    %v3089 = vld [vmem:[#allocation7 + $0x198] sm:$0xf]
    %v3090 = vld [vmem:[#allocation7 + $0x19c] sm:$0xf]
    %v3091 = vld [vmem:[#allocation7 + $0x1a0] sm:$0xf]
    %v3092 = vld [vmem:[#allocation7 + $0x1a4] sm:$0xf]
    %v3093 = vld [vmem:[#allocation7 + $0x1a8] sm:$0xf]
    %v3094 = vld [vmem:[#allocation7 + $0x1ac] sm:$0xf]
    %v3095 = vld [vmem:[#allocation7 + $0x1b0] sm:$0xf]
    %v3096 = vld [vmem:[#allocation7 + $0x1b4] sm:$0xf]
    %v3097 = vld [vmem:[#allocation7 + $0x1b8] sm:$0xf]
    %v3098 = vld [vmem:[#allocation7 + $0x1bc] sm:$0xf]
    %v3099 = vld [vmem:[#allocation7 + $0x1c0] sm:$0xf]
    %v3100 = vld [vmem:[#allocation7 + $0x1c4] sm:$0xf]
    %v3101 = vld [vmem:[#allocation7 + $0x1c8] sm:$0xf]
    %v3102 = vld [vmem:[#allocation7 + $0x1cc] sm:$0xf]
    %v3103 = vld [vmem:[#allocation7 + $0x1d0] sm:$0xf]
    %v3104 = vld [vmem:[#allocation7 + $0x1d4] sm:$0xf]
    %v3105 = vld [vmem:[#allocation7 + $0x1d8] sm:$0xf]
    %v3106 = vld [vmem:[#allocation7 + $0x1dc] sm:$0xf]
    %v3107 = vld [vmem:[#allocation7 + $0x1e0] sm:$0xf]
    %v3108 = vld [vmem:[#allocation7 + $0x1e4] sm:$0xf]
    %v3109 = vld [vmem:[#allocation7 + $0x1e8] sm:$0xf]
    %v3110 = vld [vmem:[#allocation7 + $0x1ec] sm:$0xf]
    %v3111 = vld [vmem:[#allocation7 + $0x1f0] sm:$0xf]
    %v3112 = vld [vmem:[#allocation7 + $0x1f4] sm:$0xf]
    %v3113 = vld [vmem:[#allocation7 + $0x1f8] sm:$0xf]
    %v3114 = vld [vmem:[#allocation7 + $0x1fc] sm:$0xf]
    %v3115 = vld [vmem:[#allocation7 + $0x200] sm:$0xf]
    %v3116 = vld [vmem:[#allocation7 + $0x204] sm:$0xf]
    %v3117 = vld [vmem:[#allocation7 + $0x208] sm:$0xf]
    %v3118 = vld [vmem:[#allocation7 + $0x20c] sm:$0xf]
    %v3119 = vld [vmem:[#allocation7 + $0x210] sm:$0xf]
    %v3120 = vld [vmem:[#allocation7 + $0x214] sm:$0xf]
    %v3121 = vld [vmem:[#allocation7 + $0x218] sm:$0xf]
    %v3122 = vld [vmem:[#allocation7 + $0x21c] sm:$0xf]
    %v3123 = vld [vmem:[#allocation7 + $0x220] sm:$0xf]
    %v3124 = vld [vmem:[#allocation7 + $0x224] sm:$0xf]
    %v3125 = vld [vmem:[#allocation7 + $0x228] sm:$0xf]
    %v3126 = vld [vmem:[#allocation7 + $0x22c] sm:$0xf]
    %v3127 = vld [vmem:[#allocation7 + $0x230] sm:$0xf]
    %v3128 = vld [vmem:[#allocation7 + $0x234] sm:$0xf]
    %v3129 = vld [vmem:[#allocation7 + $0x238] sm:$0xf]
    %v3130 = vld [vmem:[#allocation7 + $0x23c] sm:$0xf]
    %v3131 = vld [vmem:[#allocation7 + $0x240] sm:$0xf]
    %v3132 = vld [vmem:[#allocation7 + $0x244] sm:$0xf]
    %v3133 = vld [vmem:[#allocation7 + $0x248] sm:$0xf]
    %v3134 = vld [vmem:[#allocation7 + $0x24c] sm:$0xf]
    %v3135 = vld [vmem:[#allocation7 + $0x250] sm:$0xf]
    %v3136 = vld [vmem:[#allocation7 + $0x254] sm:$0xf]
    %v3137 = vld [vmem:[#allocation7 + $0x258] sm:$0xf]
    %v3138 = vld [vmem:[#allocation7 + $0x25c] sm:$0xf]
    %v3139 = vld [vmem:[#allocation7 + $0x260] sm:$0xf]
    %v3140 = vld [vmem:[#allocation7 + $0x264] sm:$0xf]
    %v3141 = vld [vmem:[#allocation7 + $0x268] sm:$0xf]
    %v3142 = vld [vmem:[#allocation7 + $0x26c] sm:$0xf]
    %v3143 = vld [vmem:[#allocation7 + $0x270] sm:$0xf]
    %v3144 = vld [vmem:[#allocation7 + $0x274] sm:$0xf]
    %v3145 = vld [vmem:[#allocation7 + $0x278] sm:$0xf]
    %v3146 = vld [vmem:[#allocation7 + $0x27c] sm:$0xf]
    %v3147 = vld [vmem:[#allocation7 + $0x280] sm:$0xf]
    %v3148 = vld [vmem:[#allocation7 + $0x284] sm:$0xf]
    %v3149 = vld [vmem:[#allocation7 + $0x288] sm:$0xf]
    %v3150 = vld [vmem:[#allocation7 + $0x28c] sm:$0xf]
    %v3151 = vld [vmem:[#allocation7 + $0x290] sm:$0xf]
    %v3152 = vld [vmem:[#allocation7 + $0x294] sm:$0xf]
    %v3153 = vld [vmem:[#allocation7 + $0x298] sm:$0xf]
    %v3154 = vld [vmem:[#allocation7 + $0x29c] sm:$0xf]
    %v3155 = vld [vmem:[#allocation7 + $0x2a0] sm:$0xf]
    %v3156 = vld [vmem:[#allocation7 + $0x2a4] sm:$0xf]
    %v3157 = vld [vmem:[#allocation7 + $0x2a8] sm:$0xf]
    %v3158 = vld [vmem:[#allocation7 + $0x2ac] sm:$0xf]
    %v3159 = vld [vmem:[#allocation7 + $0x2b0] sm:$0xf]
    %v3160 = vld [vmem:[#allocation7 + $0x2b4] sm:$0xf]
    %v3161 = vld [vmem:[#allocation7 + $0x2b8] sm:$0xf]
    %v3162 = vld [vmem:[#allocation7 + $0x2bc] sm:$0xf]
    %v3163 = vld [vmem:[#allocation7 + $0x2c0] sm:$0xf]
    %v3164 = vld [vmem:[#allocation7 + $0x2c4] sm:$0xf]
    %v3165 = vld [vmem:[#allocation7 + $0x2c8] sm:$0xf]
    %v3166 = vld [vmem:[#allocation7 + $0x2cc] sm:$0xf]
    %v3167 = vld [vmem:[#allocation7 + $0x2d0] sm:$0xf]
    %v3168 = vld [vmem:[#allocation7 + $0x2d4] sm:$0xf]
    %v3169 = vld [vmem:[#allocation7 + $0x2d8] sm:$0xf]
    %v3170 = vld [vmem:[#allocation7 + $0x2dc] sm:$0xf]
    %v3171 = vld [vmem:[#allocation7 + $0x2e0] sm:$0xf]
    %v3172 = vld [vmem:[#allocation7 + $0x2e4] sm:$0xf]
    %v3173 = vld [vmem:[#allocation7 + $0x2e8] sm:$0xf]
    %v3174 = vld [vmem:[#allocation7 + $0x2ec] sm:$0xf]
    %v3175 = vld [vmem:[#allocation7 + $0x2f0] sm:$0xf]
    %v3176 = vld [vmem:[#allocation7 + $0x2f4] sm:$0xf]
    %v3177 = vld [vmem:[#allocation7 + $0x2f8] sm:$0xf]
    %v3178 = vld [vmem:[#allocation7 + $0x2fc] sm:$0xf]
    %v3179 = vld [vmem:[#allocation8] sm:$0x1]
    %v3181 = vlaneseq
    %v3182 = vshrl.u32 %v3181, 7
    %v3183 = vsub.s32 0, %v3182
    %v3184 = vrot.slane %v3179, %v3183
    %v3378 = vunpack.c.l.b16 %v2987
    %v3379 = vunpack.c.l.b16 %v2988
    %v3380 = vunpack.c.l.b16 %v2989
    %v3381 = vunpack.c.l.b16 %v2990
    %v3382 = vunpack.c.l.b16 %v2991
    %v3383 = vunpack.c.l.b16 %v2992
    %v3384 = vunpack.c.l.b16 %v2993
    %v3385 = vunpack.c.l.b16 %v2994
    %v3386 = vunpack.c.l.b16 %v2995
    %v3387 = vunpack.c.l.b16 %v2996
    %v3388 = vunpack.c.l.b16 %v2997
    %v3389 = vunpack.c.l.b16 %v2998
    %v3390 = vunpack.c.l.b16 %v2999
    %v3391 = vunpack.c.l.b16 %v3000
    %v3392 = vunpack.c.l.b16 %v3001
    %v3393 = vunpack.c.l.b16 %v3002
    %v3394 = vunpack.c.l.b16 %v3003
    %v3395 = vunpack.c.l.b16 %v3004
    %v3396 = vunpack.c.l.b16 %v3005
    %v3397 = vunpack.c.l.b16 %v3006
    %v3398 = vunpack.c.l.b16 %v3007
    %v3399 = vunpack.c.l.b16 %v3008
    %v3400 = vunpack.c.l.b16 %v3009
    %v3401 = vunpack.c.l.b16 %v3010
    %v3402 = vunpack.c.l.b16 %v3011
    %v3403 = vunpack.c.l.b16 %v3012
    %v3404 = vunpack.c.l.b16 %v3013
    %v3405 = vunpack.c.l.b16 %v3014
    %v3406 = vunpack.c.l.b16 %v3015
    %v3407 = vunpack.c.l.b16 %v3016
    %v3408 = vunpack.c.l.b16 %v3017
    %v3409 = vunpack.c.l.b16 %v3018
    %v3410 = vunpack.c.l.b16 %v3019
    %v3411 = vunpack.c.l.b16 %v3020
    %v3412 = vunpack.c.l.b16 %v3021
    %v3413 = vunpack.c.l.b16 %v3022
    %v3414 = vunpack.c.l.b16 %v3023
    %v3415 = vunpack.c.l.b16 %v3024
    %v3416 = vunpack.c.l.b16 %v3025
    %v3417 = vunpack.c.l.b16 %v3026
    %v3418 = vunpack.c.l.b16 %v3027
    %v3419 = vunpack.c.l.b16 %v3028
    %v3420 = vunpack.c.l.b16 %v3029
    %v3421 = vunpack.c.l.b16 %v3030
    %v3422 = vunpack.c.l.b16 %v3031
    %v3423 = vunpack.c.l.b16 %v3032
    %v3424 = vunpack.c.l.b16 %v3033
    %v3425 = vunpack.c.l.b16 %v3034
    %v3426 = vunpack.c.l.b16 %v3035
    %v3427 = vunpack.c.l.b16 %v3036
    %v3428 = vunpack.c.l.b16 %v3037
    %v3429 = vunpack.c.l.b16 %v3038
    %v3430 = vunpack.c.l.b16 %v3039
    %v3431 = vunpack.c.l.b16 %v3040
    %v3432 = vunpack.c.l.b16 %v3041
    %v3433 = vunpack.c.l.b16 %v3042
    %v3434 = vunpack.c.l.b16 %v3043
    %v3435 = vunpack.c.l.b16 %v3044
    %v3436 = vunpack.c.l.b16 %v3045
    %v3437 = vunpack.c.l.b16 %v3046
    %v3438 = vunpack.c.l.b16 %v3047
    %v3439 = vunpack.c.l.b16 %v3048
    %v3440 = vunpack.c.l.b16 %v3049
    %v3441 = vunpack.c.l.b16 %v3050
    %v3442 = vunpack.c.l.b16 %v3051
    %v3443 = vunpack.c.l.b16 %v3052
    %v3444 = vunpack.c.l.b16 %v3053
    %v3445 = vunpack.c.l.b16 %v3054
    %v3446 = vunpack.c.l.b16 %v3055
    %v3447 = vunpack.c.l.b16 %v3056
    %v3448 = vunpack.c.l.b16 %v3057
    %v3449 = vunpack.c.l.b16 %v3058
    %v3450 = vunpack.c.l.b16 %v3059
    %v3451 = vunpack.c.l.b16 %v3060
    %v3452 = vunpack.c.l.b16 %v3061
    %v3453 = vunpack.c.l.b16 %v3062
    %v3454 = vunpack.c.l.b16 %v3063
    %v3455 = vunpack.c.l.b16 %v3064
    %v3456 = vunpack.c.l.b16 %v3065
    %v3457 = vunpack.c.l.b16 %v3066
    %v3458 = vunpack.c.l.b16 %v3067
    %v3459 = vunpack.c.l.b16 %v3068
    %v3460 = vunpack.c.l.b16 %v3069
    %v3461 = vunpack.c.l.b16 %v3070
    %v3462 = vunpack.c.l.b16 %v3071
    %v3463 = vunpack.c.l.b16 %v3072
    %v3464 = vunpack.c.l.b16 %v3073
    %v3465 = vunpack.c.l.b16 %v3074
    %v3466 = vunpack.c.l.b16 %v3075
    %v3467 = vunpack.c.l.b16 %v3076
    %v3468 = vunpack.c.l.b16 %v3077
    %v3469 = vunpack.c.l.b16 %v3078
    %v3470 = vunpack.c.l.b16 %v3079
    %v3471 = vunpack.c.l.b16 %v3080
    %v3472 = vunpack.c.l.b16 %v3081
    %v3473 = vunpack.c.l.b16 %v3082
    %v3474 = vunpack.c.l.b16 %v3083
    %v3475 = vunpack.c.l.b16 %v3084
    %v3476 = vunpack.c.l.b16 %v3085
    %v3477 = vunpack.c.l.b16 %v3086
    %v3478 = vunpack.c.l.b16 %v3087
    %v3479 = vunpack.c.l.b16 %v3088
    %v3480 = vunpack.c.l.b16 %v3089
    %v3481 = vunpack.c.l.b16 %v3090
    %v3482 = vunpack.c.l.b16 %v3091
    %v3483 = vunpack.c.l.b16 %v3092
    %v3484 = vunpack.c.l.b16 %v3093
    %v3485 = vunpack.c.l.b16 %v3094
    %v3486 = vunpack.c.l.b16 %v3095
    %v3487 = vunpack.c.l.b16 %v3096
    %v3488 = vunpack.c.l.b16 %v3097
    %v3489 = vunpack.c.l.b16 %v3098
    %v3490 = vunpack.c.l.b16 %v3099
    %v3491 = vunpack.c.l.b16 %v3100
    %v3492 = vunpack.c.l.b16 %v3101
    %v3493 = vunpack.c.l.b16 %v3102
    %v3494 = vunpack.c.l.b16 %v3103
    %v3495 = vunpack.c.l.b16 %v3104
    %v3496 = vunpack.c.l.b16 %v3105
    %v3497 = vunpack.c.l.b16 %v3106
    %v3498 = vunpack.c.l.b16 %v3107
    %v3499 = vunpack.c.l.b16 %v3108
    %v3500 = vunpack.c.l.b16 %v3109
    %v3501 = vunpack.c.l.b16 %v3110
    %v3502 = vunpack.c.l.b16 %v3111
    %v3503 = vunpack.c.l.b16 %v3112
    %v3504 = vunpack.c.l.b16 %v3113
    %v3505 = vunpack.c.l.b16 %v3114
    %v3506 = vunpack.c.l.b16 %v3115
    %v3507 = vunpack.c.l.b16 %v3116
    %v3508 = vunpack.c.l.b16 %v3117
    %v3509 = vunpack.c.l.b16 %v3118
    %v3510 = vunpack.c.l.b16 %v3119
    %v3511 = vunpack.c.l.b16 %v3120
    %v3512 = vunpack.c.l.b16 %v3121
    %v3513 = vunpack.c.l.b16 %v3122
    %v3514 = vunpack.c.l.b16 %v3123
    %v3515 = vunpack.c.l.b16 %v3124
    %v3516 = vunpack.c.l.b16 %v3125
    %v3517 = vunpack.c.l.b16 %v3126
    %v3518 = vunpack.c.l.b16 %v3127
    %v3519 = vunpack.c.l.b16 %v3128
    %v3520 = vunpack.c.l.b16 %v3129
    %v3521 = vunpack.c.l.b16 %v3130
    %v3522 = vunpack.c.l.b16 %v3131
    %v3523 = vunpack.c.l.b16 %v3132
    %v3524 = vunpack.c.l.b16 %v3133
    %v3525 = vunpack.c.l.b16 %v3134
    %v3526 = vunpack.c.l.b16 %v3135
    %v3527 = vunpack.c.l.b16 %v3136
    %v3528 = vunpack.c.l.b16 %v3137
    %v3529 = vunpack.c.l.b16 %v3138
    %v3530 = vunpack.c.l.b16 %v3139
    %v3531 = vunpack.c.l.b16 %v3140
    %v3532 = vunpack.c.l.b16 %v3141
    %v3533 = vunpack.c.l.b16 %v3142
    %v3534 = vunpack.c.l.b16 %v3143
    %v3535 = vunpack.c.l.b16 %v3144
    %v3536 = vunpack.c.l.b16 %v3145
    %v3537 = vunpack.c.l.b16 %v3146
    %v3538 = vunpack.c.l.b16 %v3147
    %v3539 = vunpack.c.l.b16 %v3148
    %v3540 = vunpack.c.l.b16 %v3149
    %v3541 = vunpack.c.l.b16 %v3150
    %v3542 = vunpack.c.l.b16 %v3151
    %v3543 = vunpack.c.l.b16 %v3152
    %v3544 = vunpack.c.l.b16 %v3153
    %v3545 = vunpack.c.l.b16 %v3154
    %v3546 = vunpack.c.l.b16 %v3155
    %v3547 = vunpack.c.l.b16 %v3156
    %v3548 = vunpack.c.l.b16 %v3157
    %v3549 = vunpack.c.l.b16 %v3158
    %v3550 = vunpack.c.l.b16 %v3159
    %v3551 = vunpack.c.l.b16 %v3160
    %v3552 = vunpack.c.l.b16 %v3161
    %v3553 = vunpack.c.l.b16 %v3162
    %v3554 = vunpack.c.l.b16 %v3163
    %v3555 = vunpack.c.l.b16 %v3164
    %v3556 = vunpack.c.l.b16 %v3165
    %v3557 = vunpack.c.l.b16 %v3166
    %v3558 = vunpack.c.l.b16 %v3167
    %v3559 = vunpack.c.l.b16 %v3168
    %v3560 = vunpack.c.l.b16 %v3169
    %v3561 = vunpack.c.l.b16 %v3170
    %v3562 = vunpack.c.l.b16 %v3171
    %v3563 = vunpack.c.l.b16 %v3172
    %v3564 = vunpack.c.l.b16 %v3173
    %v3565 = vunpack.c.l.b16 %v3174
    %v3566 = vunpack.c.l.b16 %v3175
    %v3567 = vunpack.c.l.b16 %v3176
    %v3568 = vunpack.c.l.b16 %v3177
    %v3569 = vunpack.c.l.b16 %v3178
    %v3570 = vpack.c.b16 %v3379, %v3378
    %v3571 = vpack.c.b16 %v3381, %v3380
    %v3572 = vpack.c.b16 %v3383, %v3382
    %v3573 = vpack.c.b16 %v3385, %v3384
    %v3574 = vpack.c.b16 %v3387, %v3386
    %v3575 = vpack.c.b16 %v3389, %v3388
    %v3576 = vpack.c.b16 %v3391, %v3390
    %v3577 = vpack.c.b16 %v3393, %v3392
    %v3578 = vpack.c.b16 %v3395, %v3394
    %v3579 = vpack.c.b16 %v3397, %v3396
    %v3580 = vpack.c.b16 %v3399, %v3398
    %v3581 = vpack.c.b16 %v3401, %v3400
    %v3582 = vpack.c.b16 %v3403, %v3402
    %v3583 = vpack.c.b16 %v3405, %v3404
    %v3584 = vpack.c.b16 %v3407, %v3406
    %v3585 = vpack.c.b16 %v3409, %v3408
    %v3586 = vpack.c.b16 %v3411, %v3410
    %v3587 = vpack.c.b16 %v3413, %v3412
    %v3588 = vpack.c.b16 %v3415, %v3414
    %v3589 = vpack.c.b16 %v3417, %v3416
    %v3590 = vpack.c.b16 %v3419, %v3418
    %v3591 = vpack.c.b16 %v3421, %v3420
    %v3592 = vpack.c.b16 %v3423, %v3422
    %v3593 = vpack.c.b16 %v3425, %v3424
    %v3594 = vpack.c.b16 %v3427, %v3426
    %v3595 = vpack.c.b16 %v3429, %v3428
    %v3596 = vpack.c.b16 %v3431, %v3430
    %v3597 = vpack.c.b16 %v3433, %v3432
    %v3598 = vpack.c.b16 %v3435, %v3434
    %v3599 = vpack.c.b16 %v3437, %v3436
    %v3600 = vpack.c.b16 %v3439, %v3438
    %v3601 = vpack.c.b16 %v3441, %v3440
    %v3602 = vpack.c.b16 %v3443, %v3442
    %v3603 = vpack.c.b16 %v3445, %v3444
    %v3604 = vpack.c.b16 %v3447, %v3446
    %v3605 = vpack.c.b16 %v3449, %v3448
    %v3606 = vpack.c.b16 %v3451, %v3450
    %v3607 = vpack.c.b16 %v3453, %v3452
    %v3608 = vpack.c.b16 %v3455, %v3454
    %v3609 = vpack.c.b16 %v3457, %v3456
    %v3610 = vpack.c.b16 %v3459, %v3458
    %v3611 = vpack.c.b16 %v3461, %v3460
    %v3612 = vpack.c.b16 %v3463, %v3462
    %v3613 = vpack.c.b16 %v3465, %v3464
    %v3614 = vpack.c.b16 %v3467, %v3466
    %v3615 = vpack.c.b16 %v3469, %v3468
    %v3616 = vpack.c.b16 %v3471, %v3470
    %v3617 = vpack.c.b16 %v3473, %v3472
    %v3618 = vpack.c.b16 %v3475, %v3474
    %v3619 = vpack.c.b16 %v3477, %v3476
    %v3620 = vpack.c.b16 %v3479, %v3478
    %v3621 = vpack.c.b16 %v3481, %v3480
    %v3622 = vpack.c.b16 %v3483, %v3482
    %v3623 = vpack.c.b16 %v3485, %v3484
    %v3624 = vpack.c.b16 %v3487, %v3486
    %v3625 = vpack.c.b16 %v3489, %v3488
    %v3626 = vpack.c.b16 %v3491, %v3490
    %v3627 = vpack.c.b16 %v3493, %v3492
    %v3628 = vpack.c.b16 %v3495, %v3494
    %v3629 = vpack.c.b16 %v3497, %v3496
    %v3630 = vpack.c.b16 %v3499, %v3498
    %v3631 = vpack.c.b16 %v3501, %v3500
    %v3632 = vpack.c.b16 %v3503, %v3502
    %v3633 = vpack.c.b16 %v3505, %v3504
    %v3634 = vpack.c.b16 %v3507, %v3506
    %v3635 = vpack.c.b16 %v3509, %v3508
    %v3636 = vpack.c.b16 %v3511, %v3510
    %v3637 = vpack.c.b16 %v3513, %v3512
    %v3638 = vpack.c.b16 %v3515, %v3514
    %v3639 = vpack.c.b16 %v3517, %v3516
    %v3640 = vpack.c.b16 %v3519, %v3518
    %v3641 = vpack.c.b16 %v3521, %v3520
    %v3642 = vpack.c.b16 %v3523, %v3522
    %v3643 = vpack.c.b16 %v3525, %v3524
    %v3644 = vpack.c.b16 %v3527, %v3526
    %v3645 = vpack.c.b16 %v3529, %v3528
    %v3646 = vpack.c.b16 %v3531, %v3530
    %v3647 = vpack.c.b16 %v3533, %v3532
    %v3648 = vpack.c.b16 %v3535, %v3534
    %v3649 = vpack.c.b16 %v3537, %v3536
    %v3650 = vpack.c.b16 %v3539, %v3538
    %v3651 = vpack.c.b16 %v3541, %v3540
    %v3652 = vpack.c.b16 %v3543, %v3542
    %v3653 = vpack.c.b16 %v3545, %v3544
    %v3654 = vpack.c.b16 %v3547, %v3546
    %v3655 = vpack.c.b16 %v3549, %v3548
    %v3656 = vpack.c.b16 %v3551, %v3550
    %v3657 = vpack.c.b16 %v3553, %v3552
    %v3658 = vpack.c.b16 %v3555, %v3554
    %v3659 = vpack.c.b16 %v3557, %v3556
    %v3660 = vpack.c.b16 %v3559, %v3558
    %v3661 = vpack.c.b16 %v3561, %v3560
    %v3662 = vpack.c.b16 %v3563, %v3562
    %v3663 = vpack.c.b16 %v3565, %v3564
    %v3664 = vpack.c.b16 %v3567, %v3566
    %v3665 = vpack.c.b16 %v3569, %v3568
    %3762 = vmatprep.subr.bf16.mxu0 0
    %3763 = vmatpush1.bf16.msra.mxu0 %v3570
    %3764 = vmatprep.subr.bf16.mxu0 0
    %3765 = vmatpush1.bf16.msra.mxu0 %v3571
    %3766 = vmatprep.subr.bf16.mxu0 0
    %3767 = vmatpush1.bf16.msra.mxu0 %v3572
    %3768 = vmatprep.subr.bf16.mxu0 0
    %3769 = vmatpush1.bf16.msra.mxu0 %v3573
    %3770 = vmatprep.subr.bf16.mxu0 0
    %3771 = vmatpush1.bf16.msra.mxu0 %v3574
    %3772 = vmatprep.subr.bf16.mxu0 0
    %3773 = vmatpush1.bf16.msra.mxu0 %v3575
    %3774 = vmatprep.subr.bf16.mxu0 0
    %3775 = vmatpush1.bf16.msra.mxu0 %v3576
    %3776 = vmatprep.subr.bf16.mxu0 0
    %3777 = vmatpush1.bf16.msra.mxu0 %v3577
    %3778 = vmatprep.subr.bf16.mxu0 0
    %3779 = vmatpush1.bf16.msra.mxu0 %v3578
    %3780 = vmatprep.subr.bf16.mxu0 0
    %3781 = vmatpush1.bf16.msra.mxu0 %v3579
    %3782 = vmatprep.subr.bf16.mxu0 0
    %3783 = vmatpush1.bf16.msra.mxu0 %v3580
    %3784 = vmatprep.subr.bf16.mxu0 0
    %3785 = vmatpush1.bf16.msra.mxu0 %v3581
    %3786 = vmatprep.subr.bf16.mxu0 0
    %3787 = vmatpush1.bf16.msra.mxu0 %v3582
    %3788 = vmatprep.subr.bf16.mxu0 0
    %3789 = vmatpush1.bf16.msra.mxu0 %v3583
    %3790 = vmatprep.subr.bf16.mxu0 0
    %3791 = vmatpush1.bf16.msra.mxu0 %v3584
    %3792 = vmatprep.subr.bf16.mxu0 0
    %3793 = vmatpush1.bf16.msra.mxu0 %v3585
    %3794 = vmatprep.mubr.bf16.mxu0 %v2976
    %3795 = vmatmul.mubr.bf16.gmra.mrb[0].mxu0 %v2975
    %v3796 = vpop.f32.mrb[0].mxu0
    %v3797 = vadd.f32 %v3184, %v3796
    %v3798 = vpop.f32.mrb[0].mxu0
    %v3799 = vpop.f32.mrb[0].mxu0
    %v3800 = vpop.f32.mrb[0].mxu0
    %3801 = vdwg.mxu0
    %3802 = vmatprep.subr.bf16.mxu0 0
    %3803 = vmatpush1.bf16.msra.mxu0 %v3586
    %3804 = vmatprep.subr.bf16.mxu0 0
    %3805 = vmatpush1.bf16.msra.mxu0 %v3587
    %3806 = vmatprep.subr.bf16.mxu0 0
    %3807 = vmatpush1.bf16.msra.mxu0 %v3588
    %3808 = vmatprep.subr.bf16.mxu0 0
    %3809 = vmatpush1.bf16.msra.mxu0 %v3589
    %3810 = vmatprep.subr.bf16.mxu0 0
    %3811 = vmatpush1.bf16.msra.mxu0 %v3590
    %3812 = vmatprep.subr.bf16.mxu0 0
    %3813 = vmatpush1.bf16.msra.mxu0 %v3591
    %3814 = vmatprep.subr.bf16.mxu0 0
    %3815 = vmatpush1.bf16.msra.mxu0 %v3592
    %3816 = vmatprep.subr.bf16.mxu0 0
    %3817 = vmatpush1.bf16.msra.mxu0 %v3593
    %3818 = vmatprep.subr.bf16.mxu0 0
    %3819 = vmatpush1.bf16.msra.mxu0 %v3594
    %3820 = vmatprep.subr.bf16.mxu0 0
    %3821 = vmatpush1.bf16.msra.mxu0 %v3595
    %3822 = vmatprep.subr.bf16.mxu0 0
    %3823 = vmatpush1.bf16.msra.mxu0 %v3596
    %3824 = vmatprep.subr.bf16.mxu0 0
    %3825 = vmatpush1.bf16.msra.mxu0 %v3597
    %3826 = vmatprep.subr.bf16.mxu0 0
    %3827 = vmatpush1.bf16.msra.mxu0 %v3598
    %3828 = vmatprep.subr.bf16.mxu0 0
    %3829 = vmatpush1.bf16.msra.mxu0 %v3599
    %3830 = vmatprep.subr.bf16.mxu0 0
    %3831 = vmatpush1.bf16.msra.mxu0 %v3600
    %3832 = vmatprep.subr.bf16.mxu0 0
    %3833 = vmatpush1.bf16.msra.mxu0 %v3601
    %3834 = vmatprep.mubr.bf16.mxu0 %v2978
    %3835 = vmatmul.mubr.bf16.gmra.mrb[0].mxu0 %v2977
    %v3836 = vpop.f32.mrb[0].mxu0
    %v3837 = vadd.f32 %v3797, %v3836
    %v3838 = vpop.f32.mrb[0].mxu0
    %v3839 = vpop.f32.mrb[0].mxu0
    %v3840 = vpop.f32.mrb[0].mxu0
    %3841 = vdwg.mxu0
    %3842 = vmatprep.subr.bf16.mxu0 0
    %3843 = vmatpush1.bf16.msra.mxu0 %v3602
    %3844 = vmatprep.subr.bf16.mxu0 0
    %3845 = vmatpush1.bf16.msra.mxu0 %v3603
    %3846 = vmatprep.subr.bf16.mxu0 0
    %3847 = vmatpush1.bf16.msra.mxu0 %v3604
    %3848 = vmatprep.subr.bf16.mxu0 0
    %3849 = vmatpush1.bf16.msra.mxu0 %v3605
    %3850 = vmatprep.subr.bf16.mxu0 0
    %3851 = vmatpush1.bf16.msra.mxu0 %v3606
    %3852 = vmatprep.subr.bf16.mxu0 0
    %3853 = vmatpush1.bf16.msra.mxu0 %v3607
    %3854 = vmatprep.subr.bf16.mxu0 0
    %3855 = vmatpush1.bf16.msra.mxu0 %v3608
    %3856 = vmatprep.subr.bf16.mxu0 0
    %3857 = vmatpush1.bf16.msra.mxu0 %v3609
    %3858 = vmatprep.subr.bf16.mxu0 0
    %3859 = vmatpush1.bf16.msra.mxu0 %v3610
    %3860 = vmatprep.subr.bf16.mxu0 0
    %3861 = vmatpush1.bf16.msra.mxu0 %v3611
    %3862 = vmatprep.subr.bf16.mxu0 0
    %3863 = vmatpush1.bf16.msra.mxu0 %v3612
    %3864 = vmatprep.subr.bf16.mxu0 0
    %3865 = vmatpush1.bf16.msra.mxu0 %v3613
    %3866 = vmatprep.subr.bf16.mxu0 0
    %3867 = vmatpush1.bf16.msra.mxu0 %v3614
    %3868 = vmatprep.subr.bf16.mxu0 0
    %3869 = vmatpush1.bf16.msra.mxu0 %v3615
    %3870 = vmatprep.subr.bf16.mxu0 0
    %3871 = vmatpush1.bf16.msra.mxu0 %v3616
    %3872 = vmatprep.subr.bf16.mxu0 0
    %3873 = vmatpush1.bf16.msra.mxu0 %v3617
    %3874 = vmatprep.mubr.bf16.mxu0 %v2980
    %3875 = vmatmul.mubr.bf16.gmra.mrb[0].mxu0 %v2979
    %v3876 = vpop.f32.mrb[0].mxu0
    %v3877 = vadd.f32 %v3837, %v3876
    %v3878 = vpop.f32.mrb[0].mxu0
    %v3879 = vpop.f32.mrb[0].mxu0
    %v3880 = vpop.f32.mrb[0].mxu0
    %3881 = vdwg.mxu0
    %3882 = vmatprep.subr.bf16.mxu0 0
    %3883 = vmatpush1.bf16.msra.mxu0 %v3618
    %3884 = vmatprep.subr.bf16.mxu0 0
    %3885 = vmatpush1.bf16.msra.mxu0 %v3619
    %3886 = vmatprep.subr.bf16.mxu0 0
    %3887 = vmatpush1.bf16.msra.mxu0 %v3620
    %3888 = vmatprep.subr.bf16.mxu0 0
    %3889 = vmatpush1.bf16.msra.mxu0 %v3621
    %3890 = vmatprep.subr.bf16.mxu0 0
    %3891 = vmatpush1.bf16.msra.mxu0 %v3622
    %3892 = vmatprep.subr.bf16.mxu0 0
    %3893 = vmatpush1.bf16.msra.mxu0 %v3623
    %3894 = vmatprep.subr.bf16.mxu0 0
    %3895 = vmatpush1.bf16.msra.mxu0 %v3624
    %3896 = vmatprep.subr.bf16.mxu0 0
    %3897 = vmatpush1.bf16.msra.mxu0 %v3625
    %3898 = vmatprep.subr.bf16.mxu0 0
    %3899 = vmatpush1.bf16.msra.mxu0 %v3626
    %3900 = vmatprep.subr.bf16.mxu0 0
    %3901 = vmatpush1.bf16.msra.mxu0 %v3627
    %3902 = vmatprep.subr.bf16.mxu0 0
    %3903 = vmatpush1.bf16.msra.mxu0 %v3628
    %3904 = vmatprep.subr.bf16.mxu0 0
    %3905 = vmatpush1.bf16.msra.mxu0 %v3629
    %3906 = vmatprep.subr.bf16.mxu0 0
    %3907 = vmatpush1.bf16.msra.mxu0 %v3630
    %3908 = vmatprep.subr.bf16.mxu0 0
    %3909 = vmatpush1.bf16.msra.mxu0 %v3631
    %3910 = vmatprep.subr.bf16.mxu0 0
    %3911 = vmatpush1.bf16.msra.mxu0 %v3632
    %3912 = vmatprep.subr.bf16.mxu0 0
    %3913 = vmatpush1.bf16.msra.mxu0 %v3633
    %3914 = vmatprep.mubr.bf16.mxu0 %v2982
    %3915 = vmatmul.mubr.bf16.gmra.mrb[0].mxu0 %v2981
    %v3916 = vpop.f32.mrb[0].mxu0
    %v3917 = vadd.f32 %v3877, %v3916
    %v3918 = vpop.f32.mrb[0].mxu0
    %v3919 = vpop.f32.mrb[0].mxu0
    %v3920 = vpop.f32.mrb[0].mxu0
    %3921 = vdwg.mxu0
    %3922 = vmatprep.subr.bf16.mxu0 0
    %3923 = vmatpush1.bf16.msra.mxu0 %v3634
    %3924 = vmatprep.subr.bf16.mxu0 0
    %3925 = vmatpush1.bf16.msra.mxu0 %v3635
    %3926 = vmatprep.subr.bf16.mxu0 0
    %3927 = vmatpush1.bf16.msra.mxu0 %v3636
    %3928 = vmatprep.subr.bf16.mxu0 0
    %3929 = vmatpush1.bf16.msra.mxu0 %v3637
    %3930 = vmatprep.subr.bf16.mxu0 0
    %3931 = vmatpush1.bf16.msra.mxu0 %v3638
    %3932 = vmatprep.subr.bf16.mxu0 0
    %3933 = vmatpush1.bf16.msra.mxu0 %v3639
    %3934 = vmatprep.subr.bf16.mxu0 0
    %3935 = vmatpush1.bf16.msra.mxu0 %v3640
    %3936 = vmatprep.subr.bf16.mxu0 0
    %3937 = vmatpush1.bf16.msra.mxu0 %v3641
    %3938 = vmatprep.subr.bf16.mxu0 0
    %3939 = vmatpush1.bf16.msra.mxu0 %v3642
    %3940 = vmatprep.subr.bf16.mxu0 0
    %3941 = vmatpush1.bf16.msra.mxu0 %v3643
    %3942 = vmatprep.subr.bf16.mxu0 0
    %3943 = vmatpush1.bf16.msra.mxu0 %v3644
    %3944 = vmatprep.subr.bf16.mxu0 0
    %3945 = vmatpush1.bf16.msra.mxu0 %v3645
    %3946 = vmatprep.subr.bf16.mxu0 0
    %3947 = vmatpush1.bf16.msra.mxu0 %v3646
    %3948 = vmatprep.subr.bf16.mxu0 0
    %3949 = vmatpush1.bf16.msra.mxu0 %v3647
    %3950 = vmatprep.subr.bf16.mxu0 0
    %3951 = vmatpush1.bf16.msra.mxu0 %v3648
    %3952 = vmatprep.subr.bf16.mxu0 0
    %3953 = vmatpush1.bf16.msra.mxu0 %v3649
    %3954 = vmatprep.mubr.bf16.mxu0 %v2984
    %3955 = vmatmul.mubr.bf16.gmra.mrb[0].mxu0 %v2983
    %v3956 = vpop.f32.mrb[0].mxu0
    %v3957 = vadd.f32 %v3917, %v3956
    %v3958 = vpop.f32.mrb[0].mxu0
    %v3959 = vpop.f32.mrb[0].mxu0
    %v3960 = vpop.f32.mrb[0].mxu0
    %3961 = vdwg.mxu0
    %3962 = vmatprep.subr.bf16.mxu0 0
    %3963 = vmatpush1.bf16.msra.mxu0 %v3650
    %3964 = vmatprep.subr.bf16.mxu0 0
    %3965 = vmatpush1.bf16.msra.mxu0 %v3651
    %3966 = vmatprep.subr.bf16.mxu0 0
    %3967 = vmatpush1.bf16.msra.mxu0 %v3652
    %3968 = vmatprep.subr.bf16.mxu0 0
    %3969 = vmatpush1.bf16.msra.mxu0 %v3653
    %3970 = vmatprep.subr.bf16.mxu0 0
    %3971 = vmatpush1.bf16.msra.mxu0 %v3654
    %3972 = vmatprep.subr.bf16.mxu0 0
    %3973 = vmatpush1.bf16.msra.mxu0 %v3655
    %3974 = vmatprep.subr.bf16.mxu0 0
    %3975 = vmatpush1.bf16.msra.mxu0 %v3656
    %3976 = vmatprep.subr.bf16.mxu0 0
    %3977 = vmatpush1.bf16.msra.mxu0 %v3657
    %3978 = vmatprep.subr.bf16.mxu0 0
    %3979 = vmatpush1.bf16.msra.mxu0 %v3658
    %3980 = vmatprep.subr.bf16.mxu0 0
    %3981 = vmatpush1.bf16.msra.mxu0 %v3659
    %3982 = vmatprep.subr.bf16.mxu0 0
    %3983 = vmatpush1.bf16.msra.mxu0 %v3660
    %3984 = vmatprep.subr.bf16.mxu0 0
    %3985 = vmatpush1.bf16.msra.mxu0 %v3661
    %3986 = vmatprep.subr.bf16.mxu0 0
    %3987 = vmatpush1.bf16.msra.mxu0 %v3662
    %3988 = vmatprep.subr.bf16.mxu0 0
    %3989 = vmatpush1.bf16.msra.mxu0 %v3663
    %3990 = vmatprep.subr.bf16.mxu0 0
    %3991 = vmatpush1.bf16.msra.mxu0 %v3664
    %3992 = vmatprep.subr.bf16.mxu0 0
    %3993 = vmatpush1.bf16.msra.mxu0 %v3665
    %3994 = vmatprep.mubr.bf16.mxu0 %v2986
    %3995 = vmatmul.mubr.bf16.gmra.mrb[0].mxu0 %v2985
    %v3996 = vpop.f32.mrb[0].mxu0
    %v3997 = vadd.f32 %v3957, %v3996
    %v3998 = vpop.f32.mrb[0].mxu0
    %v3999 = vpop.f32.mrb[0].mxu0
    %v4000 = vpop.f32.mrb[0].mxu0
    %4001 = vdwg.mxu0
    %4002 = vst [vmem:[#allocation10] sm:$0x3] %v3997
    // Predicated region
    $region38: #{ensemble_classifier_forward.1} parent=1 // pred_check
      _
    $region39: #{ensemble_classifier_forward.1} parent=1 // pred_check_branch
      %4004 = sbr.rel (0) target = $region41
    $region40: #{ensemble_classifier_forward.1} parent=1 // pred_region
      %s4006 = ssub.s32 32, 32
      %4007 = vsyncadd [#allocation4], %s4006
      %s4009 = sshll.u32 [#allocation10], 4
      %s4010 = int_to_ptr.vmem [resolvable:$true] %s4009
      %4012 = dma.vmem_to_hbm [thread:$0]  %s4010, 32, %s5, [#allocation4]
    $region41: #{ensemble_classifier_forward.1} parent=1 // pred_fallthru
      _
    // Predicated region
    $region42: #{ensemble_classifier_forward.1} parent=1 // pred_check
      _
    $region43: #{ensemble_classifier_forward.1} parent=1 // pred_check_branch
      %4014 = sbr.rel (0) target = $region45
    $region44: #{ensemble_classifier_forward.1} parent=1 // pred_region
      %4015 = dma.done [#allocation4], 32
    $region45: #{ensemble_classifier_forward.1} parent=1 // pred_fallthru
      _
    %4016 = vsyncpa [#allocation3], 1
    %4017 = vsyncpa [#allocation6], 1
    %4018 = vsyncpa [#allocation9], 1
    %4019 = vsyncpa [#allocation4], 1

</llo_original>
